<compile_context>
chip_gen: v5e
topology: v5e:2x2
jax: 0.10.0
libtpu: 0.0.40
codegen_flags: <defaults>
</compile_context>

<pallas_src>
import functools

import numpy as np
import jax
import jax.numpy as jnp
from jax import lax
from jax.experimental import pallas as pl
from jax.experimental.pallas import tpu as pltpu


def _round_up(x, m):
    return ((x + m - 1) // m) * m


def _rnn_kernel(num_layers, x_ref, *refs):
    """refs = [w_ih_t, w_hh_t, bias] * num_layers      (pre-transposed, gate-padded),
              fc1_w, fc1_b, fc2_w, fc2_b, fc3_w, fc3_b (pre-transposed, lane-padded),
              out_ref (T, Bt, Cp) f32,
              hbuf (T, Bt, Hp)  bf16 scratch  -- current layer's hidden states,
              gbuf (T, Bt, 4Hp) f32  scratch  -- hoisted input-projection gates.
    """
    n_lstm = 3 * num_layers
    lstm_refs = refs[:n_lstm]
    fc1_w, fc1_b, fc2_w, fc2_b, fc3_w, fc3_b = refs[n_lstm:n_lstm + 6]
    out_ref = refs[n_lstm + 6]
    hbuf = refs[n_lstm + 7]
    gbuf = refs[n_lstm + 8]

    T, Bt, _ = x_ref.shape
    Hp = hbuf.shape[-1]
    unroll = True if T <= 8 else 8

    # ---- stacked LSTM (PyTorch gate order: i, f, g, o) --------------------
    for layer in range(num_layers):
        w_ih_t = lstm_refs[3 * layer][...]      # (D_in, 4Hp) bf16
        w_hh_t = lstm_refs[3 * layer + 1][...]  # (Hp,   4Hp) bf16
        bias = lstm_refs[3 * layer + 2][...]    # (1,    4Hp) f32  (b_ih + b_hh)

        # Hoisted input projection for all timesteps at once (large-M MXU matmul).
        if layer == 0:
            x_all = x_ref[...].reshape(T * Bt, x_ref.shape[-1])
        else:
            x_all = hbuf[...].reshape(T * Bt, Hp)
        gbuf[...] = (jnp.dot(x_all, w_ih_t, preferred_element_type=jnp.float32)
                     + bias).reshape(T, Bt, 4 * Hp)

        def step(t, carry, w_hh_t=w_hh_t):
            h, c = carry                        # h: bf16 (Bt, Hp), c: f32 (Bt, Hp)
            gates = gbuf[t] + jnp.dot(h, w_hh_t,
                                      preferred_element_type=jnp.float32)
            i_g = jax.nn.sigmoid(gates[:, 0:Hp])
            f_g = jax.nn.sigmoid(gates[:, Hp:2 * Hp])
            g_g = jnp.tanh(gates[:, 2 * Hp:3 * Hp])
            o_g = jax.nn.sigmoid(gates[:, 3 * Hp:4 * Hp])
            c_new = f_g * c + i_g * g_g
            h_new = o_g * jnp.tanh(c_new)
            h_lo = h_new.astype(hbuf.dtype)
            hbuf[t] = h_lo                      # read by the next layer / fc head
            return h_lo, c_new

        h0 = jnp.zeros((Bt, Hp), hbuf.dtype)
        c0 = jnp.zeros((Bt, Hp), jnp.float32)
        lax.fori_loop(0, T, step, (h0, c0), unroll=unroll)

    # ---- MLP head (dropout == identity in eval mode) ----------------------
    # TODO(synk): training-mode dropout (stochastic masks via pltpu.prng_*) not implemented.
    feats = hbuf[...].reshape(T * Bt, Hp)                        # bf16
    y = jnp.maximum(
        jnp.dot(feats, fc1_w[...], preferred_element_type=jnp.float32)
        + fc1_b[...], 0.0)
    y = jnp.maximum(
        jnp.dot(y.astype(fc2_w.dtype), fc2_w[...],
                preferred_element_type=jnp.float32) + fc2_b[...], 0.0)
    y = jnp.maximum(
        jnp.dot(y.astype(fc3_w.dtype), fc3_w[...],
                preferred_element_type=jnp.float32) + fc3_b[...], 0.0)
    out_ref[...] = y.reshape(T, Bt, out_ref.shape[-1])           # lane-dense store


def init_params(key, input_size, hidden_size, num_layers, num_classes):
    """Deterministic parameter init matching the PyTorch module's shapes."""
    params = {"lstm": [], "fc": {}}
    bound = 1.0 / (hidden_size ** 0.5)
    keys = jax.random.split(key, 4 * num_layers + 6)
    ki = 0
    for layer in range(num_layers):
        d_in = input_size if layer == 0 else hidden_size
        w_ih = jax.random.uniform(keys[ki], (4 * hidden_size, d_in), jnp.float32, -bound, bound); ki += 1
        w_hh = jax.random.uniform(keys[ki], (4 * hidden_size, hidden_size), jnp.float32, -bound, bound); ki += 1
        b_ih = jax.random.uniform(keys[ki], (4 * hidden_size,), jnp.float32, -bound, bound); ki += 1
        b_hh = jax.random.uniform(keys[ki], (4 * hidden_size,), jnp.float32, -bound, bound); ki += 1
        params["lstm"].append((w_ih, w_hh, b_ih, b_hh))

    def linear(kw, kb, fan_in, fan_out):
        b = 1.0 / (fan_in ** 0.5)
        w = jax.random.uniform(kw, (fan_out, fan_in), jnp.float32, -b, b)
        bb = jax.random.uniform(kb, (fan_out,), jnp.float32, -b, b)
        return w, bb

    params["fc"]["fc1"] = linear(keys[ki], keys[ki + 1], hidden_size, 8); ki += 2
    params["fc"]["fc2"] = linear(keys[ki], keys[ki + 1], 8, 5); ki += 2
    params["fc"]["fc3"] = linear(keys[ki], keys[ki + 1], 5, num_classes); ki += 2
    return params


def _pad_gate_axis(a, h, hp, axis):
    """Pad each of the 4 PyTorch gate blocks (i,f,g,o) along `axis` from h to hp."""
    if hp == h:
        return a
    blocks = jnp.split(a, 4, axis=axis)
    pads = [(0, 0)] * a.ndim
    pads[axis] = (0, hp - h)
    return jnp.concatenate([jnp.pad(b, pads) for b in blocks], axis=axis)


def rnn_forward(x, params, hidden_size, num_layers, num_classes,
                *, compute_dtype=jnp.bfloat16):
    """x: (B, T, input_size) float32  ->  (B, T, num_classes) float32."""
    B, T, D = x.shape
    H = hidden_size
    Hp = _round_up(H, 128)
    F1, F2 = 8, 5
    F1p, F2p = _round_up(F1, 128), _round_up(F2, 128)
    Cp = _round_up(num_classes, 128)

    # Batch padding / tiling: batch is the only independent axis of the recurrence.
    Bp = _round_up(B, 8)
    Bt = Bp if Bp <= 128 else 128
    Bp = _round_up(Bp, Bt)
    grid = (Bp // Bt,)

    # time-major, batch-padded, bf16 input
    x_tm = jnp.transpose(x, (1, 0, 2)).astype(jnp.float32)       # (T, B, D)
    x_tm = jnp.pad(x_tm, ((0, 0), (0, Bp - B), (0, 0))).astype(compute_dtype)

    args = [x_tm]
    in_specs = [pl.BlockSpec((T, Bt, D), lambda b: (0, b, 0))]

    def full_spec(a):
        nd = a.ndim
        return pl.BlockSpec(a.shape, lambda b, nd=nd: (0,) * nd)

    # LSTM weights: pre-transposed, per-gate lane-padded, bf16; bias pre-fused f32.
    for layer, (w_ih, w_hh, b_ih, b_hh) in enumerate(params["lstm"]):
        d_in = w_ih.shape[1]
        w_ih_t = _pad_gate_axis(w_ih.T.astype(jnp.float32), H, Hp, axis=1)   # (d_in, 4Hp)
        if layer > 0:
            w_ih_t = jnp.pad(w_ih_t, ((0, Hp - d_in), (0, 0)))               # (Hp, 4Hp)
        w_hh_t = _pad_gate_axis(w_hh.T.astype(jnp.float32), H, Hp, axis=1)
        w_hh_t = jnp.pad(w_hh_t, ((0, Hp - H), (0, 0)))                      # (Hp, 4Hp)
        bias = _pad_gate_axis((b_ih + b_hh).astype(jnp.float32), H, Hp,
                              axis=0).reshape(1, 4 * Hp)
        args += [w_ih_t.astype(compute_dtype), w_hh_t.astype(compute_dtype), bias]

    # FC head: transposed to (in, out), zero-padded to lane-friendly widths.
    fc1_w, fc1_b = params["fc"]["fc1"]
    fc2_w, fc2_b = params["fc"]["fc2"]
    fc3_w, fc3_b = params["fc"]["fc3"]
    w1 = jnp.pad(fc1_w.T, ((0, Hp - H), (0, F1p - F1))).astype(compute_dtype)
    b1 = jnp.pad(fc1_b, (0, F1p - F1)).reshape(1, F1p).astype(jnp.float32)
    w2 = jnp.pad(fc2_w.T, ((0, F1p - F1), (0, F2p - F2))).astype(compute_dtype)
    b2 = jnp.pad(fc2_b, (0, F2p - F2)).reshape(1, F2p).astype(jnp.float32)
    w3 = jnp.pad(fc3_w.T, ((0, F2p - F2), (0, Cp - num_classes))).astype(compute_dtype)
    b3 = jnp.pad(fc3_b, (0, Cp - num_classes)).reshape(1, Cp).astype(jnp.float32)
    args += [w1, b1, w2, b2, w3, b3]

    in_specs += [full_spec(a) for a in args[1:]]
    out_spec = pl.BlockSpec((T, Bt, Cp), lambda b: (0, b, 0))

    # Explicit VMEM budget (double-buffered I/O blocks + resident weights + scratch).
    isz = np.dtype(compute_dtype).itemsize
    est = 2 * T * Bt * D * isz                                   # x block
    est += 2 * T * Bt * Cp * 4                                   # out block
    est += 2 * sum(int(a.size) * a.dtype.itemsize for a in args[1:])  # weights
    est += T * Bt * Hp * isz + T * Bt * 4 * Hp * 4               # hbuf + gbuf scratch
    vmem_limit = int(min(max(2 * est, 32 * 1024 * 1024), 64 * 1024 * 1024))

    kernel = functools.partial(_rnn_kernel, num_layers)
    out_tm = pl.pallas_call(
        kernel,
        out_shape=jax.ShapeDtypeStruct((T, Bp, Cp), jnp.float32),
        grid=grid,
        in_specs=in_specs,
        out_specs=out_spec,
        scratch_shapes=[pltpu.VMEM((T, Bt, Hp), compute_dtype),
                        pltpu.VMEM((T, Bt, 4 * Hp), jnp.float32)],
        compiler_params=pltpu.CompilerParams(
            dimension_semantics=("parallel",),
            vmem_limit_bytes=vmem_limit),
    )(*args)

    # back to (B, T, C), dropping batch / class padding
    return jnp.transpose(out_tm, (1, 0, 2))[:B, :, :num_classes]


if __name__ == "__main__":
    # Small deterministic example consistent with the module's forward.
    batch, seq_len = 2, 8
    input_size, hidden_size, num_layers, num_classes = 16, 32, 2, 3
    dropout_ratio = 0.5  # identity in eval mode

    key = jax.random.PRNGKey(0)
    k_param, k_x = jax.random.split(key)
    params = init_params(k_param, input_size, hidden_size, num_layers, num_classes)
    x = jax.random.normal(k_x, (batch, seq_len, input_size), jnp.float32)

    out = rnn_forward(x, params, hidden_size, num_layers, num_classes)
    jax.block_until_ready(out)
    assert out.shape == (batch, seq_len, num_classes)
    print("KERNEL_OK")
</pallas_src>

<mosaic_0001>
module attributes {stable_mosaic.version = 11 : i64} {
  func.func @_rnn_kernel(%arg0: i32, %arg1: memref<8x8x16xbf16, #tpu.memory_space<vmem>>, %arg2: memref<16x512xbf16, #tpu.memory_space<vmem>>, %arg3: memref<128x512xbf16, #tpu.memory_space<vmem>>, %arg4: memref<1x512xf32, #tpu.memory_space<vmem>>, %arg5: memref<128x512xbf16, #tpu.memory_space<vmem>>, %arg6: memref<128x512xbf16, #tpu.memory_space<vmem>>, %arg7: memref<1x512xf32, #tpu.memory_space<vmem>>, %arg8: memref<128x128xbf16, #tpu.memory_space<vmem>>, %arg9: memref<1x128xf32, #tpu.memory_space<vmem>>, %arg10: memref<128x128xbf16, #tpu.memory_space<vmem>>, %arg11: memref<1x128xf32, #tpu.memory_space<vmem>>, %arg12: memref<128x128xbf16, #tpu.memory_space<vmem>>, %arg13: memref<1x128xf32, #tpu.memory_space<vmem>>, %arg14: memref<8x8x128xf32, #tpu.memory_space<vmem>>, %arg15: memref<8x8x128xbf16, #tpu.memory_space<vmem>>, %arg16: memref<8x8x512xf32, #tpu.memory_space<vmem>>) attributes {dimension_semantics = [#tpu.dimension_semantics<parallel>], iteration_bounds = array<i64: 1>, scalar_prefetch = 0 : i64, scratch_operands = 2 : i64, tpu.core_type = #tpu.core_type<tc>, window_params = [{transform_indices = @transform_0, window_bounds = array<i64: 8, 8, 16>}, {pipeline_mode = #tpu.pipeline_mode<synchronous>, transform_indices = @transform_1, window_bounds = array<i64: 16, 512>}, {pipeline_mode = #tpu.pipeline_mode<synchronous>, transform_indices = @transform_2, window_bounds = array<i64: 128, 512>}, {pipeline_mode = #tpu.pipeline_mode<synchronous>, transform_indices = @transform_3, window_bounds = array<i64: 1, 512>}, {pipeline_mode = #tpu.pipeline_mode<synchronous>, transform_indices = @transform_4, window_bounds = array<i64: 128, 512>}, {pipeline_mode = #tpu.pipeline_mode<synchronous>, transform_indices = @transform_5, window_bounds = array<i64: 128, 512>}, {pipeline_mode = #tpu.pipeline_mode<synchronous>, transform_indices = @transform_6, window_bounds = array<i64: 1, 512>}, {pipeline_mode = #tpu.pipeline_mode<synchronous>, transform_indices = @transform_7, window_bounds = array<i64: 128, 128>}, {pipeline_mode = #tpu.pipeline_mode<synchronous>, transform_indices = @transform_8, window_bounds = array<i64: 1, 128>}, {pipeline_mode = #tpu.pipeline_mode<synchronous>, transform_indices = @transform_9, window_bounds = array<i64: 128, 128>}, {pipeline_mode = #tpu.pipeline_mode<synchronous>, transform_indices = @transform_10, window_bounds = array<i64: 1, 128>}, {pipeline_mode = #tpu.pipeline_mode<synchronous>, transform_indices = @transform_11, window_bounds = array<i64: 128, 128>}, {pipeline_mode = #tpu.pipeline_mode<synchronous>, transform_indices = @transform_12, window_bounds = array<i64: 1, 128>}, {transform_indices = @transform_13, window_bounds = array<i64: 8, 8, 128>}]} {
    %c0 = arith.constant 0 : index
    %c0_0 = arith.constant 0 : index
    %0 = vector.load %arg2[%c0, %c0_0] : memref<16x512xbf16, #tpu.memory_space<vmem>>, vector<16x512xbf16>
    %c0_1 = arith.constant 0 : index
    %c0_2 = arith.constant 0 : index
    %1 = vector.load %arg3[%c0_1, %c0_2] : memref<128x512xbf16, #tpu.memory_space<vmem>>, vector<128x512xbf16>
    %c0_3 = arith.constant 0 : index
    %c0_4 = arith.constant 0 : index
    %2 = vector.load %arg4[%c0_3, %c0_4] : memref<1x512xf32, #tpu.memory_space<vmem>>, vector<1x512xf32>
    %c0_5 = arith.constant 0 : index
    %c0_6 = arith.constant 0 : index
    %c0_7 = arith.constant 0 : index
    %3 = vector.load %arg1[%c0_5, %c0_6, %c0_7] : memref<8x8x16xbf16, #tpu.memory_space<vmem>>, vector<8x8x16xbf16>
    %4 = vector.shape_cast %3 : vector<8x8x16xbf16> to vector<64x16xbf16>
    %cst = arith.constant dense<0.000000e+00> : vector<64x512xf32>
    %5 = tpu.matmul %4, %0, %cst {dimension_numbers = #tpu.dot_dimension_numbers<[1], [0], [0], [1], [0, 0, 1, 1], [], []>} : vector<64x16xbf16>, vector<16x512xbf16>, vector<64x512xf32> -> vector<64x512xf32>
    %6 = vector.broadcast %2 : vector<1x512xf32> to vector<64x512xf32>
    %7 = arith.addf %5, %6 : vector<64x512xf32>
    %8 = vector.shape_cast %7 : vector<64x512xf32> to vector<8x8x512xf32>
    %c0_8 = arith.constant 0 : index
    %c0_9 = arith.constant 0 : index
    %c0_10 = arith.constant 0 : index
    %9 = vector.load %arg16[%c0_8, %c0_9, %c0_10] : memref<8x8x512xf32, #tpu.memory_space<vmem>>, vector<8x8x512xf32>
    tpu.vector_store %arg16[%c0_8, %c0_9, %c0_10], %8 {strides = array<i32>} : memref<8x8x512xf32, #tpu.memory_space<vmem>>, vector<8x8x512xf32>,
    %cst_11 = arith.constant 0.000000e+00 : bf16
    %10 = vector.broadcast %cst_11 : bf16 to vector<8x128xbf16>
    %cst_12 = arith.constant 0.000000e+00 : f32
    %11 = vector.broadcast %cst_12 : f32 to vector<8x128xf32>
    %c0_i32 = arith.constant 0 : i32
    %12 = arith.index_cast %c0_i32 : i32 to index
    %c0_13 = arith.constant 0 : index
    %c0_14 = arith.constant 0 : index
    %13 = vector.load %arg16[%12, %c0_13, %c0_14] : memref<8x8x512xf32, #tpu.memory_space<vmem>>, vector<1x8x512xf32>
    %14 = vector.shape_cast %13 : vector<1x8x512xf32> to vector<8x512xf32>
    %cst_15 = arith.constant dense<0.000000e+00> : vector<8x512xf32>
    %15 = tpu.matmul %10, %1, %cst_15 {dimension_numbers = #tpu.dot_dimension_numbers<[1], [0], [0], [1], [0, 0, 1, 1], [], []>} : vector<8x128xbf16>, vector<128x512xbf16>, vector<8x512xf32> -> vector<8x512xf32>
    %16 = arith.addf %14, %15 : vector<8x512xf32>
    %17 = vector.extract_strided_slice %16 {offsets = [0, 0], sizes = [8, 128], strides = [1, 1]} : vector<8x512xf32> to vector<8x128xf32>
    %18 = arith.negf %17 : vector<8x128xf32>
    %19 = math.exp %18 : vector<8x128xf32>
    %cst_16 = arith.constant 1.000000e+00 : f32
    %20 = vector.broadcast %cst_16 : f32 to vector<8x128xf32>
    %21 = arith.addf %20, %19 : vector<8x128xf32>
    %22 = arith.divf %20, %21 : vector<8x128xf32>
    %23 = vector.extract_strided_slice %16 {offsets = [0, 128], sizes = [8, 128], strides = [1, 1]} : vector<8x512xf32> to vector<8x128xf32>
    %24 = arith.negf %23 : vector<8x128xf32>
    %25 = math.exp %24 : vector<8x128xf32>
    %cst_17 = arith.constant 1.000000e+00 : f32
    %26 = vector.broadcast %cst_17 : f32 to vector<8x128xf32>
    %27 = arith.addf %26, %25 : vector<8x128xf32>
    %28 = arith.divf %26, %27 : vector<8x128xf32>
    %29 = vector.extract_strided_slice %16 {offsets = [0, 256], sizes = [8, 128], strides = [1, 1]} : vector<8x512xf32> to vector<8x128xf32>
    %30 = math.tanh %29 : vector<8x128xf32>
    %31 = vector.extract_strided_slice %16 {offsets = [0, 384], sizes = [8, 128], strides = [1, 1]} : vector<8x512xf32> to vector<8x128xf32>
    %32 = arith.negf %31 : vector<8x128xf32>
    %33 = math.exp %32 : vector<8x128xf32>
    %cst_18 = arith.constant 1.000000e+00 : f32
    %34 = vector.broadcast %cst_18 : f32 to vector<8x128xf32>
    %35 = arith.addf %34, %33 : vector<8x128xf32>
    %36 = arith.divf %34, %35 : vector<8x128xf32>
    %37 = arith.mulf %28, %11 : vector<8x128xf32>
    %38 = arith.mulf %22, %30 : vector<8x128xf32>
    %39 = arith.addf %37, %38 : vector<8x128xf32>
    %40 = math.tanh %39 : vector<8x128xf32>
    %41 = arith.mulf %36, %40 : vector<8x128xf32>
    %42 = arith.truncf %41 : vector<8x128xf32> to vector<8x128xbf16>
    %43 = arith.index_cast %c0_i32 : i32 to index
    %c0_19 = arith.constant 0 : index
    %c0_20 = arith.constant 0 : index
    %44 = vector.load %arg15[%43, %c0_19, %c0_20] : memref<8x8x128xbf16, #tpu.memory_space<vmem>>, vector<1x8x128xbf16>
    %45 = vector.shape_cast %44 : vector<1x8x128xbf16> to vector<8x128xbf16>
    %46 = vector.shape_cast %42 : vector<8x128xbf16> to vector<1x8x128xbf16>
    tpu.vector_store %arg15[%43, %c0_19, %c0_20], %46 {strides = array<i32>} : memref<8x8x128xbf16, #tpu.memory_space<vmem>>, vector<1x8x128xbf16>,
    %c1_i32 = arith.constant 1 : i32
    %47 = arith.index_cast %c1_i32 : i32 to index
    %c0_21 = arith.constant 0 : index
    %c0_22 = arith.constant 0 : index
    %48 = vector.load %arg16[%47, %c0_21, %c0_22] : memref<8x8x512xf32, #tpu.memory_space<vmem>>, vector<1x8x512xf32>
    %49 = vector.shape_cast %48 : vector<1x8x512xf32> to vector<8x512xf32>
    %cst_23 = arith.constant dense<0.000000e+00> : vector<8x512xf32>
    %50 = tpu.matmul %42, %1, %cst_23 {dimension_numbers = #tpu.dot_dimension_numbers<[1], [0], [0], [1], [0, 0, 1, 1], [], []>} : vector<8x128xbf16>, vector<128x512xbf16>, vector<8x512xf32> -> vector<8x512xf32>
    %51 = arith.addf %49, %50 : vector<8x512xf32>
    %52 = vector.extract_strided_slice %51 {offsets = [0, 0], sizes = [8, 128], strides = [1, 1]} : vector<8x512xf32> to vector<8x128xf32>
    %53 = arith.negf %52 : vector<8x128xf32>
    %54 = math.exp %53 : vector<8x128xf32>
    %cst_24 = arith.constant 1.000000e+00 : f32
    %55 = vector.broadcast %cst_24 : f32 to vector<8x128xf32>
    %56 = arith.addf %55, %54 : vector<8x128xf32>
    %57 = arith.divf %55, %56 : vector<8x128xf32>
    %58 = vector.extract_strided_slice %51 {offsets = [0, 128], sizes = [8, 128], strides = [1, 1]} : vector<8x512xf32> to vector<8x128xf32>
    %59 = arith.negf %58 : vector<8x128xf32>
    %60 = math.exp %59 : vector<8x128xf32>
    %cst_25 = arith.constant 1.000000e+00 : f32
    %61 = vector.broadcast %cst_25 : f32 to vector<8x128xf32>
    %62 = arith.addf %61, %60 : vector<8x128xf32>
    %63 = arith.divf %61, %62 : vector<8x128xf32>
    %64 = vector.extract_strided_slice %51 {offsets = [0, 256], sizes = [8, 128], strides = [1, 1]} : vector<8x512xf32> to vector<8x128xf32>
    %65 = math.tanh %64 : vector<8x128xf32>
    %66 = vector.extract_strided_slice %51 {offsets = [0, 384], sizes = [8, 128], strides = [1, 1]} : vector<8x512xf32> to vector<8x128xf32>
    %67 = arith.negf %66 : vector<8x128xf32>
    %68 = math.exp %67 : vector<8x128xf32>
    %cst_26 = arith.constant 1.000000e+00 : f32
    %69 = vector.broadcast %cst_26 : f32 to vector<8x128xf32>
    %70 = arith.addf %69, %68 : vector<8x128xf32>
    %71 = arith.divf %69, %70 : vector<8x128xf32>
    %72 = arith.mulf %63, %39 : vector<8x128xf32>
    %73 = arith.mulf %57, %65 : vector<8x128xf32>
    %74 = arith.addf %72, %73 : vector<8x128xf32>
    %75 = math.tanh %74 : vector<8x128xf32>
    %76 = arith.mulf %71, %75 : vector<8x128xf32>
    %77 = arith.truncf %76 : vector<8x128xf32> to vector<8x128xbf16>
    %78 = arith.index_cast %c1_i32 : i32 to index
    %c0_27 = arith.constant 0 : index
    %c0_28 = arith.constant 0 : index
    %79 = vector.load %arg15[%78, %c0_27, %c0_28] : memref<8x8x128xbf16, #tpu.memory_space<vmem>>, vector<1x8x128xbf16>
    %80 = vector.shape_cast %79 : vector<1x8x128xbf16> to vector<8x128xbf16>
    %81 = vector.shape_cast %77 : vector<8x128xbf16> to vector<1x8x128xbf16>
    tpu.vector_store %arg15[%78, %c0_27, %c0_28], %81 {strides = array<i32>} : memref<8x8x128xbf16, #tpu.memory_space<vmem>>, vector<1x8x128xbf16>,
    %c2_i32 = arith.constant 2 : i32
    %82 = arith.index_cast %c2_i32 : i32 to index
    %c0_29 = arith.constant 0 : index
    %c0_30 = arith.constant 0 : index
    %83 = vector.load %arg16[%82, %c0_29, %c0_30] : memref<8x8x512xf32, #tpu.memory_space<vmem>>, vector<1x8x512xf32>
    %84 = vector.shape_cast %83 : vector<1x8x512xf32> to vector<8x512xf32>
    %cst_31 = arith.constant dense<0.000000e+00> : vector<8x512xf32>
    %85 = tpu.matmul %77, %1, %cst_31 {dimension_numbers = #tpu.dot_dimension_numbers<[1], [0], [0], [1], [0, 0, 1, 1], [], []>} : vector<8x128xbf16>, vector<128x512xbf16>, vector<8x512xf32> -> vector<8x512xf32>
    %86 = arith.addf %84, %85 : vector<8x512xf32>
    %87 = vector.extract_strided_slice %86 {offsets = [0, 0], sizes = [8, 128], strides = [1, 1]} : vector<8x512xf32> to vector<8x128xf32>
    %88 = arith.negf %87 : vector<8x128xf32>
    %89 = math.exp %88 : vector<8x128xf32>
    %cst_32 = arith.constant 1.000000e+00 : f32
    %90 = vector.broadcast %cst_32 : f32 to vector<8x128xf32>
    %91 = arith.addf %90, %89 : vector<8x128xf32>
    %92 = arith.divf %90, %91 : vector<8x128xf32>
    %93 = vector.extract_strided_slice %86 {offsets = [0, 128], sizes = [8, 128], strides = [1, 1]} : vector<8x512xf32> to vector<8x128xf32>
    %94 = arith.negf %93 : vector<8x128xf32>
    %95 = math.exp %94 : vector<8x128xf32>
    %cst_33 = arith.constant 1.000000e+00 : f32
    %96 = vector.broadcast %cst_33 : f32 to vector<8x128xf32>
    %97 = arith.addf %96, %95 : vector<8x128xf32>
    %98 = arith.divf %96, %97 : vector<8x128xf32>
    %99 = vector.extract_strided_slice %86 {offsets = [0, 256], sizes = [8, 128], strides = [1, 1]} : vector<8x512xf32> to vector<8x128xf32>
    %100 = math.tanh %99 : vector<8x128xf32>
    %101 = vector.extract_strided_slice %86 {offsets = [0, 384], sizes = [8, 128], strides = [1, 1]} : vector<8x512xf32> to vector<8x128xf32>
    %102 = arith.negf %101 : vector<8x128xf32>
    %103 = math.exp %102 : vector<8x128xf32>
    %cst_34 = arith.constant 1.000000e+00 : f32
    %104 = vector.broadcast %cst_34 : f32 to vector<8x128xf32>
    %105 = arith.addf %104, %103 : vector<8x128xf32>
    %106 = arith.divf %104, %105 : vector<8x128xf32>
    %107 = arith.mulf %98, %74 : vector<8x128xf32>
    %108 = arith.mulf %92, %100 : vector<8x128xf32>
    %109 = arith.addf %107, %108 : vector<8x128xf32>
    %110 = math.tanh %109 : vector<8x128xf32>
    %111 = arith.mulf %106, %110 : vector<8x128xf32>
    %112 = arith.truncf %111 : vector<8x128xf32> to vector<8x128xbf16>
    %113 = arith.index_cast %c2_i32 : i32 to index
    %c0_35 = arith.constant 0 : index
    %c0_36 = arith.constant 0 : index
    %114 = vector.load %arg15[%113, %c0_35, %c0_36] : memref<8x8x128xbf16, #tpu.memory_space<vmem>>, vector<1x8x128xbf16>
    %115 = vector.shape_cast %114 : vector<1x8x128xbf16> to vector<8x128xbf16>
    %116 = vector.shape_cast %112 : vector<8x128xbf16> to vector<1x8x128xbf16>
    tpu.vector_store %arg15[%113, %c0_35, %c0_36], %116 {strides = array<i32>} : memref<8x8x128xbf16, #tpu.memory_space<vmem>>, vector<1x8x128xbf16>,
    %c3_i32 = arith.constant 3 : i32
    %117 = arith.index_cast %c3_i32 : i32 to index
    %c0_37 = arith.constant 0 : index
    %c0_38 = arith.constant 0 : index
    %118 = vector.load %arg16[%117, %c0_37, %c0_38] : memref<8x8x512xf32, #tpu.memory_space<vmem>>, vector<1x8x512xf32>
    %119 = vector.shape_cast %118 : vector<1x8x512xf32> to vector<8x512xf32>
    %cst_39 = arith.constant dense<0.000000e+00> : vector<8x512xf32>
    %120 = tpu.matmul %112, %1, %cst_39 {dimension_numbers = #tpu.dot_dimension_numbers<[1], [0], [0], [1], [0, 0, 1, 1], [], []>} : vector<8x128xbf16>, vector<128x512xbf16>, vector<8x512xf32> -> vector<8x512xf32>
    %121 = arith.addf %119, %120 : vector<8x512xf32>
    %122 = vector.extract_strided_slice %121 {offsets = [0, 0], sizes = [8, 128], strides = [1, 1]} : vector<8x512xf32> to vector<8x128xf32>
    %123 = arith.negf %122 : vector<8x128xf32>
    %124 = math.exp %123 : vector<8x128xf32>
    %cst_40 = arith.constant 1.000000e+00 : f32
    %125 = vector.broadcast %cst_40 : f32 to vector<8x128xf32>
    %126 = arith.addf %125, %124 : vector<8x128xf32>
    %127 = arith.divf %125, %126 : vector<8x128xf32>
    %128 = vector.extract_strided_slice %121 {offsets = [0, 128], sizes = [8, 128], strides = [1, 1]} : vector<8x512xf32> to vector<8x128xf32>
    %129 = arith.negf %128 : vector<8x128xf32>
    %130 = math.exp %129 : vector<8x128xf32>
    %cst_41 = arith.constant 1.000000e+00 : f32
    %131 = vector.broadcast %cst_41 : f32 to vector<8x128xf32>
    %132 = arith.addf %131, %130 : vector<8x128xf32>
    %133 = arith.divf %131, %132 : vector<8x128xf32>
    %134 = vector.extract_strided_slice %121 {offsets = [0, 256], sizes = [8, 128], strides = [1, 1]} : vector<8x512xf32> to vector<8x128xf32>
    %135 = math.tanh %134 : vector<8x128xf32>
    %136 = vector.extract_strided_slice %121 {offsets = [0, 384], sizes = [8, 128], strides = [1, 1]} : vector<8x512xf32> to vector<8x128xf32>
    %137 = arith.negf %136 : vector<8x128xf32>
    %138 = math.exp %137 : vector<8x128xf32>
    %cst_42 = arith.constant 1.000000e+00 : f32
    %139 = vector.broadcast %cst_42 : f32 to vector<8x128xf32>
    %140 = arith.addf %139, %138 : vector<8x128xf32>
    %141 = arith.divf %139, %140 : vector<8x128xf32>
    %142 = arith.mulf %133, %109 : vector<8x128xf32>
    %143 = arith.mulf %127, %135 : vector<8x128xf32>
    %144 = arith.addf %142, %143 : vector<8x128xf32>
    %145 = math.tanh %144 : vector<8x128xf32>
    %146 = arith.mulf %141, %145 : vector<8x128xf32>
    %147 = arith.truncf %146 : vector<8x128xf32> to vector<8x128xbf16>
    %148 = arith.index_cast %c3_i32 : i32 to index
    %c0_43 = arith.constant 0 : index
    %c0_44 = arith.constant 0 : index
    %149 = vector.load %arg15[%148, %c0_43, %c0_44] : memref<8x8x128xbf16, #tpu.memory_space<vmem>>, vector<1x8x128xbf16>
    %150 = vector.shape_cast %149 : vector<1x8x128xbf16> to vector<8x128xbf16>
    %151 = vector.shape_cast %147 : vector<8x128xbf16> to vector<1x8x128xbf16>
    tpu.vector_store %arg15[%148, %c0_43, %c0_44], %151 {strides = array<i32>} : memref<8x8x128xbf16, #tpu.memory_space<vmem>>, vector<1x8x128xbf16>,
    %c4_i32 = arith.constant 4 : i32
    %152 = arith.index_cast %c4_i32 : i32 to index
    %c0_45 = arith.constant 0 : index
    %c0_46 = arith.constant 0 : index
    %153 = vector.load %arg16[%152, %c0_45, %c0_46] : memref<8x8x512xf32, #tpu.memory_space<vmem>>, vector<1x8x512xf32>
    %154 = vector.shape_cast %153 : vector<1x8x512xf32> to vector<8x512xf32>
    %cst_47 = arith.constant dense<0.000000e+00> : vector<8x512xf32>
    %155 = tpu.matmul %147, %1, %cst_47 {dimension_numbers = #tpu.dot_dimension_numbers<[1], [0], [0], [1], [0, 0, 1, 1], [], []>} : vector<8x128xbf16>, vector<128x512xbf16>, vector<8x512xf32> -> vector<8x512xf32>
    %156 = arith.addf %154, %155 : vector<8x512xf32>
    %157 = vector.extract_strided_slice %156 {offsets = [0, 0], sizes = [8, 128], strides = [1, 1]} : vector<8x512xf32> to vector<8x128xf32>
    %158 = arith.negf %157 : vector<8x128xf32>
    %159 = math.exp %158 : vector<8x128xf32>
    %cst_48 = arith.constant 1.000000e+00 : f32
    %160 = vector.broadcast %cst_48 : f32 to vector<8x128xf32>
    %161 = arith.addf %160, %159 : vector<8x128xf32>
    %162 = arith.divf %160, %161 : vector<8x128xf32>
    %163 = vector.extract_strided_slice %156 {offsets = [0, 128], sizes = [8, 128], strides = [1, 1]} : vector<8x512xf32> to vector<8x128xf32>
    %164 = arith.negf %163 : vector<8x128xf32>
    %165 = math.exp %164 : vector<8x128xf32>
    %cst_49 = arith.constant 1.000000e+00 : f32
    %166 = vector.broadcast %cst_49 : f32 to vector<8x128xf32>
    %167 = arith.addf %166, %165 : vector<8x128xf32>
    %168 = arith.divf %166, %167 : vector<8x128xf32>
    %169 = vector.extract_strided_slice %156 {offsets = [0, 256], sizes = [8, 128], strides = [1, 1]} : vector<8x512xf32> to vector<8x128xf32>
    %170 = math.tanh %169 : vector<8x128xf32>
    %171 = vector.extract_strided_slice %156 {offsets = [0, 384], sizes = [8, 128], strides = [1, 1]} : vector<8x512xf32> to vector<8x128xf32>
    %172 = arith.negf %171 : vector<8x128xf32>
    %173 = math.exp %172 : vector<8x128xf32>
    %cst_50 = arith.constant 1.000000e+00 : f32
    %174 = vector.broadcast %cst_50 : f32 to vector<8x128xf32>
    %175 = arith.addf %174, %173 : vector<8x128xf32>
    %176 = arith.divf %174, %175 : vector<8x128xf32>
    %177 = arith.mulf %168, %144 : vector<8x128xf32>
    %178 = arith.mulf %162, %170 : vector<8x128xf32>
    %179 = arith.addf %177, %178 : vector<8x128xf32>
    %180 = math.tanh %179 : vector<8x128xf32>
    %181 = arith.mulf %176, %180 : vector<8x128xf32>
    %182 = arith.truncf %181 : vector<8x128xf32> to vector<8x128xbf16>
    %183 = arith.index_cast %c4_i32 : i32 to index
    %c0_51 = arith.constant 0 : index
    %c0_52 = arith.constant 0 : index
    %184 = vector.load %arg15[%183, %c0_51, %c0_52] : memref<8x8x128xbf16, #tpu.memory_space<vmem>>, vector<1x8x128xbf16>
    %185 = vector.shape_cast %184 : vector<1x8x128xbf16> to vector<8x128xbf16>
    %186 = vector.shape_cast %182 : vector<8x128xbf16> to vector<1x8x128xbf16>
    tpu.vector_store %arg15[%183, %c0_51, %c0_52], %186 {strides = array<i32>} : memref<8x8x128xbf16, #tpu.memory_space<vmem>>, vector<1x8x128xbf16>,
    %c5_i32 = arith.constant 5 : i32
    %187 = arith.index_cast %c5_i32 : i32 to index
    %c0_53 = arith.constant 0 : index
    %c0_54 = arith.constant 0 : index
    %188 = vector.load %arg16[%187, %c0_53, %c0_54] : memref<8x8x512xf32, #tpu.memory_space<vmem>>, vector<1x8x512xf32>
    %189 = vector.shape_cast %188 : vector<1x8x512xf32> to vector<8x512xf32>
    %cst_55 = arith.constant dense<0.000000e+00> : vector<8x512xf32>
    %190 = tpu.matmul %182, %1, %cst_55 {dimension_numbers = #tpu.dot_dimension_numbers<[1], [0], [0], [1], [0, 0, 1, 1], [], []>} : vector<8x128xbf16>, vector<128x512xbf16>, vector<8x512xf32> -> vector<8x512xf32>
    %191 = arith.addf %189, %190 : vector<8x512xf32>
    %192 = vector.extract_strided_slice %191 {offsets = [0, 0], sizes = [8, 128], strides = [1, 1]} : vector<8x512xf32> to vector<8x128xf32>
    %193 = arith.negf %192 : vector<8x128xf32>
    %194 = math.exp %193 : vector<8x128xf32>
    %cst_56 = arith.constant 1.000000e+00 : f32
    %195 = vector.broadcast %cst_56 : f32 to vector<8x128xf32>
    %196 = arith.addf %195, %194 : vector<8x128xf32>
    %197 = arith.divf %195, %196 : vector<8x128xf32>
    %198 = vector.extract_strided_slice %191 {offsets = [0, 128], sizes = [8, 128], strides = [1, 1]} : vector<8x512xf32> to vector<8x128xf32>
    %199 = arith.negf %198 : vector<8x128xf32>
    %200 = math.exp %199 : vector<8x128xf32>
    %cst_57 = arith.constant 1.000000e+00 : f32
    %201 = vector.broadcast %cst_57 : f32 to vector<8x128xf32>
    %202 = arith.addf %201, %200 : vector<8x128xf32>
    %203 = arith.divf %201, %202 : vector<8x128xf32>
    %204 = vector.extract_strided_slice %191 {offsets = [0, 256], sizes = [8, 128], strides = [1, 1]} : vector<8x512xf32> to vector<8x128xf32>
    %205 = math.tanh %204 : vector<8x128xf32>
    %206 = vector.extract_strided_slice %191 {offsets = [0, 384], sizes = [8, 128], strides = [1, 1]} : vector<8x512xf32> to vector<8x128xf32>
    %207 = arith.negf %206 : vector<8x128xf32>
    %208 = math.exp %207 : vector<8x128xf32>
    %cst_58 = arith.constant 1.000000e+00 : f32
    %209 = vector.broadcast %cst_58 : f32 to vector<8x128xf32>
    %210 = arith.addf %209, %208 : vector<8x128xf32>
    %211 = arith.divf %209, %210 : vector<8x128xf32>
    %212 = arith.mulf %203, %179 : vector<8x128xf32>
    %213 = arith.mulf %197, %205 : vector<8x128xf32>
    %214 = arith.addf %212, %213 : vector<8x128xf32>
    %215 = math.tanh %214 : vector<8x128xf32>
    %216 = arith.mulf %211, %215 : vector<8x128xf32>
    %217 = arith.truncf %216 : vector<8x128xf32> to vector<8x128xbf16>
    %218 = arith.index_cast %c5_i32 : i32 to index
    %c0_59 = arith.constant 0 : index
    %c0_60 = arith.constant 0 : index
    %219 = vector.load %arg15[%218, %c0_59, %c0_60] : memref<8x8x128xbf16, #tpu.memory_space<vmem>>, vector<1x8x128xbf16>
    %220 = vector.shape_cast %219 : vector<1x8x128xbf16> to vector<8x128xbf16>
    %221 = vector.shape_cast %217 : vector<8x128xbf16> to vector<1x8x128xbf16>
    tpu.vector_store %arg15[%218, %c0_59, %c0_60], %221 {strides = array<i32>} : memref<8x8x128xbf16, #tpu.memory_space<vmem>>, vector<1x8x128xbf16>,
    %c6_i32 = arith.constant 6 : i32
    %222 = arith.index_cast %c6_i32 : i32 to index
    %c0_61 = arith.constant 0 : index
    %c0_62 = arith.constant 0 : index
    %223 = vector.load %arg16[%222, %c0_61, %c0_62] : memref<8x8x512xf32, #tpu.memory_space<vmem>>, vector<1x8x512xf32>
    %224 = vector.shape_cast %223 : vector<1x8x512xf32> to vector<8x512xf32>
    %cst_63 = arith.constant dense<0.000000e+00> : vector<8x512xf32>
    %225 = tpu.matmul %217, %1, %cst_63 {dimension_numbers = #tpu.dot_dimension_numbers<[1], [0], [0], [1], [0, 0, 1, 1], [], []>} : vector<8x128xbf16>, vector<128x512xbf16>, vector<8x512xf32> -> vector<8x512xf32>
    %226 = arith.addf %224, %225 : vector<8x512xf32>
    %227 = vector.extract_strided_slice %226 {offsets = [0, 0], sizes = [8, 128], strides = [1, 1]} : vector<8x512xf32> to vector<8x128xf32>
    %228 = arith.negf %227 : vector<8x128xf32>
    %229 = math.exp %228 : vector<8x128xf32>
    %cst_64 = arith.constant 1.000000e+00 : f32
    %230 = vector.broadcast %cst_64 : f32 to vector<8x128xf32>
    %231 = arith.addf %230, %229 : vector<8x128xf32>
    %232 = arith.divf %230, %231 : vector<8x128xf32>
    %233 = vector.extract_strided_slice %226 {offsets = [0, 128], sizes = [8, 128], strides = [1, 1]} : vector<8x512xf32> to vector<8x128xf32>
    %234 = arith.negf %233 : vector<8x128xf32>
    %235 = math.exp %234 : vector<8x128xf32>
    %cst_65 = arith.constant 1.000000e+00 : f32
    %236 = vector.broadcast %cst_65 : f32 to vector<8x128xf32>
    %237 = arith.addf %236, %235 : vector<8x128xf32>
    %238 = arith.divf %236, %237 : vector<8x128xf32>
    %239 = vector.extract_strided_slice %226 {offsets = [0, 256], sizes = [8, 128], strides = [1, 1]} : vector<8x512xf32> to vector<8x128xf32>
    %240 = math.tanh %239 : vector<8x128xf32>
    %241 = vector.extract_strided_slice %226 {offsets = [0, 384], sizes = [8, 128], strides = [1, 1]} : vector<8x512xf32> to vector<8x128xf32>
    %242 = arith.negf %241 : vector<8x128xf32>
    %243 = math.exp %242 : vector<8x128xf32>
    %cst_66 = arith.constant 1.000000e+00 : f32
    %244 = vector.broadcast %cst_66 : f32 to vector<8x128xf32>
    %245 = arith.addf %244, %243 : vector<8x128xf32>
    %246 = arith.divf %244, %245 : vector<8x128xf32>
    %247 = arith.mulf %238, %214 : vector<8x128xf32>
    %248 = arith.mulf %232, %240 : vector<8x128xf32>
    %249 = arith.addf %247, %248 : vector<8x128xf32>
    %250 = math.tanh %249 : vector<8x128xf32>
    %251 = arith.mulf %246, %250 : vector<8x128xf32>
    %252 = arith.truncf %251 : vector<8x128xf32> to vector<8x128xbf16>
    %253 = arith.index_cast %c6_i32 : i32 to index
    %c0_67 = arith.constant 0 : index
    %c0_68 = arith.constant 0 : index
    %254 = vector.load %arg15[%253, %c0_67, %c0_68] : memref<8x8x128xbf16, #tpu.memory_space<vmem>>, vector<1x8x128xbf16>
    %255 = vector.shape_cast %254 : vector<1x8x128xbf16> to vector<8x128xbf16>
    %256 = vector.shape_cast %252 : vector<8x128xbf16> to vector<1x8x128xbf16>
    tpu.vector_store %arg15[%253, %c0_67, %c0_68], %256 {strides = array<i32>} : memref<8x8x128xbf16, #tpu.memory_space<vmem>>, vector<1x8x128xbf16>,
    %c7_i32 = arith.constant 7 : i32
    %257 = arith.index_cast %c7_i32 : i32 to index
    %c0_69 = arith.constant 0 : index
    %c0_70 = arith.constant 0 : index
    %258 = vector.load %arg16[%257, %c0_69, %c0_70] : memref<8x8x512xf32, #tpu.memory_space<vmem>>, vector<1x8x512xf32>
    %259 = vector.shape_cast %258 : vector<1x8x512xf32> to vector<8x512xf32>
    %cst_71 = arith.constant dense<0.000000e+00> : vector<8x512xf32>
    %260 = tpu.matmul %252, %1, %cst_71 {dimension_numbers = #tpu.dot_dimension_numbers<[1], [0], [0], [1], [0, 0, 1, 1], [], []>} : vector<8x128xbf16>, vector<128x512xbf16>, vector<8x512xf32> -> vector<8x512xf32>
    %261 = arith.addf %259, %260 : vector<8x512xf32>
    %262 = vector.extract_strided_slice %261 {offsets = [0, 0], sizes = [8, 128], strides = [1, 1]} : vector<8x512xf32> to vector<8x128xf32>
    %263 = arith.negf %262 : vector<8x128xf32>
    %264 = math.exp %263 : vector<8x128xf32>
    %cst_72 = arith.constant 1.000000e+00 : f32
    %265 = vector.broadcast %cst_72 : f32 to vector<8x128xf32>
    %266 = arith.addf %265, %264 : vector<8x128xf32>
    %267 = arith.divf %265, %266 : vector<8x128xf32>
    %268 = vector.extract_strided_slice %261 {offsets = [0, 128], sizes = [8, 128], strides = [1, 1]} : vector<8x512xf32> to vector<8x128xf32>
    %269 = arith.negf %268 : vector<8x128xf32>
    %270 = math.exp %269 : vector<8x128xf32>
    %cst_73 = arith.constant 1.000000e+00 : f32
    %271 = vector.broadcast %cst_73 : f32 to vector<8x128xf32>
    %272 = arith.addf %271, %270 : vector<8x128xf32>
    %273 = arith.divf %271, %272 : vector<8x128xf32>
    %274 = vector.extract_strided_slice %261 {offsets = [0, 256], sizes = [8, 128], strides = [1, 1]} : vector<8x512xf32> to vector<8x128xf32>
    %275 = math.tanh %274 : vector<8x128xf32>
    %276 = vector.extract_strided_slice %261 {offsets = [0, 384], sizes = [8, 128], strides = [1, 1]} : vector<8x512xf32> to vector<8x128xf32>
    %277 = arith.negf %276 : vector<8x128xf32>
    %278 = math.exp %277 : vector<8x128xf32>
    %cst_74 = arith.constant 1.000000e+00 : f32
    %279 = vector.broadcast %cst_74 : f32 to vector<8x128xf32>
    %280 = arith.addf %279, %278 : vector<8x128xf32>
    %281 = arith.divf %279, %280 : vector<8x128xf32>
    %282 = arith.mulf %273, %249 : vector<8x128xf32>
    %283 = arith.mulf %267, %275 : vector<8x128xf32>
    %284 = arith.addf %282, %283 : vector<8x128xf32>
    %285 = math.tanh %284 : vector<8x128xf32>
    %286 = arith.mulf %281, %285 : vector<8x128xf32>
    %287 = arith.truncf %286 : vector<8x128xf32> to vector<8x128xbf16>
    %288 = arith.index_cast %c7_i32 : i32 to index
    %c0_75 = arith.constant 0 : index
    %c0_76 = arith.constant 0 : index
    %289 = vector.load %arg15[%288, %c0_75, %c0_76] : memref<8x8x128xbf16, #tpu.memory_space<vmem>>, vector<1x8x128xbf16>
    %290 = vector.shape_cast %289 : vector<1x8x128xbf16> to vector<8x128xbf16>
    %291 = vector.shape_cast %287 : vector<8x128xbf16> to vector<1x8x128xbf16>
    tpu.vector_store %arg15[%288, %c0_75, %c0_76], %291 {strides = array<i32>} : memref<8x8x128xbf16, #tpu.memory_space<vmem>>, vector<1x8x128xbf16>,
    %c8_i32 = arith.constant 8 : i32
    %c0_77 = arith.constant 0 : index
    %c0_78 = arith.constant 0 : index
    %292 = vector.load %arg5[%c0_77, %c0_78] : memref<128x512xbf16, #tpu.memory_space<vmem>>, vector<128x512xbf16>
    %c0_79 = arith.constant 0 : index
    %c0_80 = arith.constant 0 : index
    %293 = vector.load %arg6[%c0_79, %c0_80] : memref<128x512xbf16, #tpu.memory_space<vmem>>, vector<128x512xbf16>
    %c0_81 = arith.constant 0 : index
    %c0_82 = arith.constant 0 : index
    %294 = vector.load %arg7[%c0_81, %c0_82] : memref<1x512xf32, #tpu.memory_space<vmem>>, vector<1x512xf32>
    %c0_83 = arith.constant 0 : index
    %c0_84 = arith.constant 0 : index
    %c0_85 = arith.constant 0 : index
    %295 = vector.load %arg15[%c0_83, %c0_84, %c0_85] : memref<8x8x128xbf16, #tpu.memory_space<vmem>>, vector<8x8x128xbf16>
    %296 = vector.shape_cast %295 : vector<8x8x128xbf16> to vector<64x128xbf16>
    %cst_86 = arith.constant dense<0.000000e+00> : vector<64x512xf32>
    %297 = tpu.matmul %296, %292, %cst_86 {dimension_numbers = #tpu.dot_dimension_numbers<[1], [0], [0], [1], [0, 0, 1, 1], [], []>} : vector<64x128xbf16>, vector<128x512xbf16>, vector<64x512xf32> -> vector<64x512xf32>
    %298 = vector.broadcast %294 : vector<1x512xf32> to vector<64x512xf32>
    %299 = arith.addf %297, %298 : vector<64x512xf32>
    %300 = vector.shape_cast %299 : vector<64x512xf32> to vector<8x8x512xf32>
    %c0_87 = arith.constant 0 : index
    %c0_88 = arith.constant 0 : index
    %c0_89 = arith.constant 0 : index
    %301 = vector.load %arg16[%c0_87, %c0_88, %c0_89] : memref<8x8x512xf32, #tpu.memory_space<vmem>>, vector<8x8x512xf32>
    tpu.vector_store %arg16[%c0_87, %c0_88, %c0_89], %300 {strides = array<i32>} : memref<8x8x512xf32, #tpu.memory_space<vmem>>, vector<8x8x512xf32>,
    %cst_90 = arith.constant 0.000000e+00 : bf16
    %302 = vector.broadcast %cst_90 : bf16 to vector<8x128xbf16>
    %cst_91 = arith.constant 0.000000e+00 : f32
    %303 = vector.broadcast %cst_91 : f32 to vector<8x128xf32>
    %c0_i32_92 = arith.constant 0 : i32
    %304 = arith.index_cast %c0_i32_92 : i32 to index
    %c0_93 = arith.constant 0 : index
    %c0_94 = arith.constant 0 : index
    %305 = vector.load %arg16[%304, %c0_93, %c0_94] : memref<8x8x512xf32, #tpu.memory_space<vmem>>, vector<1x8x512xf32>
    %306 = vector.shape_cast %305 : vector<1x8x512xf32> to vector<8x512xf32>
    %cst_95 = arith.constant dense<0.000000e+00> : vector<8x512xf32>
    %307 = tpu.matmul %302, %293, %cst_95 {dimension_numbers = #tpu.dot_dimension_numbers<[1], [0], [0], [1], [0, 0, 1, 1], [], []>} : vector<8x128xbf16>, vector<128x512xbf16>, vector<8x512xf32> -> vector<8x512xf32>
    %308 = arith.addf %306, %307 : vector<8x512xf32>
    %309 = vector.extract_strided_slice %308 {offsets = [0, 0], sizes = [8, 128], strides = [1, 1]} : vector<8x512xf32> to vector<8x128xf32>
    %310 = arith.negf %309 : vector<8x128xf32>
    %311 = math.exp %310 : vector<8x128xf32>
    %cst_96 = arith.constant 1.000000e+00 : f32
    %312 = vector.broadcast %cst_96 : f32 to vector<8x128xf32>
    %313 = arith.addf %312, %311 : vector<8x128xf32>
    %314 = arith.divf %312, %313 : vector<8x128xf32>
    %315 = vector.extract_strided_slice %308 {offsets = [0, 128], sizes = [8, 128], strides = [1, 1]} : vector<8x512xf32> to vector<8x128xf32>
    %316 = arith.negf %315 : vector<8x128xf32>
    %317 = math.exp %316 : vector<8x128xf32>
    %cst_97 = arith.constant 1.000000e+00 : f32
    %318 = vector.broadcast %cst_97 : f32 to vector<8x128xf32>
    %319 = arith.addf %318, %317 : vector<8x128xf32>
    %320 = arith.divf %318, %319 : vector<8x128xf32>
    %321 = vector.extract_strided_slice %308 {offsets = [0, 256], sizes = [8, 128], strides = [1, 1]} : vector<8x512xf32> to vector<8x128xf32>
    %322 = math.tanh %321 : vector<8x128xf32>
    %323 = vector.extract_strided_slice %308 {offsets = [0, 384], sizes = [8, 128], strides = [1, 1]} : vector<8x512xf32> to vector<8x128xf32>
    %324 = arith.negf %323 : vector<8x128xf32>
    %325 = math.exp %324 : vector<8x128xf32>
    %cst_98 = arith.constant 1.000000e+00 : f32
    %326 = vector.broadcast %cst_98 : f32 to vector<8x128xf32>
    %327 = arith.addf %326, %325 : vector<8x128xf32>
    %328 = arith.divf %326, %327 : vector<8x128xf32>
    %329 = arith.mulf %320, %303 : vector<8x128xf32>
    %330 = arith.mulf %314, %322 : vector<8x128xf32>
    %331 = arith.addf %329, %330 : vector<8x128xf32>
    %332 = math.tanh %331 : vector<8x128xf32>
    %333 = arith.mulf %328, %332 : vector<8x128xf32>
    %334 = arith.truncf %333 : vector<8x128xf32> to vector<8x128xbf16>
    %335 = arith.index_cast %c0_i32_92 : i32 to index
    %c0_99 = arith.constant 0 : index
    %c0_100 = arith.constant 0 : index
    %336 = vector.load %arg15[%335, %c0_99, %c0_100] : memref<8x8x128xbf16, #tpu.memory_space<vmem>>, vector<1x8x128xbf16>
    %337 = vector.shape_cast %336 : vector<1x8x128xbf16> to vector<8x128xbf16>
    %338 = vector.shape_cast %334 : vector<8x128xbf16> to vector<1x8x128xbf16>
    tpu.vector_store %arg15[%335, %c0_99, %c0_100], %338 {strides = array<i32>} : memref<8x8x128xbf16, #tpu.memory_space<vmem>>, vector<1x8x128xbf16>,
    %c1_i32_101 = arith.constant 1 : i32
    %339 = arith.index_cast %c1_i32_101 : i32 to index
    %c0_102 = arith.constant 0 : index
    %c0_103 = arith.constant 0 : index
    %340 = vector.load %arg16[%339, %c0_102, %c0_103] : memref<8x8x512xf32, #tpu.memory_space<vmem>>, vector<1x8x512xf32>
    %341 = vector.shape_cast %340 : vector<1x8x512xf32> to vector<8x512xf32>
    %cst_104 = arith.constant dense<0.000000e+00> : vector<8x512xf32>
    %342 = tpu.matmul %334, %293, %cst_104 {dimension_numbers = #tpu.dot_dimension_numbers<[1], [0], [0], [1], [0, 0, 1, 1], [], []>} : vector<8x128xbf16>, vector<128x512xbf16>, vector<8x512xf32> -> vector<8x512xf32>
    %343 = arith.addf %341, %342 : vector<8x512xf32>
    %344 = vector.extract_strided_slice %343 {offsets = [0, 0], sizes = [8, 128], strides = [1, 1]} : vector<8x512xf32> to vector<8x128xf32>
    %345 = arith.negf %344 : vector<8x128xf32>
    %346 = math.exp %345 : vector<8x128xf32>
    %cst_105 = arith.constant 1.000000e+00 : f32
    %347 = vector.broadcast %cst_105 : f32 to vector<8x128xf32>
    %348 = arith.addf %347, %346 : vector<8x128xf32>
    %349 = arith.divf %347, %348 : vector<8x128xf32>
    %350 = vector.extract_strided_slice %343 {offsets = [0, 128], sizes = [8, 128], strides = [1, 1]} : vector<8x512xf32> to vector<8x128xf32>
    %351 = arith.negf %350 : vector<8x128xf32>
    %352 = math.exp %351 : vector<8x128xf32>
    %cst_106 = arith.constant 1.000000e+00 : f32
    %353 = vector.broadcast %cst_106 : f32 to vector<8x128xf32>
    %354 = arith.addf %353, %352 : vector<8x128xf32>
    %355 = arith.divf %353, %354 : vector<8x128xf32>
    %356 = vector.extract_strided_slice %343 {offsets = [0, 256], sizes = [8, 128], strides = [1, 1]} : vector<8x512xf32> to vector<8x128xf32>
    %357 = math.tanh %356 : vector<8x128xf32>
    %358 = vector.extract_strided_slice %343 {offsets = [0, 384], sizes = [8, 128], strides = [1, 1]} : vector<8x512xf32> to vector<8x128xf32>
    %359 = arith.negf %358 : vector<8x128xf32>
    %360 = math.exp %359 : vector<8x128xf32>
    %cst_107 = arith.constant 1.000000e+00 : f32
    %361 = vector.broadcast %cst_107 : f32 to vector<8x128xf32>
    %362 = arith.addf %361, %360 : vector<8x128xf32>
    %363 = arith.divf %361, %362 : vector<8x128xf32>
    %364 = arith.mulf %355, %331 : vector<8x128xf32>
    %365 = arith.mulf %349, %357 : vector<8x128xf32>
    %366 = arith.addf %364, %365 : vector<8x128xf32>
    %367 = math.tanh %366 : vector<8x128xf32>
    %368 = arith.mulf %363, %367 : vector<8x128xf32>
    %369 = arith.truncf %368 : vector<8x128xf32> to vector<8x128xbf16>
    %370 = arith.index_cast %c1_i32_101 : i32 to index
    %c0_108 = arith.constant 0 : index
    %c0_109 = arith.constant 0 : index
    %371 = vector.load %arg15[%370, %c0_108, %c0_109] : memref<8x8x128xbf16, #tpu.memory_space<vmem>>, vector<1x8x128xbf16>
    %372 = vector.shape_cast %371 : vector<1x8x128xbf16> to vector<8x128xbf16>
    %373 = vector.shape_cast %369 : vector<8x128xbf16> to vector<1x8x128xbf16>
    tpu.vector_store %arg15[%370, %c0_108, %c0_109], %373 {strides = array<i32>} : memref<8x8x128xbf16, #tpu.memory_space<vmem>>, vector<1x8x128xbf16>,
    %c2_i32_110 = arith.constant 2 : i32
    %374 = arith.index_cast %c2_i32_110 : i32 to index
    %c0_111 = arith.constant 0 : index
    %c0_112 = arith.constant 0 : index
    %375 = vector.load %arg16[%374, %c0_111, %c0_112] : memref<8x8x512xf32, #tpu.memory_space<vmem>>, vector<1x8x512xf32>
    %376 = vector.shape_cast %375 : vector<1x8x512xf32> to vector<8x512xf32>
    %cst_113 = arith.constant dense<0.000000e+00> : vector<8x512xf32>
    %377 = tpu.matmul %369, %293, %cst_113 {dimension_numbers = #tpu.dot_dimension_numbers<[1], [0], [0], [1], [0, 0, 1, 1], [], []>} : vector<8x128xbf16>, vector<128x512xbf16>, vector<8x512xf32> -> vector<8x512xf32>
    %378 = arith.addf %376, %377 : vector<8x512xf32>
    %379 = vector.extract_strided_slice %378 {offsets = [0, 0], sizes = [8, 128], strides = [1, 1]} : vector<8x512xf32> to vector<8x128xf32>
    %380 = arith.negf %379 : vector<8x128xf32>
    %381 = math.exp %380 : vector<8x128xf32>
    %cst_114 = arith.constant 1.000000e+00 : f32
    %382 = vector.broadcast %cst_114 : f32 to vector<8x128xf32>
    %383 = arith.addf %382, %381 : vector<8x128xf32>
    %384 = arith.divf %382, %383 : vector<8x128xf32>
    %385 = vector.extract_strided_slice %378 {offsets = [0, 128], sizes = [8, 128], strides = [1, 1]} : vector<8x512xf32> to vector<8x128xf32>
    %386 = arith.negf %385 : vector<8x128xf32>
    %387 = math.exp %386 : vector<8x128xf32>
    %cst_115 = arith.constant 1.000000e+00 : f32
    %388 = vector.broadcast %cst_115 : f32 to vector<8x128xf32>
    %389 = arith.addf %388, %387 : vector<8x128xf32>
    %390 = arith.divf %388, %389 : vector<8x128xf32>
    %391 = vector.extract_strided_slice %378 {offsets = [0, 256], sizes = [8, 128], strides = [1, 1]} : vector<8x512xf32> to vector<8x128xf32>
    %392 = math.tanh %391 : vector<8x128xf32>
    %393 = vector.extract_strided_slice %378 {offsets = [0, 384], sizes = [8, 128], strides = [1, 1]} : vector<8x512xf32> to vector<8x128xf32>
    %394 = arith.negf %393 : vector<8x128xf32>
    %395 = math.exp %394 : vector<8x128xf32>
    %cst_116 = arith.constant 1.000000e+00 : f32
    %396 = vector.broadcast %cst_116 : f32 to vector<8x128xf32>
    %397 = arith.addf %396, %395 : vector<8x128xf32>
    %398 = arith.divf %396, %397 : vector<8x128xf32>
    %399 = arith.mulf %390, %366 : vector<8x128xf32>
    %400 = arith.mulf %384, %392 : vector<8x128xf32>
    %401 = arith.addf %399, %400 : vector<8x128xf32>
    %402 = math.tanh %401 : vector<8x128xf32>
    %403 = arith.mulf %398, %402 : vector<8x128xf32>
    %404 = arith.truncf %403 : vector<8x128xf32> to vector<8x128xbf16>
    %405 = arith.index_cast %c2_i32_110 : i32 to index
    %c0_117 = arith.constant 0 : index
    %c0_118 = arith.constant 0 : index
    %406 = vector.load %arg15[%405, %c0_117, %c0_118] : memref<8x8x128xbf16, #tpu.memory_space<vmem>>, vector<1x8x128xbf16>
    %407 = vector.shape_cast %406 : vector<1x8x128xbf16> to vector<8x128xbf16>
    %408 = vector.shape_cast %404 : vector<8x128xbf16> to vector<1x8x128xbf16>
    tpu.vector_store %arg15[%405, %c0_117, %c0_118], %408 {strides = array<i32>} : memref<8x8x128xbf16, #tpu.memory_space<vmem>>, vector<1x8x128xbf16>,
    %c3_i32_119 = arith.constant 3 : i32
    %409 = arith.index_cast %c3_i32_119 : i32 to index
    %c0_120 = arith.constant 0 : index
    %c0_121 = arith.constant 0 : index
    %410 = vector.load %arg16[%409, %c0_120, %c0_121] : memref<8x8x512xf32, #tpu.memory_space<vmem>>, vector<1x8x512xf32>
    %411 = vector.shape_cast %410 : vector<1x8x512xf32> to vector<8x512xf32>
    %cst_122 = arith.constant dense<0.000000e+00> : vector<8x512xf32>
    %412 = tpu.matmul %404, %293, %cst_122 {dimension_numbers = #tpu.dot_dimension_numbers<[1], [0], [0], [1], [0, 0, 1, 1], [], []>} : vector<8x128xbf16>, vector<128x512xbf16>, vector<8x512xf32> -> vector<8x512xf32>
    %413 = arith.addf %411, %412 : vector<8x512xf32>
    %414 = vector.extract_strided_slice %413 {offsets = [0, 0], sizes = [8, 128], strides = [1, 1]} : vector<8x512xf32> to vector<8x128xf32>
    %415 = arith.negf %414 : vector<8x128xf32>
    %416 = math.exp %415 : vector<8x128xf32>
    %cst_123 = arith.constant 1.000000e+00 : f32
    %417 = vector.broadcast %cst_123 : f32 to vector<8x128xf32>
    %418 = arith.addf %417, %416 : vector<8x128xf32>
    %419 = arith.divf %417, %418 : vector<8x128xf32>
    %420 = vector.extract_strided_slice %413 {offsets = [0, 128], sizes = [8, 128], strides = [1, 1]} : vector<8x512xf32> to vector<8x128xf32>
    %421 = arith.negf %420 : vector<8x128xf32>
    %422 = math.exp %421 : vector<8x128xf32>
    %cst_124 = arith.constant 1.000000e+00 : f32
    %423 = vector.broadcast %cst_124 : f32 to vector<8x128xf32>
    %424 = arith.addf %423, %422 : vector<8x128xf32>
    %425 = arith.divf %423, %424 : vector<8x128xf32>
    %426 = vector.extract_strided_slice %413 {offsets = [0, 256], sizes = [8, 128], strides = [1, 1]} : vector<8x512xf32> to vector<8x128xf32>
    %427 = math.tanh %426 : vector<8x128xf32>
    %428 = vector.extract_strided_slice %413 {offsets = [0, 384], sizes = [8, 128], strides = [1, 1]} : vector<8x512xf32> to vector<8x128xf32>
    %429 = arith.negf %428 : vector<8x128xf32>
    %430 = math.exp %429 : vector<8x128xf32>
    %cst_125 = arith.constant 1.000000e+00 : f32
    %431 = vector.broadcast %cst_125 : f32 to vector<8x128xf32>
    %432 = arith.addf %431, %430 : vector<8x128xf32>
    %433 = arith.divf %431, %432 : vector<8x128xf32>
    %434 = arith.mulf %425, %401 : vector<8x128xf32>
    %435 = arith.mulf %419, %427 : vector<8x128xf32>
    %436 = arith.addf %434, %435 : vector<8x128xf32>
    %437 = math.tanh %436 : vector<8x128xf32>
    %438 = arith.mulf %433, %437 : vector<8x128xf32>
    %439 = arith.truncf %438 : vector<8x128xf32> to vector<8x128xbf16>
    %440 = arith.index_cast %c3_i32_119 : i32 to index
    %c0_126 = arith.constant 0 : index
    %c0_127 = arith.constant 0 : index
    %441 = vector.load %arg15[%440, %c0_126, %c0_127] : memref<8x8x128xbf16, #tpu.memory_space<vmem>>, vector<1x8x128xbf16>
    %442 = vector.shape_cast %441 : vector<1x8x128xbf16> to vector<8x128xbf16>
    %443 = vector.shape_cast %439 : vector<8x128xbf16> to vector<1x8x128xbf16>
    tpu.vector_store %arg15[%440, %c0_126, %c0_127], %443 {strides = array<i32>} : memref<8x8x128xbf16, #tpu.memory_space<vmem>>, vector<1x8x128xbf16>,
    %c4_i32_128 = arith.constant 4 : i32
    %444 = arith.index_cast %c4_i32_128 : i32 to index
    %c0_129 = arith.constant 0 : index
    %c0_130 = arith.constant 0 : index
    %445 = vector.load %arg16[%444, %c0_129, %c0_130] : memref<8x8x512xf32, #tpu.memory_space<vmem>>, vector<1x8x512xf32>
    %446 = vector.shape_cast %445 : vector<1x8x512xf32> to vector<8x512xf32>
    %cst_131 = arith.constant dense<0.000000e+00> : vector<8x512xf32>
    %447 = tpu.matmul %439, %293, %cst_131 {dimension_numbers = #tpu.dot_dimension_numbers<[1], [0], [0], [1], [0, 0, 1, 1], [], []>} : vector<8x128xbf16>, vector<128x512xbf16>, vector<8x512xf32> -> vector<8x512xf32>
    %448 = arith.addf %446, %447 : vector<8x512xf32>
    %449 = vector.extract_strided_slice %448 {offsets = [0, 0], sizes = [8, 128], strides = [1, 1]} : vector<8x512xf32> to vector<8x128xf32>
    %450 = arith.negf %449 : vector<8x128xf32>
    %451 = math.exp %450 : vector<8x128xf32>
    %cst_132 = arith.constant 1.000000e+00 : f32
    %452 = vector.broadcast %cst_132 : f32 to vector<8x128xf32>
    %453 = arith.addf %452, %451 : vector<8x128xf32>
    %454 = arith.divf %452, %453 : vector<8x128xf32>
    %455 = vector.extract_strided_slice %448 {offsets = [0, 128], sizes = [8, 128], strides = [1, 1]} : vector<8x512xf32> to vector<8x128xf32>
    %456 = arith.negf %455 : vector<8x128xf32>
    %457 = math.exp %456 : vector<8x128xf32>
    %cst_133 = arith.constant 1.000000e+00 : f32
    %458 = vector.broadcast %cst_133 : f32 to vector<8x128xf32>
    %459 = arith.addf %458, %457 : vector<8x128xf32>
    %460 = arith.divf %458, %459 : vector<8x128xf32>
    %461 = vector.extract_strided_slice %448 {offsets = [0, 256], sizes = [8, 128], strides = [1, 1]} : vector<8x512xf32> to vector<8x128xf32>
    %462 = math.tanh %461 : vector<8x128xf32>
    %463 = vector.extract_strided_slice %448 {offsets = [0, 384], sizes = [8, 128], strides = [1, 1]} : vector<8x512xf32> to vector<8x128xf32>
    %464 = arith.negf %463 : vector<8x128xf32>
    %465 = math.exp %464 : vector<8x128xf32>
    %cst_134 = arith.constant 1.000000e+00 : f32
    %466 = vector.broadcast %cst_134 : f32 to vector<8x128xf32>
    %467 = arith.addf %466, %465 : vector<8x128xf32>
    %468 = arith.divf %466, %467 : vector<8x128xf32>
    %469 = arith.mulf %460, %436 : vector<8x128xf32>
    %470 = arith.mulf %454, %462 : vector<8x128xf32>
    %471 = arith.addf %469, %470 : vector<8x128xf32>
    %472 = math.tanh %471 : vector<8x128xf32>
    %473 = arith.mulf %468, %472 : vector<8x128xf32>
    %474 = arith.truncf %473 : vector<8x128xf32> to vector<8x128xbf16>
    %475 = arith.index_cast %c4_i32_128 : i32 to index
    %c0_135 = arith.constant 0 : index
    %c0_136 = arith.constant 0 : index
    %476 = vector.load %arg15[%475, %c0_135, %c0_136] : memref<8x8x128xbf16, #tpu.memory_space<vmem>>, vector<1x8x128xbf16>
    %477 = vector.shape_cast %476 : vector<1x8x128xbf16> to vector<8x128xbf16>
    %478 = vector.shape_cast %474 : vector<8x128xbf16> to vector<1x8x128xbf16>
    tpu.vector_store %arg15[%475, %c0_135, %c0_136], %478 {strides = array<i32>} : memref<8x8x128xbf16, #tpu.memory_space<vmem>>, vector<1x8x128xbf16>,
    %c5_i32_137 = arith.constant 5 : i32
    %479 = arith.index_cast %c5_i32_137 : i32 to index
    %c0_138 = arith.constant 0 : index
    %c0_139 = arith.constant 0 : index
    %480 = vector.load %arg16[%479, %c0_138, %c0_139] : memref<8x8x512xf32, #tpu.memory_space<vmem>>, vector<1x8x512xf32>
    %481 = vector.shape_cast %480 : vector<1x8x512xf32> to vector<8x512xf32>
    %cst_140 = arith.constant dense<0.000000e+00> : vector<8x512xf32>
    %482 = tpu.matmul %474, %293, %cst_140 {dimension_numbers = #tpu.dot_dimension_numbers<[1], [0], [0], [1], [0, 0, 1, 1], [], []>} : vector<8x128xbf16>, vector<128x512xbf16>, vector<8x512xf32> -> vector<8x512xf32>
    %483 = arith.addf %481, %482 : vector<8x512xf32>
    %484 = vector.extract_strided_slice %483 {offsets = [0, 0], sizes = [8, 128], strides = [1, 1]} : vector<8x512xf32> to vector<8x128xf32>
    %485 = arith.negf %484 : vector<8x128xf32>
    %486 = math.exp %485 : vector<8x128xf32>
    %cst_141 = arith.constant 1.000000e+00 : f32
    %487 = vector.broadcast %cst_141 : f32 to vector<8x128xf32>
    %488 = arith.addf %487, %486 : vector<8x128xf32>
    %489 = arith.divf %487, %488 : vector<8x128xf32>
    %490 = vector.extract_strided_slice %483 {offsets = [0, 128], sizes = [8, 128], strides = [1, 1]} : vector<8x512xf32> to vector<8x128xf32>
    %491 = arith.negf %490 : vector<8x128xf32>
    %492 = math.exp %491 : vector<8x128xf32>
    %cst_142 = arith.constant 1.000000e+00 : f32
    %493 = vector.broadcast %cst_142 : f32 to vector<8x128xf32>
    %494 = arith.addf %493, %492 : vector<8x128xf32>
    %495 = arith.divf %493, %494 : vector<8x128xf32>
    %496 = vector.extract_strided_slice %483 {offsets = [0, 256], sizes = [8, 128], strides = [1, 1]} : vector<8x512xf32> to vector<8x128xf32>
    %497 = math.tanh %496 : vector<8x128xf32>
    %498 = vector.extract_strided_slice %483 {offsets = [0, 384], sizes = [8, 128], strides = [1, 1]} : vector<8x512xf32> to vector<8x128xf32>
    %499 = arith.negf %498 : vector<8x128xf32>
    %500 = math.exp %499 : vector<8x128xf32>
    %cst_143 = arith.constant 1.000000e+00 : f32
    %501 = vector.broadcast %cst_143 : f32 to vector<8x128xf32>
    %502 = arith.addf %501, %500 : vector<8x128xf32>
    %503 = arith.divf %501, %502 : vector<8x128xf32>
    %504 = arith.mulf %495, %471 : vector<8x128xf32>
    %505 = arith.mulf %489, %497 : vector<8x128xf32>
    %506 = arith.addf %504, %505 : vector<8x128xf32>
    %507 = math.tanh %506 : vector<8x128xf32>
    %508 = arith.mulf %503, %507 : vector<8x128xf32>
    %509 = arith.truncf %508 : vector<8x128xf32> to vector<8x128xbf16>
    %510 = arith.index_cast %c5_i32_137 : i32 to index
    %c0_144 = arith.constant 0 : index
    %c0_145 = arith.constant 0 : index
    %511 = vector.load %arg15[%510, %c0_144, %c0_145] : memref<8x8x128xbf16, #tpu.memory_space<vmem>>, vector<1x8x128xbf16>
    %512 = vector.shape_cast %511 : vector<1x8x128xbf16> to vector<8x128xbf16>
    %513 = vector.shape_cast %509 : vector<8x128xbf16> to vector<1x8x128xbf16>
    tpu.vector_store %arg15[%510, %c0_144, %c0_145], %513 {strides = array<i32>} : memref<8x8x128xbf16, #tpu.memory_space<vmem>>, vector<1x8x128xbf16>,
    %c6_i32_146 = arith.constant 6 : i32
    %514 = arith.index_cast %c6_i32_146 : i32 to index
    %c0_147 = arith.constant 0 : index
    %c0_148 = arith.constant 0 : index
    %515 = vector.load %arg16[%514, %c0_147, %c0_148] : memref<8x8x512xf32, #tpu.memory_space<vmem>>, vector<1x8x512xf32>
    %516 = vector.shape_cast %515 : vector<1x8x512xf32> to vector<8x512xf32>
    %cst_149 = arith.constant dense<0.000000e+00> : vector<8x512xf32>
    %517 = tpu.matmul %509, %293, %cst_149 {dimension_numbers = #tpu.dot_dimension_numbers<[1], [0], [0], [1], [0, 0, 1, 1], [], []>} : vector<8x128xbf16>, vector<128x512xbf16>, vector<8x512xf32> -> vector<8x512xf32>
    %518 = arith.addf %516, %517 : vector<8x512xf32>
    %519 = vector.extract_strided_slice %518 {offsets = [0, 0], sizes = [8, 128], strides = [1, 1]} : vector<8x512xf32> to vector<8x128xf32>
    %520 = arith.negf %519 : vector<8x128xf32>
    %521 = math.exp %520 : vector<8x128xf32>
    %cst_150 = arith.constant 1.000000e+00 : f32
    %522 = vector.broadcast %cst_150 : f32 to vector<8x128xf32>
    %523 = arith.addf %522, %521 : vector<8x128xf32>
    %524 = arith.divf %522, %523 : vector<8x128xf32>
    %525 = vector.extract_strided_slice %518 {offsets = [0, 128], sizes = [8, 128], strides = [1, 1]} : vector<8x512xf32> to vector<8x128xf32>
    %526 = arith.negf %525 : vector<8x128xf32>
    %527 = math.exp %526 : vector<8x128xf32>
    %cst_151 = arith.constant 1.000000e+00 : f32
    %528 = vector.broadcast %cst_151 : f32 to vector<8x128xf32>
    %529 = arith.addf %528, %527 : vector<8x128xf32>
    %530 = arith.divf %528, %529 : vector<8x128xf32>
    %531 = vector.extract_strided_slice %518 {offsets = [0, 256], sizes = [8, 128], strides = [1, 1]} : vector<8x512xf32> to vector<8x128xf32>
    %532 = math.tanh %531 : vector<8x128xf32>
    %533 = vector.extract_strided_slice %518 {offsets = [0, 384], sizes = [8, 128], strides = [1, 1]} : vector<8x512xf32> to vector<8x128xf32>
    %534 = arith.negf %533 : vector<8x128xf32>
    %535 = math.exp %534 : vector<8x128xf32>
    %cst_152 = arith.constant 1.000000e+00 : f32
    %536 = vector.broadcast %cst_152 : f32 to vector<8x128xf32>
    %537 = arith.addf %536, %535 : vector<8x128xf32>
    %538 = arith.divf %536, %537 : vector<8x128xf32>
    %539 = arith.mulf %530, %506 : vector<8x128xf32>
    %540 = arith.mulf %524, %532 : vector<8x128xf32>
    %541 = arith.addf %539, %540 : vector<8x128xf32>
    %542 = math.tanh %541 : vector<8x128xf32>
    %543 = arith.mulf %538, %542 : vector<8x128xf32>
    %544 = arith.truncf %543 : vector<8x128xf32> to vector<8x128xbf16>
    %545 = arith.index_cast %c6_i32_146 : i32 to index
    %c0_153 = arith.constant 0 : index
    %c0_154 = arith.constant 0 : index
    %546 = vector.load %arg15[%545, %c0_153, %c0_154] : memref<8x8x128xbf16, #tpu.memory_space<vmem>>, vector<1x8x128xbf16>
    %547 = vector.shape_cast %546 : vector<1x8x128xbf16> to vector<8x128xbf16>
    %548 = vector.shape_cast %544 : vector<8x128xbf16> to vector<1x8x128xbf16>
    tpu.vector_store %arg15[%545, %c0_153, %c0_154], %548 {strides = array<i32>} : memref<8x8x128xbf16, #tpu.memory_space<vmem>>, vector<1x8x128xbf16>,
    %c7_i32_155 = arith.constant 7 : i32
    %549 = arith.index_cast %c7_i32_155 : i32 to index
    %c0_156 = arith.constant 0 : index
    %c0_157 = arith.constant 0 : index
    %550 = vector.load %arg16[%549, %c0_156, %c0_157] : memref<8x8x512xf32, #tpu.memory_space<vmem>>, vector<1x8x512xf32>
    %551 = vector.shape_cast %550 : vector<1x8x512xf32> to vector<8x512xf32>
    %cst_158 = arith.constant dense<0.000000e+00> : vector<8x512xf32>
    %552 = tpu.matmul %544, %293, %cst_158 {dimension_numbers = #tpu.dot_dimension_numbers<[1], [0], [0], [1], [0, 0, 1, 1], [], []>} : vector<8x128xbf16>, vector<128x512xbf16>, vector<8x512xf32> -> vector<8x512xf32>
    %553 = arith.addf %551, %552 : vector<8x512xf32>
    %554 = vector.extract_strided_slice %553 {offsets = [0, 0], sizes = [8, 128], strides = [1, 1]} : vector<8x512xf32> to vector<8x128xf32>
    %555 = arith.negf %554 : vector<8x128xf32>
    %556 = math.exp %555 : vector<8x128xf32>
    %cst_159 = arith.constant 1.000000e+00 : f32
    %557 = vector.broadcast %cst_159 : f32 to vector<8x128xf32>
    %558 = arith.addf %557, %556 : vector<8x128xf32>
    %559 = arith.divf %557, %558 : vector<8x128xf32>
    %560 = vector.extract_strided_slice %553 {offsets = [0, 128], sizes = [8, 128], strides = [1, 1]} : vector<8x512xf32> to vector<8x128xf32>
    %561 = arith.negf %560 : vector<8x128xf32>
    %562 = math.exp %561 : vector<8x128xf32>
    %cst_160 = arith.constant 1.000000e+00 : f32
    %563 = vector.broadcast %cst_160 : f32 to vector<8x128xf32>
    %564 = arith.addf %563, %562 : vector<8x128xf32>
    %565 = arith.divf %563, %564 : vector<8x128xf32>
    %566 = vector.extract_strided_slice %553 {offsets = [0, 256], sizes = [8, 128], strides = [1, 1]} : vector<8x512xf32> to vector<8x128xf32>
    %567 = math.tanh %566 : vector<8x128xf32>
    %568 = vector.extract_strided_slice %553 {offsets = [0, 384], sizes = [8, 128], strides = [1, 1]} : vector<8x512xf32> to vector<8x128xf32>
    %569 = arith.negf %568 : vector<8x128xf32>
    %570 = math.exp %569 : vector<8x128xf32>
    %cst_161 = arith.constant 1.000000e+00 : f32
    %571 = vector.broadcast %cst_161 : f32 to vector<8x128xf32>
    %572 = arith.addf %571, %570 : vector<8x128xf32>
    %573 = arith.divf %571, %572 : vector<8x128xf32>
    %574 = arith.mulf %565, %541 : vector<8x128xf32>
    %575 = arith.mulf %559, %567 : vector<8x128xf32>
    %576 = arith.addf %574, %575 : vector<8x128xf32>
    %577 = math.tanh %576 : vector<8x128xf32>
    %578 = arith.mulf %573, %577 : vector<8x128xf32>
    %579 = arith.truncf %578 : vector<8x128xf32> to vector<8x128xbf16>
    %580 = arith.index_cast %c7_i32_155 : i32 to index
    %c0_162 = arith.constant 0 : index
    %c0_163 = arith.constant 0 : index
    %581 = vector.load %arg15[%580, %c0_162, %c0_163] : memref<8x8x128xbf16, #tpu.memory_space<vmem>>, vector<1x8x128xbf16>
    %582 = vector.shape_cast %581 : vector<1x8x128xbf16> to vector<8x128xbf16>
    %583 = vector.shape_cast %579 : vector<8x128xbf16> to vector<1x8x128xbf16>
    tpu.vector_store %arg15[%580, %c0_162, %c0_163], %583 {strides = array<i32>} : memref<8x8x128xbf16, #tpu.memory_space<vmem>>, vector<1x8x128xbf16>,
    %c8_i32_164 = arith.constant 8 : i32
    %c0_165 = arith.constant 0 : index
    %c0_166 = arith.constant 0 : index
    %c0_167 = arith.constant 0 : index
    %584 = vector.load %arg15[%c0_165, %c0_166, %c0_167] : memref<8x8x128xbf16, #tpu.memory_space<vmem>>, vector<8x8x128xbf16>
    %585 = vector.shape_cast %584 : vector<8x8x128xbf16> to vector<64x128xbf16>
    %c0_168 = arith.constant 0 : index
    %c0_169 = arith.constant 0 : index
    %586 = vector.load %arg8[%c0_168, %c0_169] : memref<128x128xbf16, #tpu.memory_space<vmem>>, vector<128x128xbf16>
    %cst_170 = arith.constant dense<0.000000e+00> : vector<64x128xf32>
    %587 = tpu.matmul %585, %586, %cst_170 {dimension_numbers = #tpu.dot_dimension_numbers<[1], [0], [0], [1], [0, 0, 1, 1], [], []>} : vector<64x128xbf16>, vector<128x128xbf16>, vector<64x128xf32> -> vector<64x128xf32>
    %c0_171 = arith.constant 0 : index
    %c0_172 = arith.constant 0 : index
    %588 = vector.load %arg9[%c0_171, %c0_172] : memref<1x128xf32, #tpu.memory_space<vmem>>, vector<1x128xf32>
    %589 = vector.broadcast %588 : vector<1x128xf32> to vector<64x128xf32>
    %590 = arith.addf %587, %589 : vector<64x128xf32>
    %cst_173 = arith.constant 0.000000e+00 : f32
    %591 = vector.broadcast %cst_173 : f32 to vector<64x128xf32>
    %592 = arith.maximumf %590, %591 : vector<64x128xf32>
    %593 = arith.truncf %592 : vector<64x128xf32> to vector<64x128xbf16>
    %c0_174 = arith.constant 0 : index
    %c0_175 = arith.constant 0 : index
    %594 = vector.load %arg10[%c0_174, %c0_175] : memref<128x128xbf16, #tpu.memory_space<vmem>>, vector<128x128xbf16>
    %cst_176 = arith.constant dense<0.000000e+00> : vector<64x128xf32>
    %595 = tpu.matmul %593, %594, %cst_176 {dimension_numbers = #tpu.dot_dimension_numbers<[1], [0], [0], [1], [0, 0, 1, 1], [], []>} : vector<64x128xbf16>, vector<128x128xbf16>, vector<64x128xf32> -> vector<64x128xf32>
    %c0_177 = arith.constant 0 : index
    %c0_178 = arith.constant 0 : index
    %596 = vector.load %arg11[%c0_177, %c0_178] : memref<1x128xf32, #tpu.memory_space<vmem>>, vector<1x128xf32>
    %597 = vector.broadcast %596 : vector<1x128xf32> to vector<64x128xf32>
    %598 = arith.addf %595, %597 : vector<64x128xf32>
    %cst_179 = arith.constant 0.000000e+00 : f32
    %599 = vector.broadcast %cst_179 : f32 to vector<64x128xf32>
    %600 = arith.maximumf %598, %599 : vector<64x128xf32>
    %601 = arith.truncf %600 : vector<64x128xf32> to vector<64x128xbf16>
    %c0_180 = arith.constant 0 : index
    %c0_181 = arith.constant 0 : index
    %602 = vector.load %arg12[%c0_180, %c0_181] : memref<128x128xbf16, #tpu.memory_space<vmem>>, vector<128x128xbf16>
    %cst_182 = arith.constant dense<0.000000e+00> : vector<64x128xf32>
    %603 = tpu.matmul %601, %602, %cst_182 {dimension_numbers = #tpu.dot_dimension_numbers<[1], [0], [0], [1], [0, 0, 1, 1], [], []>} : vector<64x128xbf16>, vector<128x128xbf16>, vector<64x128xf32> -> vector<64x128xf32>
    %c0_183 = arith.constant 0 : index
    %c0_184 = arith.constant 0 : index
    %604 = vector.load %arg13[%c0_183, %c0_184] : memref<1x128xf32, #tpu.memory_space<vmem>>, vector<1x128xf32>
    %605 = vector.broadcast %604 : vector<1x128xf32> to vector<64x128xf32>
    %606 = arith.addf %603, %605 : vector<64x128xf32>
    %cst_185 = arith.constant 0.000000e+00 : f32
    %607 = vector.broadcast %cst_185 : f32 to vector<64x128xf32>
    %608 = arith.maximumf %606, %607 : vector<64x128xf32>
    %609 = vector.shape_cast %608 : vector<64x128xf32> to vector<8x8x128xf32>
    %c0_186 = arith.constant 0 : index
    %c0_187 = arith.constant 0 : index
    %c0_188 = arith.constant 0 : index
    %610 = vector.load %arg14[%c0_186, %c0_187, %c0_188] : memref<8x8x128xf32, #tpu.memory_space<vmem>>, vector<8x8x128xf32>
    tpu.vector_store %arg14[%c0_186, %c0_187, %c0_188], %609 {strides = array<i32>} : memref<8x8x128xf32, #tpu.memory_space<vmem>>, vector<8x8x128xf32>,
    return
  }
  func.func @transform_0(%arg0: i32) -> (i32, i32, i32) {
    %c0_i32 = arith.constant 0 : i32
    %c0_i32_0 = arith.constant 0 : i32
    %c0_i32_1 = arith.constant 0 : i32
    return %c0_i32, %arg0, %c0_i32_0 : i32, i32, i32
  }
  func.func @transform_1(%arg0: i32) -> (i32, i32) {
    %c0_i32 = arith.constant 0 : i32
    %c0_i32_0 = arith.constant 0 : i32
    %c0_i32_1 = arith.constant 0 : i32
    return %c0_i32, %c0_i32_0 : i32, i32
  }
  func.func @transform_2(%arg0: i32) -> (i32, i32) {
    %c0_i32 = arith.constant 0 : i32
    %c0_i32_0 = arith.constant 0 : i32
    %c0_i32_1 = arith.constant 0 : i32
    return %c0_i32, %c0_i32_0 : i32, i32
  }
  func.func @transform_3(%arg0: i32) -> (i32, i32) {
    %c0_i32 = arith.constant 0 : i32
    %c0_i32_0 = arith.constant 0 : i32
    %c0_i32_1 = arith.constant 0 : i32
    return %c0_i32, %c0_i32_0 : i32, i32
  }
  func.func @transform_4(%arg0: i32) -> (i32, i32) {
    %c0_i32 = arith.constant 0 : i32
    %c0_i32_0 = arith.constant 0 : i32
    %c0_i32_1 = arith.constant 0 : i32
    return %c0_i32, %c0_i32_0 : i32, i32
  }
  func.func @transform_5(%arg0: i32) -> (i32, i32) {
    %c0_i32 = arith.constant 0 : i32
    %c0_i32_0 = arith.constant 0 : i32
    %c0_i32_1 = arith.constant 0 : i32
    return %c0_i32, %c0_i32_0 : i32, i32
  }
  func.func @transform_6(%arg0: i32) -> (i32, i32) {
    %c0_i32 = arith.constant 0 : i32
    %c0_i32_0 = arith.constant 0 : i32
    %c0_i32_1 = arith.constant 0 : i32
    return %c0_i32, %c0_i32_0 : i32, i32
  }
  func.func @transform_7(%arg0: i32) -> (i32, i32) {
    %c0_i32 = arith.constant 0 : i32
    %c0_i32_0 = arith.constant 0 : i32
    %c0_i32_1 = arith.constant 0 : i32
    return %c0_i32, %c0_i32_0 : i32, i32
  }
  func.func @transform_8(%arg0: i32) -> (i32, i32) {
    %c0_i32 = arith.constant 0 : i32
    %c0_i32_0 = arith.constant 0 : i32
    %c0_i32_1 = arith.constant 0 : i32
    return %c0_i32, %c0_i32_0 : i32, i32
  }
  func.func @transform_9(%arg0: i32) -> (i32, i32) {
    %c0_i32 = arith.constant 0 : i32
    %c0_i32_0 = arith.constant 0 : i32
    %c0_i32_1 = arith.constant 0 : i32
    return %c0_i32, %c0_i32_0 : i32, i32
  }
  func.func @transform_10(%arg0: i32) -> (i32, i32) {
    %c0_i32 = arith.constant 0 : i32
    %c0_i32_0 = arith.constant 0 : i32
    %c0_i32_1 = arith.constant 0 : i32
    return %c0_i32, %c0_i32_0 : i32, i32
  }
  func.func @transform_11(%arg0: i32) -> (i32, i32) {
    %c0_i32 = arith.constant 0 : i32
    %c0_i32_0 = arith.constant 0 : i32
    %c0_i32_1 = arith.constant 0 : i32
    return %c0_i32, %c0_i32_0 : i32, i32
  }
  func.func @transform_12(%arg0: i32) -> (i32, i32) {
    %c0_i32 = arith.constant 0 : i32
    %c0_i32_0 = arith.constant 0 : i32
    %c0_i32_1 = arith.constant 0 : i32
    return %c0_i32, %c0_i32_0 : i32, i32
  }
  func.func @transform_13(%arg0: i32) -> (i32, i32, i32) {
    %c0_i32 = arith.constant 0 : i32
    %c0_i32_0 = arith.constant 0 : i32
    %c0_i32_1 = arith.constant 0 : i32
    return %c0_i32, %arg0, %c0_i32_0 : i32, i32, i32
  }
}

</mosaic_0001>

<llo_original>
// kernel: tpu_custom_call.1
$region0: #{tpu_custom_call.1}
  #allocation0 [shape = 'u32[]', space=smem, size = 0x4, offset = 0x4, fixed_abs, tag = 'smem constant byte address 0x4 - core index']
  #allocation1 [shape = 'u32[72,128]{1,0:T(1,128)}', space=vmem, size = 0x9000, scoped, tag = 'internal scratch']
  #allocation2 [shape = 'bf16[8,8,128]{2,1,0:T(8,128)(2,1)}', space=vmem, size = 0x4000, scoped, tag = 'scratch operand']
  #allocation3 [shape = 'f32[8,8,512]{2,1,0:T(8,128)}', space=vmem, size = 0x20000, scoped, tag = 'scratch operand']
  %s0 = inlined_call_operand.hbm [shape: bf16[8,8,16], index: 0, kind: input, shape index: {}]
  %s1 = inlined_call_operand.hbm [shape: bf16[16,512], index: 1, kind: input, shape index: {}]
  %s2 = inlined_call_operand.hbm [shape: bf16[128,512], index: 2, kind: input, shape index: {}]
  %s3 = inlined_call_operand.hbm [shape: f32[1,512], index: 3, kind: input, shape index: {}]
  %s4 = inlined_call_operand.hbm [shape: bf16[128,512], index: 4, kind: input, shape index: {}]
  %s5 = inlined_call_operand.hbm [shape: bf16[128,512], index: 5, kind: input, shape index: {}]
  %s6 = inlined_call_operand.vmem [shape: f32[1,512], index: 6, kind: input, shape index: {}]
  %s7 = inlined_call_operand.hbm [shape: bf16[128,128], index: 7, kind: input, shape index: {}]
  %s8 = inlined_call_operand.vmem [shape: f32[1,128], index: 8, kind: input, shape index: {}]
  %s9 = inlined_call_operand.hbm [shape: bf16[128,128], index: 9, kind: input, shape index: {}]
  %s10 = inlined_call_operand.vmem [shape: f32[1,128], index: 10, kind: input, shape index: {}]
  %s11 = inlined_call_operand.hbm [shape: bf16[128,128], index: 11, kind: input, shape index: {}]
  %s12 = inlined_call_operand.vmem [shape: f32[1,128], index: 12, kind: input, shape index: {}]
  %s13 = inlined_call_operand.hbm [shape: f32[8,8,128], index: 13, kind: output, shape index: {}]
  %s14 = sld [smem:[#allocation0]]
  $region98: #{tpu_custom_call.1} parent=0
    _
  %s16 = ssub.s32 1, %s14
  %s17 = scalar_select 0, %s16, %s14
  $region1: #{tpu_custom_call.1} parent=0
    #allocation4 [shape = 'u8[16384]{0}', space=vmem, size = 0x4000, scoped, tag = 'input window, operand 0, single buffered']
    #allocation5 [shape = 's32[1]{0}', space=sflag, size = 0x4, scoped, tag = 'scoped memory for tpu_custom_call.1']
    #allocation6 [shape = 's32[1]{0}', space=sflag, size = 0x4, scoped, tag = 'scoped memory for tpu_custom_call.1']
    #allocation7 [shape = 'u8[16384]{0}', space=vmem, size = 0x4000, scoped, tag = 'input window, operand 1, single buffered']
    #allocation8 [shape = 's32[1]{0}', space=sflag, size = 0x4, scoped, tag = 'scoped memory for tpu_custom_call.1']
    #allocation9 [shape = 'u8[131072]{0}', space=vmem, size = 0x20000, scoped, tag = 'input window, operand 2, single buffered']
    #allocation10 [shape = 'u8[2048]{0}', space=vmem, size = 0x800, scoped, tag = 'input window, operand 3, single buffered']
    #allocation11 [shape = 's32[1]{0}', space=sflag, size = 0x4, scoped, tag = 'scoped memory for tpu_custom_call.1']
    #allocation12 [shape = 'u8[131072]{0}', space=vmem, size = 0x20000, scoped, tag = 'input window, operand 4, single buffered']
    #allocation13 [shape = 'u8[131072]{0}', space=vmem, size = 0x20000, scoped, tag = 'input window, operand 5, single buffered']
    #allocation14 [shape = 's32[1]{0}', space=sflag, size = 0x4, scoped, tag = 'scoped memory for tpu_custom_call.1']
    #allocation15 [shape = 'u8[32768]{0}', space=vmem, size = 0x8000, scoped, tag = 'input window, operand 7, single buffered']
    #allocation16 [shape = 'u8[32768]{0}', space=vmem, size = 0x8000, scoped, tag = 'input window, operand 9, single buffered']
    #allocation17 [shape = 's32[1]{0}', space=sflag, size = 0x4, scoped, tag = 'scoped memory for tpu_custom_call.1']
    #allocation18 [shape = 'u8[32768]{0}', space=vmem, size = 0x8000, scoped, tag = 'input window, operand 11, single buffered']
    #allocation19 [shape = 'u8[32768]{0}', space=vmem, size = 0x8000, scoped, tag = 'output window, operand 0, single buffered']
    %18 = vsyncpa [#allocation5], 0
    %19 = vsyncpa [#allocation8], 0
    %20 = vsyncpa [#allocation11], 0
    %21 = vsyncpa [#allocation14], 0
    %22 = vsyncpa [#allocation17], 0
    %23 = vsyncpa [#allocation6], 0
    // Predicated region
    $region2: #{tpu_custom_call.1} parent=1 // pred_check
      _
    $region3: #{tpu_custom_call.1} parent=1 // pred_check_branch
      %25 = sbr.rel (0) target = $region5
    $region4: #{tpu_custom_call.1} parent=1 // pred_region
      %27 = vsyncadd [#allocation5], 0
      %s28 = sshll.u32 %s0, 4
      %s29 = int_to_ptr.hbm [resolvable:$true] %s28
      %s30 = sshll.u32 [#allocation4], 4
      %s31 = int_to_ptr.vmem [resolvable:$true] %s30
      %36 = dma.hbm_to_vmem [thread:$0]  %s29, 512, %s31, [#allocation5], 64, 64, 4
    $region5: #{tpu_custom_call.1} parent=1 // pred_fallthru
      _
    // Predicated region
    $region6: #{tpu_custom_call.1} parent=1 // pred_check
      _
    $region7: #{tpu_custom_call.1} parent=1 // pred_check_branch
      %38 = sbr.rel (0) target = $region9
    $region8: #{tpu_custom_call.1} parent=1 // pred_region
      %40 = vsyncadd [#allocation8], 0
      %s41 = sshll.u32 %s1, 4
      %s42 = int_to_ptr.hbm [resolvable:$true] %s41
      %s43 = sshll.u32 [#allocation7], 4
      %s44 = int_to_ptr.vmem [resolvable:$true] %s43
      %49 = dma.hbm_to_vmem [thread:$0]  %s42, 512, %s44, [#allocation8], 256, 256, 16
    $region9: #{tpu_custom_call.1} parent=1 // pred_fallthru
      _
    // Predicated region
    $region10: #{tpu_custom_call.1} parent=1 // pred_check
      _
    $region11: #{tpu_custom_call.1} parent=1 // pred_check_branch
      %51 = sbr.rel (0) target = $region13
    $region12: #{tpu_custom_call.1} parent=1 // pred_region
      %53 = vsyncadd [#allocation8], 0
      %s54 = sshll.u32 %s2, 4
      %s55 = int_to_ptr.hbm [resolvable:$true] %s54
      %s56 = sshll.u32 [#allocation9], 4
      %s57 = int_to_ptr.vmem [resolvable:$true] %s56
      %62 = dma.hbm_to_vmem [thread:$0]  %s55, 4096, %s57, [#allocation8], 256, 256, 16
    $region13: #{tpu_custom_call.1} parent=1 // pred_fallthru
      _
    // Predicated region
    $region14: #{tpu_custom_call.1} parent=1 // pred_check
      _
    $region15: #{tpu_custom_call.1} parent=1 // pred_check_branch
      %64 = sbr.rel (0) target = $region17
    $region16: #{tpu_custom_call.1} parent=1 // pred_region
      %66 = vsyncadd [#allocation11], 0
      %s68 = sshll.u32 %s3, 4
      %s69 = int_to_ptr.hbm [resolvable:$true] %s68
      %s70 = sshll.u32 [#allocation10], 4
      %s71 = int_to_ptr.vmem [resolvable:$true] %s70
      %73 = dma.hbm_to_vmem [thread:$0]  %s69, 64, %s71, [#allocation11]
    $region17: #{tpu_custom_call.1} parent=1 // pred_fallthru
      _
    // Predicated region
    $region18: #{tpu_custom_call.1} parent=1 // pred_check
      _
    $region19: #{tpu_custom_call.1} parent=1 // pred_check_branch
      %75 = sbr.rel (0) target = $region21
    $region20: #{tpu_custom_call.1} parent=1 // pred_region
      %77 = vsyncadd [#allocation11], 0
      %s78 = sshll.u32 %s4, 4
      %s79 = int_to_ptr.hbm [resolvable:$true] %s78
      %s80 = sshll.u32 [#allocation12], 4
      %s81 = int_to_ptr.vmem [resolvable:$true] %s80
      %86 = dma.hbm_to_vmem [thread:$0]  %s79, 4096, %s81, [#allocation11], 256, 256, 16
    $region21: #{tpu_custom_call.1} parent=1 // pred_fallthru
      _
    // Predicated region
    $region22: #{tpu_custom_call.1} parent=1 // pred_check
      _
    $region23: #{tpu_custom_call.1} parent=1 // pred_check_branch
      %88 = sbr.rel (0) target = $region25
    $region24: #{tpu_custom_call.1} parent=1 // pred_region
      %90 = vsyncadd [#allocation14], 0
      %s91 = sshll.u32 %s5, 4
      %s92 = int_to_ptr.hbm [resolvable:$true] %s91
      %s93 = sshll.u32 [#allocation13], 4
      %s94 = int_to_ptr.vmem [resolvable:$true] %s93
      %99 = dma.hbm_to_vmem [thread:$0]  %s92, 4096, %s94, [#allocation14], 256, 256, 16
    $region25: #{tpu_custom_call.1} parent=1 // pred_fallthru
      _
    // Predicated region
    $region26: #{tpu_custom_call.1} parent=1 // pred_check
      _
    $region27: #{tpu_custom_call.1} parent=1 // pred_check_branch
      %101 = sbr.rel (0) target = $region29
    $region28: #{tpu_custom_call.1} parent=1 // pred_region
      _
    $region29: #{tpu_custom_call.1} parent=1 // pred_fallthru
      _
    // Predicated region
    $region30: #{tpu_custom_call.1} parent=1 // pred_check
      _
    $region31: #{tpu_custom_call.1} parent=1 // pred_check_branch
      %103 = sbr.rel (0) target = $region33
    $region32: #{tpu_custom_call.1} parent=1 // pred_region
      %105 = vsyncadd [#allocation14], 0
      %s106 = sshll.u32 %s7, 4
      %s107 = int_to_ptr.hbm [resolvable:$true] %s106
      %s108 = sshll.u32 [#allocation15], 4
      %s109 = int_to_ptr.vmem [resolvable:$true] %s108
      %114 = dma.hbm_to_vmem [thread:$0]  %s107, 1024, %s109, [#allocation14], 64, 64, 4
    $region33: #{tpu_custom_call.1} parent=1 // pred_fallthru
      _
    // Predicated region
    $region34: #{tpu_custom_call.1} parent=1 // pred_check
      _
    $region35: #{tpu_custom_call.1} parent=1 // pred_check_branch
      %116 = sbr.rel (0) target = $region37
    $region36: #{tpu_custom_call.1} parent=1 // pred_region
      _
    $region37: #{tpu_custom_call.1} parent=1 // pred_fallthru
      _
    // Predicated region
    $region38: #{tpu_custom_call.1} parent=1 // pred_check
      _
    $region39: #{tpu_custom_call.1} parent=1 // pred_check_branch
      %118 = sbr.rel (0) target = $region41
    $region40: #{tpu_custom_call.1} parent=1 // pred_region
      %120 = vsyncadd [#allocation17], 0
      %s121 = sshll.u32 %s9, 4
      %s122 = int_to_ptr.hbm [resolvable:$true] %s121
      %s123 = sshll.u32 [#allocation16], 4
      %s124 = int_to_ptr.vmem [resolvable:$true] %s123
      %129 = dma.hbm_to_vmem [thread:$0]  %s122, 1024, %s124, [#allocation17], 64, 64, 4
    $region41: #{tpu_custom_call.1} parent=1 // pred_fallthru
      _
    // Predicated region
    $region42: #{tpu_custom_call.1} parent=1 // pred_check
      _
    $region43: #{tpu_custom_call.1} parent=1 // pred_check_branch
      %131 = sbr.rel (0) target = $region45
    $region44: #{tpu_custom_call.1} parent=1 // pred_region
      _
    $region45: #{tpu_custom_call.1} parent=1 // pred_fallthru
      _
    // Predicated region
    $region46: #{tpu_custom_call.1} parent=1 // pred_check
      _
    $region47: #{tpu_custom_call.1} parent=1 // pred_check_branch
      %133 = sbr.rel (0) target = $region49
    $region48: #{tpu_custom_call.1} parent=1 // pred_region
      %135 = vsyncadd [#allocation17], 0
      %s136 = sshll.u32 %s11, 4
      %s137 = int_to_ptr.hbm [resolvable:$true] %s136
      %s138 = sshll.u32 [#allocation18], 4
      %s139 = int_to_ptr.vmem [resolvable:$true] %s138
      %144 = dma.hbm_to_vmem [thread:$0]  %s137, 1024, %s139, [#allocation17], 64, 64, 4
    $region49: #{tpu_custom_call.1} parent=1 // pred_fallthru
      _
    // Predicated region
    $region50: #{tpu_custom_call.1} parent=1 // pred_check
      _
    $region51: #{tpu_custom_call.1} parent=1 // pred_check_branch
      %146 = sbr.rel (0) target = $region53
    $region52: #{tpu_custom_call.1} parent=1 // pred_region
      _
    $region53: #{tpu_custom_call.1} parent=1 // pred_fallthru
      _
    // Predicated region
    $region54: #{tpu_custom_call.1} parent=1 // pred_check
      _
    $region55: #{tpu_custom_call.1} parent=1 // pred_check_branch
      %148 = sbr.rel (0) target = $region57
    $region56: #{tpu_custom_call.1} parent=1 // pred_region
      %150 = dma.done [#allocation5], 512
    $region57: #{tpu_custom_call.1} parent=1 // pred_fallthru
      _
    // Predicated region
    $region58: #{tpu_custom_call.1} parent=1 // pred_check
      _
    $region59: #{tpu_custom_call.1} parent=1 // pred_check_branch
      %152 = sbr.rel (0) target = $region61
    $region60: #{tpu_custom_call.1} parent=1 // pred_region
      %154 = dma.done [#allocation8], 512
    $region61: #{tpu_custom_call.1} parent=1 // pred_fallthru
      _
    // Predicated region
    $region62: #{tpu_custom_call.1} parent=1 // pred_check
      _
    $region63: #{tpu_custom_call.1} parent=1 // pred_check_branch
      %156 = sbr.rel (0) target = $region65
    $region64: #{tpu_custom_call.1} parent=1 // pred_region
      %158 = dma.done [#allocation8], 4096
    $region65: #{tpu_custom_call.1} parent=1 // pred_fallthru
      _
    // Predicated region
    $region66: #{tpu_custom_call.1} parent=1 // pred_check
      _
    $region67: #{tpu_custom_call.1} parent=1 // pred_check_branch
      %160 = sbr.rel (0) target = $region69
    $region68: #{tpu_custom_call.1} parent=1 // pred_region
      %162 = dma.done [#allocation11], 64
    $region69: #{tpu_custom_call.1} parent=1 // pred_fallthru
      _
    // Predicated region
    $region70: #{tpu_custom_call.1} parent=1 // pred_check
      _
    $region71: #{tpu_custom_call.1} parent=1 // pred_check_branch
      %164 = sbr.rel (0) target = $region73
    $region72: #{tpu_custom_call.1} parent=1 // pred_region
      %166 = dma.done [#allocation11], 4096
    $region73: #{tpu_custom_call.1} parent=1 // pred_fallthru
      _
    // Predicated region
    $region74: #{tpu_custom_call.1} parent=1 // pred_check
      _
    $region75: #{tpu_custom_call.1} parent=1 // pred_check_branch
      %168 = sbr.rel (0) target = $region77
    $region76: #{tpu_custom_call.1} parent=1 // pred_region
      %170 = dma.done [#allocation14], 4096
    $region77: #{tpu_custom_call.1} parent=1 // pred_fallthru
      _
    // Predicated region
    $region78: #{tpu_custom_call.1} parent=1 // pred_check
      _
    $region79: #{tpu_custom_call.1} parent=1 // pred_check_branch
      %172 = sbr.rel (0) target = $region81
    $region80: #{tpu_custom_call.1} parent=1 // pred_region
      %174 = dma.done [#allocation14], 1024
    $region81: #{tpu_custom_call.1} parent=1 // pred_fallthru
      _
    // Predicated region
    $region82: #{tpu_custom_call.1} parent=1 // pred_check
      _
    $region83: #{tpu_custom_call.1} parent=1 // pred_check_branch
      %176 = sbr.rel (0) target = $region85
    $region84: #{tpu_custom_call.1} parent=1 // pred_region
      %178 = dma.done [#allocation17], 1024
    $region85: #{tpu_custom_call.1} parent=1 // pred_fallthru
      _
    // Predicated region
    $region86: #{tpu_custom_call.1} parent=1 // pred_check
      _
    $region87: #{tpu_custom_call.1} parent=1 // pred_check_branch
      %180 = sbr.rel (0) target = $region89
    $region88: #{tpu_custom_call.1} parent=1 // pred_region
      %182 = dma.done [#allocation17], 1024
    $region89: #{tpu_custom_call.1} parent=1 // pred_fallthru
      _
    %v184 = vld [vmem:[#allocation7] sm:$0xff]
    %v185 = vld [vmem:[#allocation7 + $0x8] sm:$0xff]
    %v186 = vld [vmem:[#allocation7 + $0x10] sm:$0xff]
    %v187 = vld [vmem:[#allocation7 + $0x18] sm:$0xff]
    %v188 = vld [vmem:[#allocation9] sm:$0xff]
    %v189 = vld [vmem:[#allocation9 + $0x8] sm:$0xff]
    %v190 = vld [vmem:[#allocation9 + $0x10] sm:$0xff]
    %v191 = vld [vmem:[#allocation9 + $0x18] sm:$0xff]
    %v192 = vld [vmem:[#allocation9 + $0x20] sm:$0xff]
    %v193 = vld [vmem:[#allocation9 + $0x28] sm:$0xff]
    %v194 = vld [vmem:[#allocation9 + $0x30] sm:$0xff]
    %v195 = vld [vmem:[#allocation9 + $0x38] sm:$0xff]
    %v196 = vld [vmem:[#allocation9 + $0x40] sm:$0xff]
    %v197 = vld [vmem:[#allocation9 + $0x48] sm:$0xff]
    %v198 = vld [vmem:[#allocation9 + $0x50] sm:$0xff]
    %v199 = vld [vmem:[#allocation9 + $0x58] sm:$0xff]
    %v200 = vld [vmem:[#allocation9 + $0x60] sm:$0xff]
    %v201 = vld [vmem:[#allocation9 + $0x68] sm:$0xff]
    %v202 = vld [vmem:[#allocation9 + $0x70] sm:$0xff]
    %v203 = vld [vmem:[#allocation9 + $0x78] sm:$0xff]
    %v204 = vld [vmem:[#allocation9 + $0x80] sm:$0xff]
    %v205 = vld [vmem:[#allocation9 + $0x88] sm:$0xff]
    %v206 = vld [vmem:[#allocation9 + $0x90] sm:$0xff]
    %v207 = vld [vmem:[#allocation9 + $0x98] sm:$0xff]
    %v208 = vld [vmem:[#allocation9 + $0xa0] sm:$0xff]
    %v209 = vld [vmem:[#allocation9 + $0xa8] sm:$0xff]
    %v210 = vld [vmem:[#allocation9 + $0xb0] sm:$0xff]
    %v211 = vld [vmem:[#allocation9 + $0xb8] sm:$0xff]
    %v212 = vld [vmem:[#allocation9 + $0xc0] sm:$0xff]
    %v213 = vld [vmem:[#allocation9 + $0xc8] sm:$0xff]
    %v214 = vld [vmem:[#allocation9 + $0xd0] sm:$0xff]
    %v215 = vld [vmem:[#allocation9 + $0xd8] sm:$0xff]
    %v216 = vld [vmem:[#allocation9 + $0xe0] sm:$0xff]
    %v217 = vld [vmem:[#allocation9 + $0xe8] sm:$0xff]
    %v218 = vld [vmem:[#allocation9 + $0xf0] sm:$0xff]
    %v219 = vld [vmem:[#allocation9 + $0xf8] sm:$0xff]
    %v220 = vld [vmem:[#allocation10] sm:$0xf]
    %v221 = vld [vmem:[#allocation4] sm:$0xf]
    %v222 = vld [vmem:[#allocation4 + $0x4] sm:$0xf]
    %v223 = vld [vmem:[#allocation4 + $0x8] sm:$0xf]
    %v224 = vld [vmem:[#allocation4 + $0xc] sm:$0xf]
    %v225 = vld [vmem:[#allocation4 + $0x10] sm:$0xf]
    %v226 = vld [vmem:[#allocation4 + $0x14] sm:$0xf]
    %v227 = vld [vmem:[#allocation4 + $0x18] sm:$0xf]
    %v228 = vld [vmem:[#allocation4 + $0x1c] sm:$0xf]
    %v230 = vperm.slane %v220, 0
    %v231 = vperm.slane %v220, 1
    %v232 = vperm.slane %v220, 2
    %v233 = vperm.slane %v220, 3
    %v246 = vunpack.c.l.b16 %v221
    %v247 = vunpack.c.l.b16 %v222
    %v248 = vunpack.c.l.b16 %v223
    %v249 = vunpack.c.l.b16 %v224
    %v250 = vunpack.c.l.b16 %v225
    %v251 = vunpack.c.l.b16 %v226
    %v252 = vunpack.c.l.b16 %v227
    %v253 = vunpack.c.l.b16 %v228
    %v254 = vpack.c.b16 %v247, %v246
    %v255 = vpack.c.b16 %v249, %v248
    %v256 = vpack.c.b16 %v251, %v250
    %v257 = vpack.c.b16 %v253, %v252
    %v262 = vunpack.c.l.b16 %v184
    %v263 = vunpack.c.h.b16 %v184
    %v264 = vunpack.c.l.b16 %v185
    %v265 = vunpack.c.h.b16 %v185
    %v266 = vunpack.c.l.b16 %v186
    %v267 = vunpack.c.h.b16 %v186
    %v268 = vunpack.c.l.b16 %v187
    %v269 = vunpack.c.h.b16 %v187
    %v270 = vpack.c.b16 %v266, %v262
    %v271 = vpack.c.b16 %v267, %v263
    %v272 = vpack.c.b16 %v268, %v264
    %v273 = vpack.c.b16 %v269, %v265
    %vm278 = vcmask 130048
    %v280 = vsel %vm278, %v254, 0
    %v283 = vsel %vm278, %v255, 0
    %v286 = vsel %vm278, %v256, 0
    %v289 = vsel %vm278, %v257, 0
    %291 = vmatpush.bf16.msra.mxu0 0
    %292 = vmatpush.bf16.msra.mxu0 0
    %293 = vmatpush.bf16.msra.mxu0 0
    %294 = vmatpush.bf16.msra.mxu0 0
    %295 = vmatpush.bf16.msra.mxu0 0
    %296 = vmatpush.bf16.msra.mxu0 0
    %297 = vmatpush.bf16.msra.mxu0 0
    %298 = vmatpush.bf16.msra.mxu0 %v270
    %299 = vmatmul.bf16.gmra.mxu0 %v280
    %v300 = vpop.f32.mrf.mxu0
    %v301 = vadd.f32 %v230, %v300
    %v302 = vpop.f32.mrf.mxu0
    %v303 = vadd.f32 %v230, %v302
    %304 = vmatmul.bf16.gmra.mxu0 %v283
    %v305 = vpop.f32.mrf.mxu0
    %v306 = vadd.f32 %v230, %v305
    %v307 = vpop.f32.mrf.mxu0
    %v308 = vadd.f32 %v230, %v307
    %309 = vmatmul.bf16.gmra.mxu0 %v286
    %v310 = vpop.f32.mrf.mxu0
    %v311 = vadd.f32 %v230, %v310
    %v312 = vpop.f32.mrf.mxu0
    %v313 = vadd.f32 %v230, %v312
    %314 = vmatmul.bf16.gmra.mxu0 %v289
    %v315 = vpop.f32.mrf.mxu0
    %v316 = vadd.f32 %v230, %v315
    %v317 = vpop.f32.mrf.mxu0
    %v318 = vadd.f32 %v230, %v317
    %319 = vdwg.mxu0
    %320 = vmatpush.bf16.msra.mxu0 0
    %321 = vmatpush.bf16.msra.mxu0 0
    %322 = vmatpush.bf16.msra.mxu0 0
    %323 = vmatpush.bf16.msra.mxu0 0
    %324 = vmatpush.bf16.msra.mxu0 0
    %325 = vmatpush.bf16.msra.mxu0 0
    %326 = vmatpush.bf16.msra.mxu0 0
    %327 = vmatpush.bf16.msra.mxu0 %v271
    %328 = vmatmul.bf16.gmra.mxu0 %v280
    %v329 = vpop.f32.mrf.mxu0
    %v330 = vadd.f32 %v231, %v329
    %v331 = vpop.f32.mrf.mxu0
    %v332 = vadd.f32 %v231, %v331
    %333 = vmatmul.bf16.gmra.mxu0 %v283
    %v334 = vpop.f32.mrf.mxu0
    %v335 = vadd.f32 %v231, %v334
    %v336 = vpop.f32.mrf.mxu0
    %v337 = vadd.f32 %v231, %v336
    %338 = vmatmul.bf16.gmra.mxu0 %v286
    %v339 = vpop.f32.mrf.mxu0
    %v340 = vadd.f32 %v231, %v339
    %v341 = vpop.f32.mrf.mxu0
    %v342 = vadd.f32 %v231, %v341
    %343 = vmatmul.bf16.gmra.mxu0 %v289
    %v344 = vpop.f32.mrf.mxu0
    %v345 = vadd.f32 %v231, %v344
    %v346 = vpop.f32.mrf.mxu0
    %v347 = vadd.f32 %v231, %v346
    %348 = vdwg.mxu0
    %349 = vmatpush.bf16.msra.mxu0 0
    %350 = vmatpush.bf16.msra.mxu0 0
    %351 = vmatpush.bf16.msra.mxu0 0
    %352 = vmatpush.bf16.msra.mxu0 0
    %353 = vmatpush.bf16.msra.mxu0 0
    %354 = vmatpush.bf16.msra.mxu0 0
    %355 = vmatpush.bf16.msra.mxu0 0
    %356 = vmatpush.bf16.msra.mxu0 %v272
    %357 = vmatmul.bf16.gmra.mxu0 %v280
    %v358 = vpop.f32.mrf.mxu0
    %v359 = vadd.f32 %v232, %v358
    %v360 = vpop.f32.mrf.mxu0
    %v361 = vadd.f32 %v232, %v360
    %362 = vmatmul.bf16.gmra.mxu0 %v283
    %v363 = vpop.f32.mrf.mxu0
    %v364 = vadd.f32 %v232, %v363
    %v365 = vpop.f32.mrf.mxu0
    %v366 = vadd.f32 %v232, %v365
    %367 = vmatmul.bf16.gmra.mxu0 %v286
    %v368 = vpop.f32.mrf.mxu0
    %v369 = vadd.f32 %v232, %v368
    %v370 = vpop.f32.mrf.mxu0
    %v371 = vadd.f32 %v232, %v370
    %372 = vmatmul.bf16.gmra.mxu0 %v289
    %v373 = vpop.f32.mrf.mxu0
    %v374 = vadd.f32 %v232, %v373
    %v375 = vpop.f32.mrf.mxu0
    %v376 = vadd.f32 %v232, %v375
    %377 = vdwg.mxu0
    %378 = vmatpush.bf16.msra.mxu0 0
    %379 = vmatpush.bf16.msra.mxu0 0
    %380 = vmatpush.bf16.msra.mxu0 0
    %381 = vmatpush.bf16.msra.mxu0 0
    %382 = vmatpush.bf16.msra.mxu0 0
    %383 = vmatpush.bf16.msra.mxu0 0
    %384 = vmatpush.bf16.msra.mxu0 0
    %385 = vmatpush.bf16.msra.mxu0 %v273
    %386 = vmatmul.bf16.gmra.mxu0 %v280
    %v387 = vpop.f32.mrf.mxu0
    %v388 = vadd.f32 %v233, %v387
    %v389 = vpop.f32.mrf.mxu0
    %v390 = vadd.f32 %v233, %v389
    %391 = vmatmul.bf16.gmra.mxu0 %v283
    %v392 = vpop.f32.mrf.mxu0
    %v393 = vadd.f32 %v233, %v392
    %v394 = vpop.f32.mrf.mxu0
    %v395 = vadd.f32 %v233, %v394
    %396 = vmatmul.bf16.gmra.mxu0 %v286
    %v397 = vpop.f32.mrf.mxu0
    %v398 = vadd.f32 %v233, %v397
    %v399 = vpop.f32.mrf.mxu0
    %v400 = vadd.f32 %v233, %v399
    %401 = vmatmul.bf16.gmra.mxu0 %v289
    %v402 = vpop.f32.mrf.mxu0
    %v403 = vadd.f32 %v233, %v402
    %v404 = vpop.f32.mrf.mxu0
    %v405 = vadd.f32 %v233, %v404
    %406 = vdwg.mxu0
    %407 = vst [vmem:[#allocation3] sm:$0xff] %v301
    %408 = vst [vmem:[#allocation3 + $0x8] sm:$0xff] %v330
    %409 = vst [vmem:[#allocation3 + $0x10] sm:$0xff] %v359
    %410 = vst [vmem:[#allocation3 + $0x18] sm:$0xff] %v388
    %411 = vst [vmem:[#allocation3 + $0x20] sm:$0xff] %v303
    %412 = vst [vmem:[#allocation3 + $0x28] sm:$0xff] %v332
    %413 = vst [vmem:[#allocation3 + $0x30] sm:$0xff] %v361
    %414 = vst [vmem:[#allocation3 + $0x38] sm:$0xff] %v390
    %415 = vst [vmem:[#allocation3 + $0x40] sm:$0xff] %v306
    %416 = vst [vmem:[#allocation3 + $0x48] sm:$0xff] %v335
    %417 = vst [vmem:[#allocation3 + $0x50] sm:$0xff] %v364
    %418 = vst [vmem:[#allocation3 + $0x58] sm:$0xff] %v393
    %419 = vst [vmem:[#allocation3 + $0x60] sm:$0xff] %v308
    %420 = vst [vmem:[#allocation3 + $0x68] sm:$0xff] %v337
    %421 = vst [vmem:[#allocation3 + $0x70] sm:$0xff] %v366
    %422 = vst [vmem:[#allocation3 + $0x78] sm:$0xff] %v395
    %423 = vst [vmem:[#allocation3 + $0x80] sm:$0xff] %v311
    %424 = vst [vmem:[#allocation3 + $0x88] sm:$0xff] %v340
    %425 = vst [vmem:[#allocation3 + $0x90] sm:$0xff] %v369
    %426 = vst [vmem:[#allocation3 + $0x98] sm:$0xff] %v398
    %427 = vst [vmem:[#allocation3 + $0xa0] sm:$0xff] %v313
    %428 = vst [vmem:[#allocation3 + $0xa8] sm:$0xff] %v342
    %429 = vst [vmem:[#allocation3 + $0xb0] sm:$0xff] %v371
    %430 = vst [vmem:[#allocation3 + $0xb8] sm:$0xff] %v400
    %431 = vst [vmem:[#allocation3 + $0xc0] sm:$0xff] %v316
    %432 = vst [vmem:[#allocation3 + $0xc8] sm:$0xff] %v345
    %433 = vst [vmem:[#allocation3 + $0xd0] sm:$0xff] %v374
    %434 = vst [vmem:[#allocation3 + $0xd8] sm:$0xff] %v403
    %435 = vst [vmem:[#allocation3 + $0xe0] sm:$0xff] %v318
    %436 = vst [vmem:[#allocation3 + $0xe8] sm:$0xff] %v347
    %437 = vst [vmem:[#allocation3 + $0xf0] sm:$0xff] %v376
    %438 = vst [vmem:[#allocation3 + $0xf8] sm:$0xff] %v405
    %v439 = vld [vmem:[#allocation3] sm:$0xff]
    %v440 = vld [vmem:[#allocation3 + $0x8] sm:$0xff]
    %v441 = vld [vmem:[#allocation3 + $0x10] sm:$0xff]
    %v442 = vld [vmem:[#allocation3 + $0x18] sm:$0xff]
    %v475 = vunpack.c.l.b16 %v188
    %v476 = vunpack.c.h.b16 %v188
    %v477 = vunpack.c.l.b16 %v189
    %v478 = vunpack.c.h.b16 %v189
    %v479 = vunpack.c.l.b16 %v190
    %v480 = vunpack.c.h.b16 %v190
    %v481 = vunpack.c.l.b16 %v191
    %v482 = vunpack.c.h.b16 %v191
    %v483 = vunpack.c.l.b16 %v192
    %v484 = vunpack.c.h.b16 %v192
    %v485 = vunpack.c.l.b16 %v193
    %v486 = vunpack.c.h.b16 %v193
    %v487 = vunpack.c.l.b16 %v194
    %v488 = vunpack.c.h.b16 %v194
    %v489 = vunpack.c.l.b16 %v195
    %v490 = vunpack.c.h.b16 %v195
    %v491 = vunpack.c.l.b16 %v196
    %v492 = vunpack.c.h.b16 %v196
    %v493 = vunpack.c.l.b16 %v197
    %v494 = vunpack.c.h.b16 %v197
    %v495 = vunpack.c.l.b16 %v198
    %v496 = vunpack.c.h.b16 %v198
    %v497 = vunpack.c.l.b16 %v199
    %v498 = vunpack.c.h.b16 %v199
    %v499 = vunpack.c.l.b16 %v200
    %v500 = vunpack.c.h.b16 %v200
    %v501 = vunpack.c.l.b16 %v201
    %v502 = vunpack.c.h.b16 %v201
    %v503 = vunpack.c.l.b16 %v202
    %v504 = vunpack.c.h.b16 %v202
    %v505 = vunpack.c.l.b16 %v203
    %v506 = vunpack.c.h.b16 %v203
    %v507 = vunpack.c.l.b16 %v204
    %v508 = vunpack.c.h.b16 %v204
    %v509 = vunpack.c.l.b16 %v205
    %v510 = vunpack.c.h.b16 %v205
    %v511 = vunpack.c.l.b16 %v206
    %v512 = vunpack.c.h.b16 %v206
    %v513 = vunpack.c.l.b16 %v207
    %v514 = vunpack.c.h.b16 %v207
    %v515 = vunpack.c.l.b16 %v208
    %v516 = vunpack.c.h.b16 %v208
    %v517 = vunpack.c.l.b16 %v209
    %v518 = vunpack.c.h.b16 %v209
    %v519 = vunpack.c.l.b16 %v210
    %v520 = vunpack.c.h.b16 %v210
    %v521 = vunpack.c.l.b16 %v211
    %v522 = vunpack.c.h.b16 %v211
    %v523 = vunpack.c.l.b16 %v212
    %v524 = vunpack.c.h.b16 %v212
    %v525 = vunpack.c.l.b16 %v213
    %v526 = vunpack.c.h.b16 %v213
    %v527 = vunpack.c.l.b16 %v214
    %v528 = vunpack.c.h.b16 %v214
    %v529 = vunpack.c.l.b16 %v215
    %v530 = vunpack.c.h.b16 %v215
    %v531 = vunpack.c.l.b16 %v216
    %v532 = vunpack.c.h.b16 %v216
    %v533 = vunpack.c.l.b16 %v217
    %v534 = vunpack.c.h.b16 %v217
    %v535 = vunpack.c.l.b16 %v218
    %v536 = vunpack.c.h.b16 %v218
    %v537 = vunpack.c.l.b16 %v219
    %v538 = vunpack.c.h.b16 %v219
    %v539 = vpack.c.b16 %v479, %v475
    %v540 = vpack.c.b16 %v480, %v476
    %v541 = vpack.c.b16 %v481, %v477
    %v542 = vpack.c.b16 %v482, %v478
    %v543 = vpack.c.b16 %v487, %v483
    %v544 = vpack.c.b16 %v488, %v484
    %v545 = vpack.c.b16 %v489, %v485
    %v546 = vpack.c.b16 %v490, %v486
    %v547 = vpack.c.b16 %v495, %v491
    %v548 = vpack.c.b16 %v496, %v492
    %v549 = vpack.c.b16 %v497, %v493
    %v550 = vpack.c.b16 %v498, %v494
    %v551 = vpack.c.b16 %v503, %v499
    %v552 = vpack.c.b16 %v504, %v500
    %v553 = vpack.c.b16 %v505, %v501
    %v554 = vpack.c.b16 %v506, %v502
    %v555 = vpack.c.b16 %v511, %v507
    %v556 = vpack.c.b16 %v512, %v508
    %v557 = vpack.c.b16 %v513, %v509
    %v558 = vpack.c.b16 %v514, %v510
    %v559 = vpack.c.b16 %v519, %v515
    %v560 = vpack.c.b16 %v520, %v516
    %v561 = vpack.c.b16 %v521, %v517
    %v562 = vpack.c.b16 %v522, %v518
    %v563 = vpack.c.b16 %v527, %v523
    %v564 = vpack.c.b16 %v528, %v524
    %v565 = vpack.c.b16 %v529, %v525
    %v566 = vpack.c.b16 %v530, %v526
    %v567 = vpack.c.b16 %v535, %v531
    %v568 = vpack.c.b16 %v536, %v532
    %v569 = vpack.c.b16 %v537, %v533
    %v570 = vpack.c.b16 %v538, %v534
    %603 = vmatpush.bf16.msra.mxu0 %v567
    %604 = vmatpush.bf16.msra.mxu0 %v563
    %605 = vmatpush.bf16.msra.mxu0 %v559
    %606 = vmatpush.bf16.msra.mxu0 %v555
    %607 = vmatpush.bf16.msra.mxu0 %v551
    %608 = vmatpush.bf16.msra.mxu0 %v547
    %609 = vmatpush.bf16.msra.mxu0 %v543
    %610 = vmatpush.bf16.msra.mxu0 %v539
    %611 = vmatmul.bf16.gmra.mxu0 0
    %v612 = vpop.f32.mrf.mxu0
    %v613 = vadd.f32 0.0, %v612
    %v614 = vpop.f32.mrf.mxu0
    %615 = vdwg.mxu0
    %616 = vmatpush.bf16.msra.mxu0 %v568
    %617 = vmatpush.bf16.msra.mxu0 %v564
    %618 = vmatpush.bf16.msra.mxu0 %v560
    %619 = vmatpush.bf16.msra.mxu0 %v556
    %620 = vmatpush.bf16.msra.mxu0 %v552
    %621 = vmatpush.bf16.msra.mxu0 %v548
    %622 = vmatpush.bf16.msra.mxu0 %v544
    %623 = vmatpush.bf16.msra.mxu0 %v540
    %624 = vmatmul.bf16.gmra.mxu0 0
    %v625 = vpop.f32.mrf.mxu0
    %v626 = vadd.f32 0.0, %v625
    %v627 = vpop.f32.mrf.mxu0
    %628 = vdwg.mxu0
    %629 = vmatpush.bf16.msra.mxu0 %v569
    %630 = vmatpush.bf16.msra.mxu0 %v565
    %631 = vmatpush.bf16.msra.mxu0 %v561
    %632 = vmatpush.bf16.msra.mxu0 %v557
    %633 = vmatpush.bf16.msra.mxu0 %v553
    %634 = vmatpush.bf16.msra.mxu0 %v549
    %635 = vmatpush.bf16.msra.mxu0 %v545
    %636 = vmatpush.bf16.msra.mxu0 %v541
    %637 = vmatmul.bf16.gmra.mxu0 0
    %v638 = vpop.f32.mrf.mxu0
    %v639 = vadd.f32 0.0, %v638
    %v640 = vpop.f32.mrf.mxu0
    %641 = vdwg.mxu0
    %642 = vmatpush.bf16.msra.mxu0 %v570
    %643 = vmatpush.bf16.msra.mxu0 %v566
    %644 = vmatpush.bf16.msra.mxu0 %v562
    %645 = vmatpush.bf16.msra.mxu0 %v558
    %646 = vmatpush.bf16.msra.mxu0 %v554
    %647 = vmatpush.bf16.msra.mxu0 %v550
    %648 = vmatpush.bf16.msra.mxu0 %v546
    %649 = vmatpush.bf16.msra.mxu0 %v542
    %650 = vmatmul.bf16.gmra.mxu0 0
    %v651 = vpop.f32.mrf.mxu0
    %v652 = vadd.f32 0.0, %v651
    %v653 = vpop.f32.mrf.mxu0
    %654 = vdwg.mxu0
    %v655 = vadd.f32 %v439, %v613
    %v656 = vadd.f32 %v440, %v626
    %v657 = vadd.f32 %v441, %v639
    %v658 = vadd.f32 %v442, %v652
    %v659 = vxor.u32 %v655, 2147483648
    %v660 = vmul.f32 %v659, 1.442695
    %v661 = vpow.pop %v660
    %v662 = vadd.f32 %v661, 1.0
    %v663 = vrcp.pop %v662
    %v664 = vmul.f32 %v662, %v663
    %v665 = vsub.f32 1.0, %v664
    %v666 = vmul.f32 %v663, %v665
    %v667 = vadd.f32 %v663, %v666
    %vm668 = vweird.f32 %v662
    %vm669 = vweird.f32 %v663
    %vm670 = vmor %vm668, %vm669
    %v671 = vsel %vm670, %v663, %v667
    %v672 = vand.u32 2147483647, %v662
    %vm673 = vcmp.eq.f32.partialorder %v672, 8.507059e+37
    %v674 = vand.u32 %v662, 2147483648
    %v675 = vor.u32 1.1754944e-38, %v674
    %v676 = vsel %vm673, %v675, %v671
    %v677 = vmul.f32 1.0, %v676
    %v678 = vxor.u32 %v656, 2147483648
    %v679 = vmul.f32 %v678, 1.442695
    %v680 = vpow.pop %v679
    %v681 = vadd.f32 %v680, 1.0
    %v682 = vrcp.pop %v681
    %v683 = vmul.f32 %v681, %v682
    %v684 = vsub.f32 1.0, %v683
    %v685 = vmul.f32 %v682, %v684
    %v686 = vadd.f32 %v682, %v685
    %vm687 = vweird.f32 %v681
    %vm688 = vweird.f32 %v682
    %vm689 = vmor %vm687, %vm688
    %v690 = vsel %vm689, %v682, %v686
    %v691 = vand.u32 2147483647, %v681
    %vm692 = vcmp.eq.f32.partialorder %v691, 8.507059e+37
    %v693 = vand.u32 %v681, 2147483648
    %v694 = vor.u32 1.1754944e-38, %v693
    %v695 = vsel %vm692, %v694, %v690
    %v696 = vmul.f32 1.0, %v695
    %v697 = vtanh.pop %v657
    %v698 = vxor.u32 %v658, 2147483648
    %v699 = vmul.f32 %v698, 1.442695
    %v700 = vpow.pop %v699
    %v701 = vadd.f32 %v700, 1.0
    %v702 = vrcp.pop %v701
    %v703 = vmul.f32 %v701, %v702
    %v704 = vsub.f32 1.0, %v703
    %v705 = vmul.f32 %v702, %v704
    %v706 = vadd.f32 %v702, %v705
    %vm707 = vweird.f32 %v701
    %vm708 = vweird.f32 %v702
    %vm709 = vmor %vm707, %vm708
    %v710 = vsel %vm709, %v702, %v706
    %v711 = vand.u32 2147483647, %v701
    %vm712 = vcmp.eq.f32.partialorder %v711, 8.507059e+37
    %v713 = vand.u32 %v701, 2147483648
    %v714 = vor.u32 1.1754944e-38, %v713
    %v715 = vsel %vm712, %v714, %v710
    %v716 = vmul.f32 1.0, %v715
    %v717 = vmul.f32 %v696, 0.0
    %v718 = vmul.f32 %v677, %v697
    %v719 = vadd.f32 %v717, %v718
    %v720 = vtanh.pop %v719
    %v721 = vmul.f32 %v716, %v720
    %v722 = vpack.c.bf16 %v721, %v721
    %723 = vst [vmem:[#allocation2] sm:$0xf] %v722
    %s724 = scalar_lea.vmem [#allocation3], 32
    %v725 = vld [vmem:[%s724] sm:$0xff]
    %v726 = vld [vmem:[%s724 + $0x8] sm:$0xff]
    %v727 = vld [vmem:[%s724 + $0x10] sm:$0xff]
    %v728 = vld [vmem:[%s724 + $0x18] sm:$0xff]
    %729 = vmatpush.bf16.msra.mxu0 %v567
    %730 = vmatpush.bf16.msra.mxu0 %v563
    %731 = vmatpush.bf16.msra.mxu0 %v559
    %732 = vmatpush.bf16.msra.mxu0 %v555
    %733 = vmatpush.bf16.msra.mxu0 %v551
    %734 = vmatpush.bf16.msra.mxu0 %v547
    %735 = vmatpush.bf16.msra.mxu0 %v543
    %736 = vmatpush.bf16.msra.mxu0 %v539
    %737 = vmatmul.bf16.gmra.mxu0 %v722
    %v738 = vpop.f32.mrf.mxu0
    %v739 = vadd.f32 0.0, %v738
    %v740 = vpop.f32.mrf.mxu0
    %741 = vdwg.mxu0
    %742 = vmatpush.bf16.msra.mxu0 %v568
    %743 = vmatpush.bf16.msra.mxu0 %v564
    %744 = vmatpush.bf16.msra.mxu0 %v560
    %745 = vmatpush.bf16.msra.mxu0 %v556
    %746 = vmatpush.bf16.msra.mxu0 %v552
    %747 = vmatpush.bf16.msra.mxu0 %v548
    %748 = vmatpush.bf16.msra.mxu0 %v544
    %749 = vmatpush.bf16.msra.mxu0 %v540
    %750 = vmatmul.bf16.gmra.mxu0 %v722
    %v751 = vpop.f32.mrf.mxu0
    %v752 = vadd.f32 0.0, %v751
    %v753 = vpop.f32.mrf.mxu0
    %754 = vdwg.mxu0
    %755 = vmatpush.bf16.msra.mxu0 %v569
    %756 = vmatpush.bf16.msra.mxu0 %v565
    %757 = vmatpush.bf16.msra.mxu0 %v561
    %758 = vmatpush.bf16.msra.mxu0 %v557
    %759 = vmatpush.bf16.msra.mxu0 %v553
    %760 = vmatpush.bf16.msra.mxu0 %v549
    %761 = vmatpush.bf16.msra.mxu0 %v545
    %762 = vmatpush.bf16.msra.mxu0 %v541
    %763 = vmatmul.bf16.gmra.mxu0 %v722
    %v764 = vpop.f32.mrf.mxu0
    %v765 = vadd.f32 0.0, %v764
    %v766 = vpop.f32.mrf.mxu0
    %767 = vdwg.mxu0
    %768 = vmatpush.bf16.msra.mxu0 %v570
    %769 = vmatpush.bf16.msra.mxu0 %v566
    %770 = vmatpush.bf16.msra.mxu0 %v562
    %771 = vmatpush.bf16.msra.mxu0 %v558
    %772 = vmatpush.bf16.msra.mxu0 %v554
    %773 = vmatpush.bf16.msra.mxu0 %v550
    %774 = vmatpush.bf16.msra.mxu0 %v546
    %775 = vmatpush.bf16.msra.mxu0 %v542
    %776 = vmatmul.bf16.gmra.mxu0 %v722
    %v777 = vpop.f32.mrf.mxu0
    %v778 = vadd.f32 0.0, %v777
    %v779 = vpop.f32.mrf.mxu0
    %780 = vdwg.mxu0
    %v781 = vadd.f32 %v725, %v739
    %v782 = vadd.f32 %v726, %v752
    %v783 = vadd.f32 %v727, %v765
    %v784 = vadd.f32 %v728, %v778
    %v785 = vxor.u32 %v781, 2147483648
    %v786 = vmul.f32 %v785, 1.442695
    %v787 = vpow.pop %v786
    %v788 = vadd.f32 %v787, 1.0
    %v789 = vrcp.pop %v788
    %v790 = vmul.f32 %v788, %v789
    %v791 = vsub.f32 1.0, %v790
    %v792 = vmul.f32 %v789, %v791
    %v793 = vadd.f32 %v789, %v792
    %vm794 = vweird.f32 %v788
    %vm795 = vweird.f32 %v789
    %vm796 = vmor %vm794, %vm795
    %v797 = vsel %vm796, %v789, %v793
    %v798 = vand.u32 2147483647, %v788
    %vm799 = vcmp.eq.f32.partialorder %v798, 8.507059e+37
    %v800 = vand.u32 %v788, 2147483648
    %v801 = vor.u32 1.1754944e-38, %v800
    %v802 = vsel %vm799, %v801, %v797
    %v803 = vmul.f32 1.0, %v802
    %v804 = vxor.u32 %v782, 2147483648
    %v805 = vmul.f32 %v804, 1.442695
    %v806 = vpow.pop %v805
    %v807 = vadd.f32 %v806, 1.0
    %v808 = vrcp.pop %v807
    %v809 = vmul.f32 %v807, %v808
    %v810 = vsub.f32 1.0, %v809
    %v811 = vmul.f32 %v808, %v810
    %v812 = vadd.f32 %v808, %v811
    %vm813 = vweird.f32 %v807
    %vm814 = vweird.f32 %v808
    %vm815 = vmor %vm813, %vm814
    %v816 = vsel %vm815, %v808, %v812
    %v817 = vand.u32 2147483647, %v807
    %vm818 = vcmp.eq.f32.partialorder %v817, 8.507059e+37
    %v819 = vand.u32 %v807, 2147483648
    %v820 = vor.u32 1.1754944e-38, %v819
    %v821 = vsel %vm818, %v820, %v816
    %v822 = vmul.f32 1.0, %v821
    %v823 = vtanh.pop %v783
    %v824 = vxor.u32 %v784, 2147483648
    %v825 = vmul.f32 %v824, 1.442695
    %v826 = vpow.pop %v825
    %v827 = vadd.f32 %v826, 1.0
    %v828 = vrcp.pop %v827
    %v829 = vmul.f32 %v827, %v828
    %v830 = vsub.f32 1.0, %v829
    %v831 = vmul.f32 %v828, %v830
    %v832 = vadd.f32 %v828, %v831
    %vm833 = vweird.f32 %v827
    %vm834 = vweird.f32 %v828
    %vm835 = vmor %vm833, %vm834
    %v836 = vsel %vm835, %v828, %v832
    %v837 = vand.u32 2147483647, %v827
    %vm838 = vcmp.eq.f32.partialorder %v837, 8.507059e+37
    %v839 = vand.u32 %v827, 2147483648
    %v840 = vor.u32 1.1754944e-38, %v839
    %v841 = vsel %vm838, %v840, %v836
    %v842 = vmul.f32 1.0, %v841
    %v843 = vmul.f32 %v822, %v719
    %v844 = vmul.f32 %v803, %v823
    %v845 = vadd.f32 %v843, %v844
    %v846 = vtanh.pop %v845
    %v847 = vmul.f32 %v842, %v846
    %v848 = vpack.c.bf16 %v847, %v847
    %s849 = scalar_lea.vmem [#allocation2], 4
    %850 = vst [vmem:[%s849] sm:$0xf] %v848
    %s851 = scalar_lea.vmem [#allocation3], 64
    %v852 = vld [vmem:[%s851] sm:$0xff]
    %v853 = vld [vmem:[%s851 + $0x8] sm:$0xff]
    %v854 = vld [vmem:[%s851 + $0x10] sm:$0xff]
    %v855 = vld [vmem:[%s851 + $0x18] sm:$0xff]
    %856 = vmatpush.bf16.msra.mxu0 %v567
    %857 = vmatpush.bf16.msra.mxu0 %v563
    %858 = vmatpush.bf16.msra.mxu0 %v559
    %859 = vmatpush.bf16.msra.mxu0 %v555
    %860 = vmatpush.bf16.msra.mxu0 %v551
    %861 = vmatpush.bf16.msra.mxu0 %v547
    %862 = vmatpush.bf16.msra.mxu0 %v543
    %863 = vmatpush.bf16.msra.mxu0 %v539
    %864 = vmatmul.bf16.gmra.mxu0 %v848
    %v865 = vpop.f32.mrf.mxu0
    %v866 = vadd.f32 0.0, %v865
    %v867 = vpop.f32.mrf.mxu0
    %868 = vdwg.mxu0
    %869 = vmatpush.bf16.msra.mxu0 %v568
    %870 = vmatpush.bf16.msra.mxu0 %v564
    %871 = vmatpush.bf16.msra.mxu0 %v560
    %872 = vmatpush.bf16.msra.mxu0 %v556
    %873 = vmatpush.bf16.msra.mxu0 %v552
    %874 = vmatpush.bf16.msra.mxu0 %v548
    %875 = vmatpush.bf16.msra.mxu0 %v544
    %876 = vmatpush.bf16.msra.mxu0 %v540
    %877 = vmatmul.bf16.gmra.mxu0 %v848
    %v878 = vpop.f32.mrf.mxu0
    %v879 = vadd.f32 0.0, %v878
    %v880 = vpop.f32.mrf.mxu0
    %881 = vdwg.mxu0
    %882 = vmatpush.bf16.msra.mxu0 %v569
    %883 = vmatpush.bf16.msra.mxu0 %v565
    %884 = vmatpush.bf16.msra.mxu0 %v561
    %885 = vmatpush.bf16.msra.mxu0 %v557
    %886 = vmatpush.bf16.msra.mxu0 %v553
    %887 = vmatpush.bf16.msra.mxu0 %v549
    %888 = vmatpush.bf16.msra.mxu0 %v545
    %889 = vmatpush.bf16.msra.mxu0 %v541
    %890 = vmatmul.bf16.gmra.mxu0 %v848
    %v891 = vpop.f32.mrf.mxu0
    %v892 = vadd.f32 0.0, %v891
    %v893 = vpop.f32.mrf.mxu0
    %894 = vdwg.mxu0
    %895 = vmatpush.bf16.msra.mxu0 %v570
    %896 = vmatpush.bf16.msra.mxu0 %v566
    %897 = vmatpush.bf16.msra.mxu0 %v562
    %898 = vmatpush.bf16.msra.mxu0 %v558
    %899 = vmatpush.bf16.msra.mxu0 %v554
    %900 = vmatpush.bf16.msra.mxu0 %v550
    %901 = vmatpush.bf16.msra.mxu0 %v546
    %902 = vmatpush.bf16.msra.mxu0 %v542
    %903 = vmatmul.bf16.gmra.mxu0 %v848
    %v904 = vpop.f32.mrf.mxu0
    %v905 = vadd.f32 0.0, %v904
    %v906 = vpop.f32.mrf.mxu0
    %907 = vdwg.mxu0
    %v908 = vadd.f32 %v852, %v866
    %v909 = vadd.f32 %v853, %v879
    %v910 = vadd.f32 %v854, %v892
    %v911 = vadd.f32 %v855, %v905
    %v912 = vxor.u32 %v908, 2147483648
    %v913 = vmul.f32 %v912, 1.442695
    %v914 = vpow.pop %v913
    %v915 = vadd.f32 %v914, 1.0
    %v916 = vrcp.pop %v915
    %v917 = vmul.f32 %v915, %v916
    %v918 = vsub.f32 1.0, %v917
    %v919 = vmul.f32 %v916, %v918
    %v920 = vadd.f32 %v916, %v919
    %vm921 = vweird.f32 %v915
    %vm922 = vweird.f32 %v916
    %vm923 = vmor %vm921, %vm922
    %v924 = vsel %vm923, %v916, %v920
    %v925 = vand.u32 2147483647, %v915
    %vm926 = vcmp.eq.f32.partialorder %v925, 8.507059e+37
    %v927 = vand.u32 %v915, 2147483648
    %v928 = vor.u32 1.1754944e-38, %v927
    %v929 = vsel %vm926, %v928, %v924
    %v930 = vmul.f32 1.0, %v929
    %v931 = vxor.u32 %v909, 2147483648
    %v932 = vmul.f32 %v931, 1.442695
    %v933 = vpow.pop %v932
    %v934 = vadd.f32 %v933, 1.0
    %v935 = vrcp.pop %v934
    %v936 = vmul.f32 %v934, %v935
    %v937 = vsub.f32 1.0, %v936
    %v938 = vmul.f32 %v935, %v937
    %v939 = vadd.f32 %v935, %v938
    %vm940 = vweird.f32 %v934
    %vm941 = vweird.f32 %v935
    %vm942 = vmor %vm940, %vm941
    %v943 = vsel %vm942, %v935, %v939
    %v944 = vand.u32 2147483647, %v934
    %vm945 = vcmp.eq.f32.partialorder %v944, 8.507059e+37
    %v946 = vand.u32 %v934, 2147483648
    %v947 = vor.u32 1.1754944e-38, %v946
    %v948 = vsel %vm945, %v947, %v943
    %v949 = vmul.f32 1.0, %v948
    %v950 = vtanh.pop %v910
    %v951 = vxor.u32 %v911, 2147483648
    %v952 = vmul.f32 %v951, 1.442695
    %v953 = vpow.pop %v952
    %v954 = vadd.f32 %v953, 1.0
    %v955 = vrcp.pop %v954
    %v956 = vmul.f32 %v954, %v955
    %v957 = vsub.f32 1.0, %v956
    %v958 = vmul.f32 %v955, %v957
    %v959 = vadd.f32 %v955, %v958
    %vm960 = vweird.f32 %v954
    %vm961 = vweird.f32 %v955
    %vm962 = vmor %vm960, %vm961
    %v963 = vsel %vm962, %v955, %v959
    %v964 = vand.u32 2147483647, %v954
    %vm965 = vcmp.eq.f32.partialorder %v964, 8.507059e+37
    %v966 = vand.u32 %v954, 2147483648
    %v967 = vor.u32 1.1754944e-38, %v966
    %v968 = vsel %vm965, %v967, %v963
    %v969 = vmul.f32 1.0, %v968
    %v970 = vmul.f32 %v949, %v845
    %v971 = vmul.f32 %v930, %v950
    %v972 = vadd.f32 %v970, %v971
    %v973 = vtanh.pop %v972
    %v974 = vmul.f32 %v969, %v973
    %v975 = vpack.c.bf16 %v974, %v974
    %s976 = scalar_lea.vmem [#allocation2], 8
    %977 = vst [vmem:[%s976] sm:$0xf] %v975
    %s978 = scalar_lea.vmem [#allocation3], 96
    %v979 = vld [vmem:[%s978] sm:$0xff]
    %v980 = vld [vmem:[%s978 + $0x8] sm:$0xff]
    %v981 = vld [vmem:[%s978 + $0x10] sm:$0xff]
    %v982 = vld [vmem:[%s978 + $0x18] sm:$0xff]
    %983 = vmatpush.bf16.msra.mxu0 %v567
    %984 = vmatpush.bf16.msra.mxu0 %v563
    %985 = vmatpush.bf16.msra.mxu0 %v559
    %986 = vmatpush.bf16.msra.mxu0 %v555
    %987 = vmatpush.bf16.msra.mxu0 %v551
    %988 = vmatpush.bf16.msra.mxu0 %v547
    %989 = vmatpush.bf16.msra.mxu0 %v543
    %990 = vmatpush.bf16.msra.mxu0 %v539
    %991 = vmatmul.bf16.gmra.mxu0 %v975
    %v992 = vpop.f32.mrf.mxu0
    %v993 = vadd.f32 0.0, %v992
    %v994 = vpop.f32.mrf.mxu0
    %995 = vdwg.mxu0
    %996 = vmatpush.bf16.msra.mxu0 %v568
    %997 = vmatpush.bf16.msra.mxu0 %v564
    %998 = vmatpush.bf16.msra.mxu0 %v560
    %999 = vmatpush.bf16.msra.mxu0 %v556
    %1000 = vmatpush.bf16.msra.mxu0 %v552
    %1001 = vmatpush.bf16.msra.mxu0 %v548
    %1002 = vmatpush.bf16.msra.mxu0 %v544
    %1003 = vmatpush.bf16.msra.mxu0 %v540
    %1004 = vmatmul.bf16.gmra.mxu0 %v975
    %v1005 = vpop.f32.mrf.mxu0
    %v1006 = vadd.f32 0.0, %v1005
    %v1007 = vpop.f32.mrf.mxu0
    %1008 = vdwg.mxu0
    %1009 = vmatpush.bf16.msra.mxu0 %v569
    %1010 = vmatpush.bf16.msra.mxu0 %v565
    %1011 = vmatpush.bf16.msra.mxu0 %v561
    %1012 = vmatpush.bf16.msra.mxu0 %v557
    %1013 = vmatpush.bf16.msra.mxu0 %v553
    %1014 = vmatpush.bf16.msra.mxu0 %v549
    %1015 = vmatpush.bf16.msra.mxu0 %v545
    %1016 = vmatpush.bf16.msra.mxu0 %v541
    %1017 = vmatmul.bf16.gmra.mxu0 %v975
    %v1018 = vpop.f32.mrf.mxu0
    %v1019 = vadd.f32 0.0, %v1018
    %v1020 = vpop.f32.mrf.mxu0
    %1021 = vdwg.mxu0
    %1022 = vmatpush.bf16.msra.mxu0 %v570
    %1023 = vmatpush.bf16.msra.mxu0 %v566
    %1024 = vmatpush.bf16.msra.mxu0 %v562
    %1025 = vmatpush.bf16.msra.mxu0 %v558
    %1026 = vmatpush.bf16.msra.mxu0 %v554
    %1027 = vmatpush.bf16.msra.mxu0 %v550
    %1028 = vmatpush.bf16.msra.mxu0 %v546
    %1029 = vmatpush.bf16.msra.mxu0 %v542
    %1030 = vmatmul.bf16.gmra.mxu0 %v975
    %v1031 = vpop.f32.mrf.mxu0
    %v1032 = vadd.f32 0.0, %v1031
    %v1033 = vpop.f32.mrf.mxu0
    %1034 = vdwg.mxu0
    %v1035 = vadd.f32 %v979, %v993
    %v1036 = vadd.f32 %v980, %v1006
    %v1037 = vadd.f32 %v981, %v1019
    %v1038 = vadd.f32 %v982, %v1032
    %v1039 = vxor.u32 %v1035, 2147483648
    %v1040 = vmul.f32 %v1039, 1.442695
    %v1041 = vpow.pop %v1040
    %v1042 = vadd.f32 %v1041, 1.0
    %v1043 = vrcp.pop %v1042
    %v1044 = vmul.f32 %v1042, %v1043
    %v1045 = vsub.f32 1.0, %v1044
    %v1046 = vmul.f32 %v1043, %v1045
    %v1047 = vadd.f32 %v1043, %v1046
    %vm1048 = vweird.f32 %v1042
    %vm1049 = vweird.f32 %v1043
    %vm1050 = vmor %vm1048, %vm1049
    %v1051 = vsel %vm1050, %v1043, %v1047
    %v1052 = vand.u32 2147483647, %v1042
    %vm1053 = vcmp.eq.f32.partialorder %v1052, 8.507059e+37
    %v1054 = vand.u32 %v1042, 2147483648
    %v1055 = vor.u32 1.1754944e-38, %v1054
    %v1056 = vsel %vm1053, %v1055, %v1051
    %v1057 = vmul.f32 1.0, %v1056
    %v1058 = vxor.u32 %v1036, 2147483648
    %v1059 = vmul.f32 %v1058, 1.442695
    %v1060 = vpow.pop %v1059
    %v1061 = vadd.f32 %v1060, 1.0
    %v1062 = vrcp.pop %v1061
    %v1063 = vmul.f32 %v1061, %v1062
    %v1064 = vsub.f32 1.0, %v1063
    %v1065 = vmul.f32 %v1062, %v1064
    %v1066 = vadd.f32 %v1062, %v1065
    %vm1067 = vweird.f32 %v1061
    %vm1068 = vweird.f32 %v1062
    %vm1069 = vmor %vm1067, %vm1068
    %v1070 = vsel %vm1069, %v1062, %v1066
    %v1071 = vand.u32 2147483647, %v1061
    %vm1072 = vcmp.eq.f32.partialorder %v1071, 8.507059e+37
    %v1073 = vand.u32 %v1061, 2147483648
    %v1074 = vor.u32 1.1754944e-38, %v1073
    %v1075 = vsel %vm1072, %v1074, %v1070
    %v1076 = vmul.f32 1.0, %v1075
    %v1077 = vtanh.pop %v1037
    %v1078 = vxor.u32 %v1038, 2147483648
    %v1079 = vmul.f32 %v1078, 1.442695
    %v1080 = vpow.pop %v1079
    %v1081 = vadd.f32 %v1080, 1.0
    %v1082 = vrcp.pop %v1081
    %v1083 = vmul.f32 %v1081, %v1082
    %v1084 = vsub.f32 1.0, %v1083
    %v1085 = vmul.f32 %v1082, %v1084
    %v1086 = vadd.f32 %v1082, %v1085
    %vm1087 = vweird.f32 %v1081
    %vm1088 = vweird.f32 %v1082
    %vm1089 = vmor %vm1087, %vm1088
    %v1090 = vsel %vm1089, %v1082, %v1086
    %v1091 = vand.u32 2147483647, %v1081
    %vm1092 = vcmp.eq.f32.partialorder %v1091, 8.507059e+37
    %v1093 = vand.u32 %v1081, 2147483648
    %v1094 = vor.u32 1.1754944e-38, %v1093
    %v1095 = vsel %vm1092, %v1094, %v1090
    %v1096 = vmul.f32 1.0, %v1095
    %v1097 = vmul.f32 %v1076, %v972
    %v1098 = vmul.f32 %v1057, %v1077
    %v1099 = vadd.f32 %v1097, %v1098
    %v1100 = vtanh.pop %v1099
    %v1101 = vmul.f32 %v1096, %v1100
    %v1102 = vpack.c.bf16 %v1101, %v1101
    %s1103 = scalar_lea.vmem [#allocation2], 12
    %1104 = vst [vmem:[%s1103] sm:$0xf] %v1102
    %s1105 = scalar_lea.vmem [#allocation3], 128
    %v1106 = vld [vmem:[%s1105] sm:$0xff]
    %v1107 = vld [vmem:[%s1105 + $0x8] sm:$0xff]
    %v1108 = vld [vmem:[%s1105 + $0x10] sm:$0xff]
    %v1109 = vld [vmem:[%s1105 + $0x18] sm:$0xff]
    %1110 = vmatpush.bf16.msra.mxu0 %v567
    %1111 = vmatpush.bf16.msra.mxu0 %v563
    %1112 = vmatpush.bf16.msra.mxu0 %v559
    %1113 = vmatpush.bf16.msra.mxu0 %v555
    %1114 = vmatpush.bf16.msra.mxu0 %v551
    %1115 = vmatpush.bf16.msra.mxu0 %v547
    %1116 = vmatpush.bf16.msra.mxu0 %v543
    %1117 = vmatpush.bf16.msra.mxu0 %v539
    %1118 = vmatmul.bf16.gmra.mxu0 %v1102
    %v1119 = vpop.f32.mrf.mxu0
    %v1120 = vadd.f32 0.0, %v1119
    %v1121 = vpop.f32.mrf.mxu0
    %1122 = vdwg.mxu0
    %1123 = vmatpush.bf16.msra.mxu0 %v568
    %1124 = vmatpush.bf16.msra.mxu0 %v564
    %1125 = vmatpush.bf16.msra.mxu0 %v560
    %1126 = vmatpush.bf16.msra.mxu0 %v556
    %1127 = vmatpush.bf16.msra.mxu0 %v552
    %1128 = vmatpush.bf16.msra.mxu0 %v548
    %1129 = vmatpush.bf16.msra.mxu0 %v544
    %1130 = vmatpush.bf16.msra.mxu0 %v540
    %1131 = vmatmul.bf16.gmra.mxu0 %v1102
    %v1132 = vpop.f32.mrf.mxu0
    %v1133 = vadd.f32 0.0, %v1132
    %v1134 = vpop.f32.mrf.mxu0
    %1135 = vdwg.mxu0
    %1136 = vmatpush.bf16.msra.mxu0 %v569
    %1137 = vmatpush.bf16.msra.mxu0 %v565
    %1138 = vmatpush.bf16.msra.mxu0 %v561
    %1139 = vmatpush.bf16.msra.mxu0 %v557
    %1140 = vmatpush.bf16.msra.mxu0 %v553
    %1141 = vmatpush.bf16.msra.mxu0 %v549
    %1142 = vmatpush.bf16.msra.mxu0 %v545
    %1143 = vmatpush.bf16.msra.mxu0 %v541
    %1144 = vmatmul.bf16.gmra.mxu0 %v1102
    %v1145 = vpop.f32.mrf.mxu0
    %v1146 = vadd.f32 0.0, %v1145
    %v1147 = vpop.f32.mrf.mxu0
    %1148 = vdwg.mxu0
    %1149 = vmatpush.bf16.msra.mxu0 %v570
    %1150 = vmatpush.bf16.msra.mxu0 %v566
    %1151 = vmatpush.bf16.msra.mxu0 %v562
    %1152 = vmatpush.bf16.msra.mxu0 %v558
    %1153 = vmatpush.bf16.msra.mxu0 %v554
    %1154 = vmatpush.bf16.msra.mxu0 %v550
    %1155 = vmatpush.bf16.msra.mxu0 %v546
    %1156 = vmatpush.bf16.msra.mxu0 %v542
    %1157 = vmatmul.bf16.gmra.mxu0 %v1102
    %v1158 = vpop.f32.mrf.mxu0
    %v1159 = vadd.f32 0.0, %v1158
    %v1160 = vpop.f32.mrf.mxu0
    %1161 = vdwg.mxu0
    %v1162 = vadd.f32 %v1106, %v1120
    %v1163 = vadd.f32 %v1107, %v1133
    %v1164 = vadd.f32 %v1108, %v1146
    %v1165 = vadd.f32 %v1109, %v1159
    %v1166 = vxor.u32 %v1162, 2147483648
    %v1167 = vmul.f32 %v1166, 1.442695
    %v1168 = vpow.pop %v1167
    %v1169 = vadd.f32 %v1168, 1.0
    %v1170 = vrcp.pop %v1169
    %v1171 = vmul.f32 %v1169, %v1170
    %v1172 = vsub.f32 1.0, %v1171
    %v1173 = vmul.f32 %v1170, %v1172
    %v1174 = vadd.f32 %v1170, %v1173
    %vm1175 = vweird.f32 %v1169
    %vm1176 = vweird.f32 %v1170
    %vm1177 = vmor %vm1175, %vm1176
    %v1178 = vsel %vm1177, %v1170, %v1174
    %v1179 = vand.u32 2147483647, %v1169
    %vm1180 = vcmp.eq.f32.partialorder %v1179, 8.507059e+37
    %v1181 = vand.u32 %v1169, 2147483648
    %v1182 = vor.u32 1.1754944e-38, %v1181
    %v1183 = vsel %vm1180, %v1182, %v1178
    %v1184 = vmul.f32 1.0, %v1183
    %v1185 = vxor.u32 %v1163, 2147483648
    %v1186 = vmul.f32 %v1185, 1.442695
    %v1187 = vpow.pop %v1186
    %v1188 = vadd.f32 %v1187, 1.0
    %v1189 = vrcp.pop %v1188
    %v1190 = vmul.f32 %v1188, %v1189
    %v1191 = vsub.f32 1.0, %v1190
    %v1192 = vmul.f32 %v1189, %v1191
    %v1193 = vadd.f32 %v1189, %v1192
    %vm1194 = vweird.f32 %v1188
    %vm1195 = vweird.f32 %v1189
    %vm1196 = vmor %vm1194, %vm1195
    %v1197 = vsel %vm1196, %v1189, %v1193
    %v1198 = vand.u32 2147483647, %v1188
    %vm1199 = vcmp.eq.f32.partialorder %v1198, 8.507059e+37
    %v1200 = vand.u32 %v1188, 2147483648
    %v1201 = vor.u32 1.1754944e-38, %v1200
    %v1202 = vsel %vm1199, %v1201, %v1197
    %v1203 = vmul.f32 1.0, %v1202
    %v1204 = vtanh.pop %v1164
    %v1205 = vxor.u32 %v1165, 2147483648
    %v1206 = vmul.f32 %v1205, 1.442695
    %v1207 = vpow.pop %v1206
    %v1208 = vadd.f32 %v1207, 1.0
    %v1209 = vrcp.pop %v1208
    %v1210 = vmul.f32 %v1208, %v1209
    %v1211 = vsub.f32 1.0, %v1210
    %v1212 = vmul.f32 %v1209, %v1211
    %v1213 = vadd.f32 %v1209, %v1212
    %vm1214 = vweird.f32 %v1208
    %vm1215 = vweird.f32 %v1209
    %vm1216 = vmor %vm1214, %vm1215
    %v1217 = vsel %vm1216, %v1209, %v1213
    %v1218 = vand.u32 2147483647, %v1208
    %vm1219 = vcmp.eq.f32.partialorder %v1218, 8.507059e+37
    %v1220 = vand.u32 %v1208, 2147483648
    %v1221 = vor.u32 1.1754944e-38, %v1220
    %v1222 = vsel %vm1219, %v1221, %v1217
    %v1223 = vmul.f32 1.0, %v1222
    %v1224 = vmul.f32 %v1203, %v1099
    %v1225 = vmul.f32 %v1184, %v1204
    %v1226 = vadd.f32 %v1224, %v1225
    %v1227 = vtanh.pop %v1226
    %v1228 = vmul.f32 %v1223, %v1227
    %v1229 = vpack.c.bf16 %v1228, %v1228
    %s1230 = scalar_lea.vmem [#allocation2], 16
    %1231 = vst [vmem:[%s1230] sm:$0xf] %v1229
    %s1232 = scalar_lea.vmem [#allocation3], 160
    %v1233 = vld [vmem:[%s1232] sm:$0xff]
    %v1234 = vld [vmem:[%s1232 + $0x8] sm:$0xff]
    %v1235 = vld [vmem:[%s1232 + $0x10] sm:$0xff]
    %v1236 = vld [vmem:[%s1232 + $0x18] sm:$0xff]
    %1237 = vmatpush.bf16.msra.mxu0 %v567
    %1238 = vmatpush.bf16.msra.mxu0 %v563
    %1239 = vmatpush.bf16.msra.mxu0 %v559
    %1240 = vmatpush.bf16.msra.mxu0 %v555
    %1241 = vmatpush.bf16.msra.mxu0 %v551
    %1242 = vmatpush.bf16.msra.mxu0 %v547
    %1243 = vmatpush.bf16.msra.mxu0 %v543
    %1244 = vmatpush.bf16.msra.mxu0 %v539
    %1245 = vmatmul.bf16.gmra.mxu0 %v1229
    %v1246 = vpop.f32.mrf.mxu0
    %v1247 = vadd.f32 0.0, %v1246
    %v1248 = vpop.f32.mrf.mxu0
    %1249 = vdwg.mxu0
    %1250 = vmatpush.bf16.msra.mxu0 %v568
    %1251 = vmatpush.bf16.msra.mxu0 %v564
    %1252 = vmatpush.bf16.msra.mxu0 %v560
    %1253 = vmatpush.bf16.msra.mxu0 %v556
    %1254 = vmatpush.bf16.msra.mxu0 %v552
    %1255 = vmatpush.bf16.msra.mxu0 %v548
    %1256 = vmatpush.bf16.msra.mxu0 %v544
    %1257 = vmatpush.bf16.msra.mxu0 %v540
    %1258 = vmatmul.bf16.gmra.mxu0 %v1229
    %v1259 = vpop.f32.mrf.mxu0
    %v1260 = vadd.f32 0.0, %v1259
    %v1261 = vpop.f32.mrf.mxu0
    %1262 = vdwg.mxu0
    %1263 = vmatpush.bf16.msra.mxu0 %v569
    %1264 = vmatpush.bf16.msra.mxu0 %v565
    %1265 = vmatpush.bf16.msra.mxu0 %v561
    %1266 = vmatpush.bf16.msra.mxu0 %v557
    %1267 = vmatpush.bf16.msra.mxu0 %v553
    %1268 = vmatpush.bf16.msra.mxu0 %v549
    %1269 = vmatpush.bf16.msra.mxu0 %v545
    %1270 = vmatpush.bf16.msra.mxu0 %v541
    %1271 = vmatmul.bf16.gmra.mxu0 %v1229
    %v1272 = vpop.f32.mrf.mxu0
    %v1273 = vadd.f32 0.0, %v1272
    %v1274 = vpop.f32.mrf.mxu0
    %1275 = vdwg.mxu0
    %1276 = vmatpush.bf16.msra.mxu0 %v570
    %1277 = vmatpush.bf16.msra.mxu0 %v566
    %1278 = vmatpush.bf16.msra.mxu0 %v562
    %1279 = vmatpush.bf16.msra.mxu0 %v558
    %1280 = vmatpush.bf16.msra.mxu0 %v554
    %1281 = vmatpush.bf16.msra.mxu0 %v550
    %1282 = vmatpush.bf16.msra.mxu0 %v546
    %1283 = vmatpush.bf16.msra.mxu0 %v542
    %1284 = vmatmul.bf16.gmra.mxu0 %v1229
    %v1285 = vpop.f32.mrf.mxu0
    %v1286 = vadd.f32 0.0, %v1285
    %v1287 = vpop.f32.mrf.mxu0
    %1288 = vdwg.mxu0
    %v1289 = vadd.f32 %v1233, %v1247
    %v1290 = vadd.f32 %v1234, %v1260
    %v1291 = vadd.f32 %v1235, %v1273
    %v1292 = vadd.f32 %v1236, %v1286
    %v1293 = vxor.u32 %v1289, 2147483648
    %v1294 = vmul.f32 %v1293, 1.442695
    %v1295 = vpow.pop %v1294
    %v1296 = vadd.f32 %v1295, 1.0
    %v1297 = vrcp.pop %v1296
    %v1298 = vmul.f32 %v1296, %v1297
    %v1299 = vsub.f32 1.0, %v1298
    %v1300 = vmul.f32 %v1297, %v1299
    %v1301 = vadd.f32 %v1297, %v1300
    %vm1302 = vweird.f32 %v1296
    %vm1303 = vweird.f32 %v1297
    %vm1304 = vmor %vm1302, %vm1303
    %v1305 = vsel %vm1304, %v1297, %v1301
    %v1306 = vand.u32 2147483647, %v1296
    %vm1307 = vcmp.eq.f32.partialorder %v1306, 8.507059e+37
    %v1308 = vand.u32 %v1296, 2147483648
    %v1309 = vor.u32 1.1754944e-38, %v1308
    %v1310 = vsel %vm1307, %v1309, %v1305
    %v1311 = vmul.f32 1.0, %v1310
    %v1312 = vxor.u32 %v1290, 2147483648
    %v1313 = vmul.f32 %v1312, 1.442695
    %v1314 = vpow.pop %v1313
    %v1315 = vadd.f32 %v1314, 1.0
    %v1316 = vrcp.pop %v1315
    %v1317 = vmul.f32 %v1315, %v1316
    %v1318 = vsub.f32 1.0, %v1317
    %v1319 = vmul.f32 %v1316, %v1318
    %v1320 = vadd.f32 %v1316, %v1319
    %vm1321 = vweird.f32 %v1315
    %vm1322 = vweird.f32 %v1316
    %vm1323 = vmor %vm1321, %vm1322
    %v1324 = vsel %vm1323, %v1316, %v1320
    %v1325 = vand.u32 2147483647, %v1315
    %vm1326 = vcmp.eq.f32.partialorder %v1325, 8.507059e+37
    %v1327 = vand.u32 %v1315, 2147483648
    %v1328 = vor.u32 1.1754944e-38, %v1327
    %v1329 = vsel %vm1326, %v1328, %v1324
    %v1330 = vmul.f32 1.0, %v1329
    %v1331 = vtanh.pop %v1291
    %v1332 = vxor.u32 %v1292, 2147483648
    %v1333 = vmul.f32 %v1332, 1.442695
    %v1334 = vpow.pop %v1333
    %v1335 = vadd.f32 %v1334, 1.0
    %v1336 = vrcp.pop %v1335
    %v1337 = vmul.f32 %v1335, %v1336
    %v1338 = vsub.f32 1.0, %v1337
    %v1339 = vmul.f32 %v1336, %v1338
    %v1340 = vadd.f32 %v1336, %v1339
    %vm1341 = vweird.f32 %v1335
    %vm1342 = vweird.f32 %v1336
    %vm1343 = vmor %vm1341, %vm1342
    %v1344 = vsel %vm1343, %v1336, %v1340
    %v1345 = vand.u32 2147483647, %v1335
    %vm1346 = vcmp.eq.f32.partialorder %v1345, 8.507059e+37
    %v1347 = vand.u32 %v1335, 2147483648
    %v1348 = vor.u32 1.1754944e-38, %v1347
    %v1349 = vsel %vm1346, %v1348, %v1344
    %v1350 = vmul.f32 1.0, %v1349
    %v1351 = vmul.f32 %v1330, %v1226
    %v1352 = vmul.f32 %v1311, %v1331
    %v1353 = vadd.f32 %v1351, %v1352
    %v1354 = vtanh.pop %v1353
    %v1355 = vmul.f32 %v1350, %v1354
    %v1356 = vpack.c.bf16 %v1355, %v1355
    %s1357 = scalar_lea.vmem [#allocation2], 20
    %1358 = vst [vmem:[%s1357] sm:$0xf] %v1356
    %s1359 = scalar_lea.vmem [#allocation3], 192
    %v1360 = vld [vmem:[%s1359] sm:$0xff]
    %v1361 = vld [vmem:[%s1359 + $0x8] sm:$0xff]
    %v1362 = vld [vmem:[%s1359 + $0x10] sm:$0xff]
    %v1363 = vld [vmem:[%s1359 + $0x18] sm:$0xff]
    %1364 = vmatpush.bf16.msra.mxu0 %v567
    %1365 = vmatpush.bf16.msra.mxu0 %v563
    %1366 = vmatpush.bf16.msra.mxu0 %v559
    %1367 = vmatpush.bf16.msra.mxu0 %v555
    %1368 = vmatpush.bf16.msra.mxu0 %v551
    %1369 = vmatpush.bf16.msra.mxu0 %v547
    %1370 = vmatpush.bf16.msra.mxu0 %v543
    %1371 = vmatpush.bf16.msra.mxu0 %v539
    %1372 = vmatmul.bf16.gmra.mxu0 %v1356
    %v1373 = vpop.f32.mrf.mxu0
    %v1374 = vadd.f32 0.0, %v1373
    %v1375 = vpop.f32.mrf.mxu0
    %1376 = vdwg.mxu0
    %1377 = vmatpush.bf16.msra.mxu0 %v568
    %1378 = vmatpush.bf16.msra.mxu0 %v564
    %1379 = vmatpush.bf16.msra.mxu0 %v560
    %1380 = vmatpush.bf16.msra.mxu0 %v556
    %1381 = vmatpush.bf16.msra.mxu0 %v552
    %1382 = vmatpush.bf16.msra.mxu0 %v548
    %1383 = vmatpush.bf16.msra.mxu0 %v544
    %1384 = vmatpush.bf16.msra.mxu0 %v540
    %1385 = vmatmul.bf16.gmra.mxu0 %v1356
    %v1386 = vpop.f32.mrf.mxu0
    %v1387 = vadd.f32 0.0, %v1386
    %v1388 = vpop.f32.mrf.mxu0
    %1389 = vdwg.mxu0
    %1390 = vmatpush.bf16.msra.mxu0 %v569
    %1391 = vmatpush.bf16.msra.mxu0 %v565
    %1392 = vmatpush.bf16.msra.mxu0 %v561
    %1393 = vmatpush.bf16.msra.mxu0 %v557
    %1394 = vmatpush.bf16.msra.mxu0 %v553
    %1395 = vmatpush.bf16.msra.mxu0 %v549
    %1396 = vmatpush.bf16.msra.mxu0 %v545
    %1397 = vmatpush.bf16.msra.mxu0 %v541
    %1398 = vmatmul.bf16.gmra.mxu0 %v1356
    %v1399 = vpop.f32.mrf.mxu0
    %v1400 = vadd.f32 0.0, %v1399
    %v1401 = vpop.f32.mrf.mxu0
    %1402 = vdwg.mxu0
    %1403 = vmatpush.bf16.msra.mxu0 %v570
    %1404 = vmatpush.bf16.msra.mxu0 %v566
    %1405 = vmatpush.bf16.msra.mxu0 %v562
    %1406 = vmatpush.bf16.msra.mxu0 %v558
    %1407 = vmatpush.bf16.msra.mxu0 %v554
    %1408 = vmatpush.bf16.msra.mxu0 %v550
    %1409 = vmatpush.bf16.msra.mxu0 %v546
    %1410 = vmatpush.bf16.msra.mxu0 %v542
    %1411 = vmatmul.bf16.gmra.mxu0 %v1356
    %v1412 = vpop.f32.mrf.mxu0
    %v1413 = vadd.f32 0.0, %v1412
    %v1414 = vpop.f32.mrf.mxu0
    %1415 = vdwg.mxu0
    %v1416 = vadd.f32 %v1360, %v1374
    %v1417 = vadd.f32 %v1361, %v1387
    %v1418 = vadd.f32 %v1362, %v1400
    %v1419 = vadd.f32 %v1363, %v1413
    %v1420 = vxor.u32 %v1416, 2147483648
    %v1421 = vmul.f32 %v1420, 1.442695
    %v1422 = vpow.pop %v1421
    %v1423 = vadd.f32 %v1422, 1.0
    %v1424 = vrcp.pop %v1423
    %v1425 = vmul.f32 %v1423, %v1424
    %v1426 = vsub.f32 1.0, %v1425
    %v1427 = vmul.f32 %v1424, %v1426
    %v1428 = vadd.f32 %v1424, %v1427
    %vm1429 = vweird.f32 %v1423
    %vm1430 = vweird.f32 %v1424
    %vm1431 = vmor %vm1429, %vm1430
    %v1432 = vsel %vm1431, %v1424, %v1428
    %v1433 = vand.u32 2147483647, %v1423
    %vm1434 = vcmp.eq.f32.partialorder %v1433, 8.507059e+37
    %v1435 = vand.u32 %v1423, 2147483648
    %v1436 = vor.u32 1.1754944e-38, %v1435
    %v1437 = vsel %vm1434, %v1436, %v1432
    %v1438 = vmul.f32 1.0, %v1437
    %v1439 = vxor.u32 %v1417, 2147483648
    %v1440 = vmul.f32 %v1439, 1.442695
    %v1441 = vpow.pop %v1440
    %v1442 = vadd.f32 %v1441, 1.0
    %v1443 = vrcp.pop %v1442
    %v1444 = vmul.f32 %v1442, %v1443
    %v1445 = vsub.f32 1.0, %v1444
    %v1446 = vmul.f32 %v1443, %v1445
    %v1447 = vadd.f32 %v1443, %v1446
    %vm1448 = vweird.f32 %v1442
    %vm1449 = vweird.f32 %v1443
    %vm1450 = vmor %vm1448, %vm1449
    %v1451 = vsel %vm1450, %v1443, %v1447
    %v1452 = vand.u32 2147483647, %v1442
    %vm1453 = vcmp.eq.f32.partialorder %v1452, 8.507059e+37
    %v1454 = vand.u32 %v1442, 2147483648
    %v1455 = vor.u32 1.1754944e-38, %v1454
    %v1456 = vsel %vm1453, %v1455, %v1451
    %v1457 = vmul.f32 1.0, %v1456
    %v1458 = vtanh.pop %v1418
    %v1459 = vxor.u32 %v1419, 2147483648
    %v1460 = vmul.f32 %v1459, 1.442695
    %v1461 = vpow.pop %v1460
    %v1462 = vadd.f32 %v1461, 1.0
    %v1463 = vrcp.pop %v1462
    %v1464 = vmul.f32 %v1462, %v1463
    %v1465 = vsub.f32 1.0, %v1464
    %v1466 = vmul.f32 %v1463, %v1465
    %v1467 = vadd.f32 %v1463, %v1466
    %vm1468 = vweird.f32 %v1462
    %vm1469 = vweird.f32 %v1463
    %vm1470 = vmor %vm1468, %vm1469
    %v1471 = vsel %vm1470, %v1463, %v1467
    %v1472 = vand.u32 2147483647, %v1462
    %vm1473 = vcmp.eq.f32.partialorder %v1472, 8.507059e+37
    %v1474 = vand.u32 %v1462, 2147483648
    %v1475 = vor.u32 1.1754944e-38, %v1474
    %v1476 = vsel %vm1473, %v1475, %v1471
    %v1477 = vmul.f32 1.0, %v1476
    %v1478 = vmul.f32 %v1457, %v1353
    %v1479 = vmul.f32 %v1438, %v1458
    %v1480 = vadd.f32 %v1478, %v1479
    %v1481 = vtanh.pop %v1480
    %v1482 = vmul.f32 %v1477, %v1481
    %v1483 = vpack.c.bf16 %v1482, %v1482
    %s1484 = scalar_lea.vmem [#allocation2], 24
    %1485 = vst [vmem:[%s1484] sm:$0xf] %v1483
    %s1486 = scalar_lea.vmem [#allocation3], 224
    %v1487 = vld [vmem:[%s1486] sm:$0xff]
    %v1488 = vld [vmem:[%s1486 + $0x8] sm:$0xff]
    %v1489 = vld [vmem:[%s1486 + $0x10] sm:$0xff]
    %v1490 = vld [vmem:[%s1486 + $0x18] sm:$0xff]
    %1491 = vmatpush.bf16.msra.mxu0 %v567
    %1492 = vmatpush.bf16.msra.mxu0 %v563
    %1493 = vmatpush.bf16.msra.mxu0 %v559
    %1494 = vmatpush.bf16.msra.mxu0 %v555
    %1495 = vmatpush.bf16.msra.mxu0 %v551
    %1496 = vmatpush.bf16.msra.mxu0 %v547
    %1497 = vmatpush.bf16.msra.mxu0 %v543
    %1498 = vmatpush.bf16.msra.mxu0 %v539
    %1499 = vmatmul.bf16.gmra.mxu0 %v1483
    %v1500 = vpop.f32.mrf.mxu0
    %v1501 = vadd.f32 0.0, %v1500
    %v1502 = vpop.f32.mrf.mxu0
    %1503 = vdwg.mxu0
    %1504 = vmatpush.bf16.msra.mxu0 %v568
    %1505 = vmatpush.bf16.msra.mxu0 %v564
    %1506 = vmatpush.bf16.msra.mxu0 %v560
    %1507 = vmatpush.bf16.msra.mxu0 %v556
    %1508 = vmatpush.bf16.msra.mxu0 %v552
    %1509 = vmatpush.bf16.msra.mxu0 %v548
    %1510 = vmatpush.bf16.msra.mxu0 %v544
    %1511 = vmatpush.bf16.msra.mxu0 %v540
    %1512 = vmatmul.bf16.gmra.mxu0 %v1483
    %v1513 = vpop.f32.mrf.mxu0
    %v1514 = vadd.f32 0.0, %v1513
    %v1515 = vpop.f32.mrf.mxu0
    %1516 = vdwg.mxu0
    %1517 = vmatpush.bf16.msra.mxu0 %v569
    %1518 = vmatpush.bf16.msra.mxu0 %v565
    %1519 = vmatpush.bf16.msra.mxu0 %v561
    %1520 = vmatpush.bf16.msra.mxu0 %v557
    %1521 = vmatpush.bf16.msra.mxu0 %v553
    %1522 = vmatpush.bf16.msra.mxu0 %v549
    %1523 = vmatpush.bf16.msra.mxu0 %v545
    %1524 = vmatpush.bf16.msra.mxu0 %v541
    %1525 = vmatmul.bf16.gmra.mxu0 %v1483
    %v1526 = vpop.f32.mrf.mxu0
    %v1527 = vadd.f32 0.0, %v1526
    %v1528 = vpop.f32.mrf.mxu0
    %1529 = vdwg.mxu0
    %1530 = vmatpush.bf16.msra.mxu0 %v570
    %1531 = vmatpush.bf16.msra.mxu0 %v566
    %1532 = vmatpush.bf16.msra.mxu0 %v562
    %1533 = vmatpush.bf16.msra.mxu0 %v558
    %1534 = vmatpush.bf16.msra.mxu0 %v554
    %1535 = vmatpush.bf16.msra.mxu0 %v550
    %1536 = vmatpush.bf16.msra.mxu0 %v546
    %1537 = vmatpush.bf16.msra.mxu0 %v542
    %1538 = vmatmul.bf16.gmra.mxu0 %v1483
    %v1539 = vpop.f32.mrf.mxu0
    %v1540 = vadd.f32 0.0, %v1539
    %v1541 = vpop.f32.mrf.mxu0
    %1542 = vdwg.mxu0
    %v1543 = vadd.f32 %v1487, %v1501
    %v1544 = vadd.f32 %v1488, %v1514
    %v1545 = vadd.f32 %v1489, %v1527
    %v1546 = vadd.f32 %v1490, %v1540
    %v1547 = vxor.u32 %v1543, 2147483648
    %v1548 = vmul.f32 %v1547, 1.442695
    %v1549 = vpow.pop %v1548
    %v1550 = vadd.f32 %v1549, 1.0
    %v1551 = vrcp.pop %v1550
    %v1552 = vmul.f32 %v1550, %v1551
    %v1553 = vsub.f32 1.0, %v1552
    %v1554 = vmul.f32 %v1551, %v1553
    %v1555 = vadd.f32 %v1551, %v1554
    %vm1556 = vweird.f32 %v1550
    %vm1557 = vweird.f32 %v1551
    %vm1558 = vmor %vm1556, %vm1557
    %v1559 = vsel %vm1558, %v1551, %v1555
    %v1560 = vand.u32 2147483647, %v1550
    %vm1561 = vcmp.eq.f32.partialorder %v1560, 8.507059e+37
    %v1562 = vand.u32 %v1550, 2147483648
    %v1563 = vor.u32 1.1754944e-38, %v1562
    %v1564 = vsel %vm1561, %v1563, %v1559
    %v1565 = vmul.f32 1.0, %v1564
    %v1566 = vxor.u32 %v1544, 2147483648
    %v1567 = vmul.f32 %v1566, 1.442695
    %v1568 = vpow.pop %v1567
    %v1569 = vadd.f32 %v1568, 1.0
    %v1570 = vrcp.pop %v1569
    %v1571 = vmul.f32 %v1569, %v1570
    %v1572 = vsub.f32 1.0, %v1571
    %v1573 = vmul.f32 %v1570, %v1572
    %v1574 = vadd.f32 %v1570, %v1573
    %vm1575 = vweird.f32 %v1569
    %vm1576 = vweird.f32 %v1570
    %vm1577 = vmor %vm1575, %vm1576
    %v1578 = vsel %vm1577, %v1570, %v1574
    %v1579 = vand.u32 2147483647, %v1569
    %vm1580 = vcmp.eq.f32.partialorder %v1579, 8.507059e+37
    %v1581 = vand.u32 %v1569, 2147483648
    %v1582 = vor.u32 1.1754944e-38, %v1581
    %v1583 = vsel %vm1580, %v1582, %v1578
    %v1584 = vmul.f32 1.0, %v1583
    %v1585 = vtanh.pop %v1545
    %v1586 = vxor.u32 %v1546, 2147483648
    %v1587 = vmul.f32 %v1586, 1.442695
    %v1588 = vpow.pop %v1587
    %v1589 = vadd.f32 %v1588, 1.0
    %v1590 = vrcp.pop %v1589
    %v1591 = vmul.f32 %v1589, %v1590
    %v1592 = vsub.f32 1.0, %v1591
    %v1593 = vmul.f32 %v1590, %v1592
    %v1594 = vadd.f32 %v1590, %v1593
    %vm1595 = vweird.f32 %v1589
    %vm1596 = vweird.f32 %v1590
    %vm1597 = vmor %vm1595, %vm1596
    %v1598 = vsel %vm1597, %v1590, %v1594
    %v1599 = vand.u32 2147483647, %v1589
    %vm1600 = vcmp.eq.f32.partialorder %v1599, 8.507059e+37
    %v1601 = vand.u32 %v1589, 2147483648
    %v1602 = vor.u32 1.1754944e-38, %v1601
    %v1603 = vsel %vm1600, %v1602, %v1598
    %v1604 = vmul.f32 1.0, %v1603
    %v1605 = vmul.f32 %v1584, %v1480
    %v1606 = vmul.f32 %v1565, %v1585
    %v1607 = vadd.f32 %v1605, %v1606
    %v1608 = vtanh.pop %v1607
    %v1609 = vmul.f32 %v1604, %v1608
    %v1610 = vpack.c.bf16 %v1609, %v1609
    %s1611 = scalar_lea.vmem [#allocation2], 28
    %1612 = vst [vmem:[%s1611] sm:$0xf] %v1610
    %v1613 = vld [vmem:[#allocation12] sm:$0xff]
    %v1614 = vld [vmem:[#allocation12 + $0x8] sm:$0xff]
    %v1615 = vld [vmem:[#allocation12 + $0x10] sm:$0xff]
    %v1616 = vld [vmem:[#allocation12 + $0x18] sm:$0xff]
    %v1617 = vld [vmem:[#allocation12 + $0x20] sm:$0xff]
    %v1618 = vld [vmem:[#allocation12 + $0x28] sm:$0xff]
    %v1619 = vld [vmem:[#allocation12 + $0x30] sm:$0xff]
    %v1620 = vld [vmem:[#allocation12 + $0x38] sm:$0xff]
    %v1621 = vld [vmem:[#allocation12 + $0x40] sm:$0xff]
    %v1622 = vld [vmem:[#allocation12 + $0x48] sm:$0xff]
    %v1623 = vld [vmem:[#allocation12 + $0x50] sm:$0xff]
    %v1624 = vld [vmem:[#allocation12 + $0x58] sm:$0xff]
    %v1625 = vld [vmem:[#allocation12 + $0x60] sm:$0xff]
    %v1626 = vld [vmem:[#allocation12 + $0x68] sm:$0xff]
    %v1627 = vld [vmem:[#allocation12 + $0x70] sm:$0xff]
    %v1628 = vld [vmem:[#allocation12 + $0x78] sm:$0xff]
    %v1629 = vld [vmem:[#allocation12 + $0x80] sm:$0xff]
    %v1630 = vld [vmem:[#allocation12 + $0x88] sm:$0xff]
    %v1631 = vld [vmem:[#allocation12 + $0x90] sm:$0xff]
    %v1632 = vld [vmem:[#allocation12 + $0x98] sm:$0xff]
    %v1633 = vld [vmem:[#allocation12 + $0xa0] sm:$0xff]
    %v1634 = vld [vmem:[#allocation12 + $0xa8] sm:$0xff]
    %v1635 = vld [vmem:[#allocation12 + $0xb0] sm:$0xff]
    %v1636 = vld [vmem:[#allocation12 + $0xb8] sm:$0xff]
    %v1637 = vld [vmem:[#allocation12 + $0xc0] sm:$0xff]
    %v1638 = vld [vmem:[#allocation12 + $0xc8] sm:$0xff]
    %v1639 = vld [vmem:[#allocation12 + $0xd0] sm:$0xff]
    %v1640 = vld [vmem:[#allocation12 + $0xd8] sm:$0xff]
    %v1641 = vld [vmem:[#allocation12 + $0xe0] sm:$0xff]
    %v1642 = vld [vmem:[#allocation12 + $0xe8] sm:$0xff]
    %v1643 = vld [vmem:[#allocation12 + $0xf0] sm:$0xff]
    %v1644 = vld [vmem:[#allocation12 + $0xf8] sm:$0xff]
    %v1645 = vld [vmem:[#allocation13] sm:$0xff]
    %v1646 = vld [vmem:[#allocation13 + $0x8] sm:$0xff]
    %v1647 = vld [vmem:[#allocation13 + $0x10] sm:$0xff]
    %v1648 = vld [vmem:[#allocation13 + $0x18] sm:$0xff]
    %v1649 = vld [vmem:[#allocation13 + $0x20] sm:$0xff]
    %v1650 = vld [vmem:[#allocation13 + $0x28] sm:$0xff]
    %v1651 = vld [vmem:[#allocation13 + $0x30] sm:$0xff]
    %v1652 = vld [vmem:[#allocation13 + $0x38] sm:$0xff]
    %v1653 = vld [vmem:[#allocation13 + $0x40] sm:$0xff]
    %v1654 = vld [vmem:[#allocation13 + $0x48] sm:$0xff]
    %v1655 = vld [vmem:[#allocation13 + $0x50] sm:$0xff]
    %v1656 = vld [vmem:[#allocation13 + $0x58] sm:$0xff]
    %v1657 = vld [vmem:[#allocation13 + $0x60] sm:$0xff]
    %v1658 = vld [vmem:[#allocation13 + $0x68] sm:$0xff]
    %v1659 = vld [vmem:[#allocation13 + $0x70] sm:$0xff]
    %v1660 = vld [vmem:[#allocation13 + $0x78] sm:$0xff]
    %v1661 = vld [vmem:[#allocation13 + $0x80] sm:$0xff]
    %v1662 = vld [vmem:[#allocation13 + $0x88] sm:$0xff]
    %v1663 = vld [vmem:[#allocation13 + $0x90] sm:$0xff]
    %v1664 = vld [vmem:[#allocation13 + $0x98] sm:$0xff]
    %v1665 = vld [vmem:[#allocation13 + $0xa0] sm:$0xff]
    %v1666 = vld [vmem:[#allocation13 + $0xa8] sm:$0xff]
    %v1667 = vld [vmem:[#allocation13 + $0xb0] sm:$0xff]
    %v1668 = vld [vmem:[#allocation13 + $0xb8] sm:$0xff]
    %v1669 = vld [vmem:[#allocation13 + $0xc0] sm:$0xff]
    %v1670 = vld [vmem:[#allocation13 + $0xc8] sm:$0xff]
    %v1671 = vld [vmem:[#allocation13 + $0xd0] sm:$0xff]
    %v1672 = vld [vmem:[#allocation13 + $0xd8] sm:$0xff]
    %v1673 = vld [vmem:[#allocation13 + $0xe0] sm:$0xff]
    %v1674 = vld [vmem:[#allocation13 + $0xe8] sm:$0xff]
    %v1675 = vld [vmem:[#allocation13 + $0xf0] sm:$0xff]
    %v1676 = vld [vmem:[#allocation13 + $0xf8] sm:$0xff]
    %v1677 = vld [vmem:[%s6] sm:$0xf]
    %v1678 = vld [vmem:[#allocation2] sm:$0xf]
    %v1679 = vld [vmem:[#allocation2 + $0x4] sm:$0xf]
    %v1680 = vld [vmem:[#allocation2 + $0x8] sm:$0xf]
    %v1681 = vld [vmem:[#allocation2 + $0xc] sm:$0xf]
    %v1682 = vld [vmem:[#allocation2 + $0x10] sm:$0xf]
    %v1683 = vld [vmem:[#allocation2 + $0x14] sm:$0xf]
    %v1684 = vld [vmem:[#allocation2 + $0x18] sm:$0xf]
    %v1685 = vld [vmem:[#allocation2 + $0x1c] sm:$0xf]
    %v1687 = vperm.slane %v1677, 0
    %v1688 = vperm.slane %v1677, 1
    %v1689 = vperm.slane %v1677, 2
    %v1690 = vperm.slane %v1677, 3
    %v1703 = vunpack.c.l.b16 %v1678
    %v1704 = vunpack.c.l.b16 %v1679
    %v1705 = vunpack.c.l.b16 %v1680
    %v1706 = vunpack.c.l.b16 %v1681
    %v1707 = vunpack.c.l.b16 %v1682
    %v1708 = vunpack.c.l.b16 %v1683
    %v1709 = vunpack.c.l.b16 %v1684
    %v1710 = vunpack.c.l.b16 %v1685
    %v1711 = vpack.c.b16 %v1704, %v1703
    %v1712 = vpack.c.b16 %v1706, %v1705
    %v1713 = vpack.c.b16 %v1708, %v1707
    %v1714 = vpack.c.b16 %v1710, %v1709
    %v1751 = vunpack.c.l.b16 %v1613
    %v1752 = vunpack.c.h.b16 %v1613
    %v1753 = vunpack.c.l.b16 %v1614
    %v1754 = vunpack.c.h.b16 %v1614
    %v1755 = vunpack.c.l.b16 %v1615
    %v1756 = vunpack.c.h.b16 %v1615
    %v1757 = vunpack.c.l.b16 %v1616
    %v1758 = vunpack.c.h.b16 %v1616
    %v1759 = vunpack.c.l.b16 %v1617
    %v1760 = vunpack.c.h.b16 %v1617
    %v1761 = vunpack.c.l.b16 %v1618
    %v1762 = vunpack.c.h.b16 %v1618
    %v1763 = vunpack.c.l.b16 %v1619
    %v1764 = vunpack.c.h.b16 %v1619
    %v1765 = vunpack.c.l.b16 %v1620
    %v1766 = vunpack.c.h.b16 %v1620
    %v1767 = vunpack.c.l.b16 %v1621
    %v1768 = vunpack.c.h.b16 %v1621
    %v1769 = vunpack.c.l.b16 %v1622
    %v1770 = vunpack.c.h.b16 %v1622
    %v1771 = vunpack.c.l.b16 %v1623
    %v1772 = vunpack.c.h.b16 %v1623
    %v1773 = vunpack.c.l.b16 %v1624
    %v1774 = vunpack.c.h.b16 %v1624
    %v1775 = vunpack.c.l.b16 %v1625
    %v1776 = vunpack.c.h.b16 %v1625
    %v1777 = vunpack.c.l.b16 %v1626
    %v1778 = vunpack.c.h.b16 %v1626
    %v1779 = vunpack.c.l.b16 %v1627
    %v1780 = vunpack.c.h.b16 %v1627
    %v1781 = vunpack.c.l.b16 %v1628
    %v1782 = vunpack.c.h.b16 %v1628
    %v1783 = vunpack.c.l.b16 %v1629
    %v1784 = vunpack.c.h.b16 %v1629
    %v1785 = vunpack.c.l.b16 %v1630
    %v1786 = vunpack.c.h.b16 %v1630
    %v1787 = vunpack.c.l.b16 %v1631
    %v1788 = vunpack.c.h.b16 %v1631
    %v1789 = vunpack.c.l.b16 %v1632
    %v1790 = vunpack.c.h.b16 %v1632
    %v1791 = vunpack.c.l.b16 %v1633
    %v1792 = vunpack.c.h.b16 %v1633
    %v1793 = vunpack.c.l.b16 %v1634
    %v1794 = vunpack.c.h.b16 %v1634
    %v1795 = vunpack.c.l.b16 %v1635
    %v1796 = vunpack.c.h.b16 %v1635
    %v1797 = vunpack.c.l.b16 %v1636
    %v1798 = vunpack.c.h.b16 %v1636
    %v1799 = vunpack.c.l.b16 %v1637
    %v1800 = vunpack.c.h.b16 %v1637
    %v1801 = vunpack.c.l.b16 %v1638
    %v1802 = vunpack.c.h.b16 %v1638
    %v1803 = vunpack.c.l.b16 %v1639
    %v1804 = vunpack.c.h.b16 %v1639
    %v1805 = vunpack.c.l.b16 %v1640
    %v1806 = vunpack.c.h.b16 %v1640
    %v1807 = vunpack.c.l.b16 %v1641
    %v1808 = vunpack.c.h.b16 %v1641
    %v1809 = vunpack.c.l.b16 %v1642
    %v1810 = vunpack.c.h.b16 %v1642
    %v1811 = vunpack.c.l.b16 %v1643
    %v1812 = vunpack.c.h.b16 %v1643
    %v1813 = vunpack.c.l.b16 %v1644
    %v1814 = vunpack.c.h.b16 %v1644
    %v1815 = vpack.c.b16 %v1755, %v1751
    %v1816 = vpack.c.b16 %v1756, %v1752
    %v1817 = vpack.c.b16 %v1757, %v1753
    %v1818 = vpack.c.b16 %v1758, %v1754
    %v1819 = vpack.c.b16 %v1763, %v1759
    %v1820 = vpack.c.b16 %v1764, %v1760
    %v1821 = vpack.c.b16 %v1765, %v1761
    %v1822 = vpack.c.b16 %v1766, %v1762
    %v1823 = vpack.c.b16 %v1771, %v1767
    %v1824 = vpack.c.b16 %v1772, %v1768
    %v1825 = vpack.c.b16 %v1773, %v1769
    %v1826 = vpack.c.b16 %v1774, %v1770
    %v1827 = vpack.c.b16 %v1779, %v1775
    %v1828 = vpack.c.b16 %v1780, %v1776
    %v1829 = vpack.c.b16 %v1781, %v1777
    %v1830 = vpack.c.b16 %v1782, %v1778
    %v1831 = vpack.c.b16 %v1787, %v1783
    %v1832 = vpack.c.b16 %v1788, %v1784
    %v1833 = vpack.c.b16 %v1789, %v1785
    %v1834 = vpack.c.b16 %v1790, %v1786
    %v1835 = vpack.c.b16 %v1795, %v1791
    %v1836 = vpack.c.b16 %v1796, %v1792
    %v1837 = vpack.c.b16 %v1797, %v1793
    %v1838 = vpack.c.b16 %v1798, %v1794
    %v1839 = vpack.c.b16 %v1803, %v1799
    %v1840 = vpack.c.b16 %v1804, %v1800
    %v1841 = vpack.c.b16 %v1805, %v1801
    %v1842 = vpack.c.b16 %v1806, %v1802
    %v1843 = vpack.c.b16 %v1811, %v1807
    %v1844 = vpack.c.b16 %v1812, %v1808
    %v1845 = vpack.c.b16 %v1813, %v1809
    %v1846 = vpack.c.b16 %v1814, %v1810
    %1879 = vmatpush.bf16.msra.mxu0 %v1843
    %1880 = vmatpush.bf16.msra.mxu0 %v1839
    %1881 = vmatpush.bf16.msra.mxu0 %v1835
    %1882 = vmatpush.bf16.msra.mxu0 %v1831
    %1883 = vmatpush.bf16.msra.mxu0 %v1827
    %1884 = vmatpush.bf16.msra.mxu0 %v1823
    %1885 = vmatpush.bf16.msra.mxu0 %v1819
    %1886 = vmatpush.bf16.msra.mxu0 %v1815
    %1887 = vmatmul.bf16.gmra.mxu0 %v1711
    %v1888 = vpop.f32.mrf.mxu0
    %v1889 = vadd.f32 %v1687, %v1888
    %v1890 = vpop.f32.mrf.mxu0
    %v1891 = vadd.f32 %v1687, %v1890
    %1892 = vmatmul.bf16.gmra.mxu0 %v1712
    %v1893 = vpop.f32.mrf.mxu0
    %v1894 = vadd.f32 %v1687, %v1893
    %v1895 = vpop.f32.mrf.mxu0
    %v1896 = vadd.f32 %v1687, %v1895
    %1897 = vmatmul.bf16.gmra.mxu0 %v1713
    %v1898 = vpop.f32.mrf.mxu0
    %v1899 = vadd.f32 %v1687, %v1898
    %v1900 = vpop.f32.mrf.mxu0
    %v1901 = vadd.f32 %v1687, %v1900
    %1902 = vmatmul.bf16.gmra.mxu0 %v1714
    %v1903 = vpop.f32.mrf.mxu0
    %v1904 = vadd.f32 %v1687, %v1903
    %v1905 = vpop.f32.mrf.mxu0
    %v1906 = vadd.f32 %v1687, %v1905
    %1907 = vdwg.mxu0
    %1908 = vmatpush.bf16.msra.mxu0 %v1844
    %1909 = vmatpush.bf16.msra.mxu0 %v1840
    %1910 = vmatpush.bf16.msra.mxu0 %v1836
    %1911 = vmatpush.bf16.msra.mxu0 %v1832
    %1912 = vmatpush.bf16.msra.mxu0 %v1828
    %1913 = vmatpush.bf16.msra.mxu0 %v1824
    %1914 = vmatpush.bf16.msra.mxu0 %v1820
    %1915 = vmatpush.bf16.msra.mxu0 %v1816
    %1916 = vmatmul.bf16.gmra.mxu0 %v1711
    %v1917 = vpop.f32.mrf.mxu0
    %v1918 = vadd.f32 %v1688, %v1917
    %v1919 = vpop.f32.mrf.mxu0
    %v1920 = vadd.f32 %v1688, %v1919
    %1921 = vmatmul.bf16.gmra.mxu0 %v1712
    %v1922 = vpop.f32.mrf.mxu0
    %v1923 = vadd.f32 %v1688, %v1922
    %v1924 = vpop.f32.mrf.mxu0
    %v1925 = vadd.f32 %v1688, %v1924
    %1926 = vmatmul.bf16.gmra.mxu0 %v1713
    %v1927 = vpop.f32.mrf.mxu0
    %v1928 = vadd.f32 %v1688, %v1927
    %v1929 = vpop.f32.mrf.mxu0
    %v1930 = vadd.f32 %v1688, %v1929
    %1931 = vmatmul.bf16.gmra.mxu0 %v1714
    %v1932 = vpop.f32.mrf.mxu0
    %v1933 = vadd.f32 %v1688, %v1932
    %v1934 = vpop.f32.mrf.mxu0
    %v1935 = vadd.f32 %v1688, %v1934
    %1936 = vdwg.mxu0
    %1937 = vmatpush.bf16.msra.mxu0 %v1845
    %1938 = vmatpush.bf16.msra.mxu0 %v1841
    %1939 = vmatpush.bf16.msra.mxu0 %v1837
    %1940 = vmatpush.bf16.msra.mxu0 %v1833
    %1941 = vmatpush.bf16.msra.mxu0 %v1829
    %1942 = vmatpush.bf16.msra.mxu0 %v1825
    %1943 = vmatpush.bf16.msra.mxu0 %v1821
    %1944 = vmatpush.bf16.msra.mxu0 %v1817
    %1945 = vmatmul.bf16.gmra.mxu0 %v1711
    %v1946 = vpop.f32.mrf.mxu0
    %v1947 = vadd.f32 %v1689, %v1946
    %v1948 = vpop.f32.mrf.mxu0
    %v1949 = vadd.f32 %v1689, %v1948
    %1950 = vmatmul.bf16.gmra.mxu0 %v1712
    %v1951 = vpop.f32.mrf.mxu0
    %v1952 = vadd.f32 %v1689, %v1951
    %v1953 = vpop.f32.mrf.mxu0
    %v1954 = vadd.f32 %v1689, %v1953
    %1955 = vmatmul.bf16.gmra.mxu0 %v1713
    %v1956 = vpop.f32.mrf.mxu0
    %v1957 = vadd.f32 %v1689, %v1956
    %v1958 = vpop.f32.mrf.mxu0
    %v1959 = vadd.f32 %v1689, %v1958
    %1960 = vmatmul.bf16.gmra.mxu0 %v1714
    %v1961 = vpop.f32.mrf.mxu0
    %v1962 = vadd.f32 %v1689, %v1961
    %v1963 = vpop.f32.mrf.mxu0
    %v1964 = vadd.f32 %v1689, %v1963
    %1965 = vdwg.mxu0
    %1966 = vmatpush.bf16.msra.mxu0 %v1846
    %1967 = vmatpush.bf16.msra.mxu0 %v1842
    %1968 = vmatpush.bf16.msra.mxu0 %v1838
    %1969 = vmatpush.bf16.msra.mxu0 %v1834
    %1970 = vmatpush.bf16.msra.mxu0 %v1830
    %1971 = vmatpush.bf16.msra.mxu0 %v1826
    %1972 = vmatpush.bf16.msra.mxu0 %v1822
    %1973 = vmatpush.bf16.msra.mxu0 %v1818
    %1974 = vmatmul.bf16.gmra.mxu0 %v1711
    %v1975 = vpop.f32.mrf.mxu0
    %v1976 = vadd.f32 %v1690, %v1975
    %v1977 = vpop.f32.mrf.mxu0
    %v1978 = vadd.f32 %v1690, %v1977
    %1979 = vmatmul.bf16.gmra.mxu0 %v1712
    %v1980 = vpop.f32.mrf.mxu0
    %v1981 = vadd.f32 %v1690, %v1980
    %v1982 = vpop.f32.mrf.mxu0
    %v1983 = vadd.f32 %v1690, %v1982
    %1984 = vmatmul.bf16.gmra.mxu0 %v1713
    %v1985 = vpop.f32.mrf.mxu0
    %v1986 = vadd.f32 %v1690, %v1985
    %v1987 = vpop.f32.mrf.mxu0
    %v1988 = vadd.f32 %v1690, %v1987
    %1989 = vmatmul.bf16.gmra.mxu0 %v1714
    %v1990 = vpop.f32.mrf.mxu0
    %v1991 = vadd.f32 %v1690, %v1990
    %v1992 = vpop.f32.mrf.mxu0
    %v1993 = vadd.f32 %v1690, %v1992
    %1994 = vdwg.mxu0
    %1995 = vst [vmem:[#allocation3] sm:$0xff] %v1889
    %1996 = vst [vmem:[#allocation3 + $0x8] sm:$0xff] %v1918
    %1997 = vst [vmem:[#allocation3 + $0x10] sm:$0xff] %v1947
    %1998 = vst [vmem:[#allocation3 + $0x18] sm:$0xff] %v1976
    %1999 = vst [vmem:[#allocation3 + $0x20] sm:$0xff] %v1891
    %2000 = vst [vmem:[#allocation3 + $0x28] sm:$0xff] %v1920
    %2001 = vst [vmem:[#allocation3 + $0x30] sm:$0xff] %v1949
    %2002 = vst [vmem:[#allocation3 + $0x38] sm:$0xff] %v1978
    %2003 = vst [vmem:[#allocation3 + $0x40] sm:$0xff] %v1894
    %2004 = vst [vmem:[#allocation3 + $0x48] sm:$0xff] %v1923
    %2005 = vst [vmem:[#allocation3 + $0x50] sm:$0xff] %v1952
    %2006 = vst [vmem:[#allocation3 + $0x58] sm:$0xff] %v1981
    %2007 = vst [vmem:[#allocation3 + $0x60] sm:$0xff] %v1896
    %2008 = vst [vmem:[#allocation3 + $0x68] sm:$0xff] %v1925
    %2009 = vst [vmem:[#allocation3 + $0x70] sm:$0xff] %v1954
    %2010 = vst [vmem:[#allocation3 + $0x78] sm:$0xff] %v1983
    %2011 = vst [vmem:[#allocation3 + $0x80] sm:$0xff] %v1899
    %2012 = vst [vmem:[#allocation3 + $0x88] sm:$0xff] %v1928
    %2013 = vst [vmem:[#allocation3 + $0x90] sm:$0xff] %v1957
    %2014 = vst [vmem:[#allocation3 + $0x98] sm:$0xff] %v1986
    %2015 = vst [vmem:[#allocation3 + $0xa0] sm:$0xff] %v1901
    %2016 = vst [vmem:[#allocation3 + $0xa8] sm:$0xff] %v1930
    %2017 = vst [vmem:[#allocation3 + $0xb0] sm:$0xff] %v1959
    %2018 = vst [vmem:[#allocation3 + $0xb8] sm:$0xff] %v1988
    %2019 = vst [vmem:[#allocation3 + $0xc0] sm:$0xff] %v1904
    %2020 = vst [vmem:[#allocation3 + $0xc8] sm:$0xff] %v1933
    %2021 = vst [vmem:[#allocation3 + $0xd0] sm:$0xff] %v1962
    %2022 = vst [vmem:[#allocation3 + $0xd8] sm:$0xff] %v1991
    %2023 = vst [vmem:[#allocation3 + $0xe0] sm:$0xff] %v1906
    %2024 = vst [vmem:[#allocation3 + $0xe8] sm:$0xff] %v1935
    %2025 = vst [vmem:[#allocation3 + $0xf0] sm:$0xff] %v1964
    %2026 = vst [vmem:[#allocation3 + $0xf8] sm:$0xff] %v1993
    %v2027 = vld [vmem:[#allocation3] sm:$0xff]
    %v2028 = vld [vmem:[#allocation3 + $0x8] sm:$0xff]
    %v2029 = vld [vmem:[#allocation3 + $0x10] sm:$0xff]
    %v2030 = vld [vmem:[#allocation3 + $0x18] sm:$0xff]
    %v2063 = vunpack.c.l.b16 %v1645
    %v2064 = vunpack.c.h.b16 %v1645
    %v2065 = vunpack.c.l.b16 %v1646
    %v2066 = vunpack.c.h.b16 %v1646
    %v2067 = vunpack.c.l.b16 %v1647
    %v2068 = vunpack.c.h.b16 %v1647
    %v2069 = vunpack.c.l.b16 %v1648
    %v2070 = vunpack.c.h.b16 %v1648
    %v2071 = vunpack.c.l.b16 %v1649
    %v2072 = vunpack.c.h.b16 %v1649
    %v2073 = vunpack.c.l.b16 %v1650
    %v2074 = vunpack.c.h.b16 %v1650
    %v2075 = vunpack.c.l.b16 %v1651
    %v2076 = vunpack.c.h.b16 %v1651
    %v2077 = vunpack.c.l.b16 %v1652
    %v2078 = vunpack.c.h.b16 %v1652
    %v2079 = vunpack.c.l.b16 %v1653
    %v2080 = vunpack.c.h.b16 %v1653
    %v2081 = vunpack.c.l.b16 %v1654
    %v2082 = vunpack.c.h.b16 %v1654
    %v2083 = vunpack.c.l.b16 %v1655
    %v2084 = vunpack.c.h.b16 %v1655
    %v2085 = vunpack.c.l.b16 %v1656
    %v2086 = vunpack.c.h.b16 %v1656
    %v2087 = vunpack.c.l.b16 %v1657
    %v2088 = vunpack.c.h.b16 %v1657
    %v2089 = vunpack.c.l.b16 %v1658
    %v2090 = vunpack.c.h.b16 %v1658
    %v2091 = vunpack.c.l.b16 %v1659
    %v2092 = vunpack.c.h.b16 %v1659
    %v2093 = vunpack.c.l.b16 %v1660
    %v2094 = vunpack.c.h.b16 %v1660
    %v2095 = vunpack.c.l.b16 %v1661
    %v2096 = vunpack.c.h.b16 %v1661
    %v2097 = vunpack.c.l.b16 %v1662
    %v2098 = vunpack.c.h.b16 %v1662
    %v2099 = vunpack.c.l.b16 %v1663
    %v2100 = vunpack.c.h.b16 %v1663
    %v2101 = vunpack.c.l.b16 %v1664
    %v2102 = vunpack.c.h.b16 %v1664
    %v2103 = vunpack.c.l.b16 %v1665
    %v2104 = vunpack.c.h.b16 %v1665
    %v2105 = vunpack.c.l.b16 %v1666
    %v2106 = vunpack.c.h.b16 %v1666
    %v2107 = vunpack.c.l.b16 %v1667
    %v2108 = vunpack.c.h.b16 %v1667
    %v2109 = vunpack.c.l.b16 %v1668
    %v2110 = vunpack.c.h.b16 %v1668
    %v2111 = vunpack.c.l.b16 %v1669
    %v2112 = vunpack.c.h.b16 %v1669
    %v2113 = vunpack.c.l.b16 %v1670
    %v2114 = vunpack.c.h.b16 %v1670
    %v2115 = vunpack.c.l.b16 %v1671
    %v2116 = vunpack.c.h.b16 %v1671
    %v2117 = vunpack.c.l.b16 %v1672
    %v2118 = vunpack.c.h.b16 %v1672
    %v2119 = vunpack.c.l.b16 %v1673
    %v2120 = vunpack.c.h.b16 %v1673
    %v2121 = vunpack.c.l.b16 %v1674
    %v2122 = vunpack.c.h.b16 %v1674
    %v2123 = vunpack.c.l.b16 %v1675
    %v2124 = vunpack.c.h.b16 %v1675
    %v2125 = vunpack.c.l.b16 %v1676
    %v2126 = vunpack.c.h.b16 %v1676
    %v2127 = vpack.c.b16 %v2067, %v2063
    %v2128 = vpack.c.b16 %v2068, %v2064
    %v2129 = vpack.c.b16 %v2069, %v2065
    %v2130 = vpack.c.b16 %v2070, %v2066
    %v2131 = vpack.c.b16 %v2075, %v2071
    %v2132 = vpack.c.b16 %v2076, %v2072
    %v2133 = vpack.c.b16 %v2077, %v2073
    %v2134 = vpack.c.b16 %v2078, %v2074
    %v2135 = vpack.c.b16 %v2083, %v2079
    %v2136 = vpack.c.b16 %v2084, %v2080
    %v2137 = vpack.c.b16 %v2085, %v2081
    %v2138 = vpack.c.b16 %v2086, %v2082
    %v2139 = vpack.c.b16 %v2091, %v2087
    %v2140 = vpack.c.b16 %v2092, %v2088
    %v2141 = vpack.c.b16 %v2093, %v2089
    %v2142 = vpack.c.b16 %v2094, %v2090
    %v2143 = vpack.c.b16 %v2099, %v2095
    %v2144 = vpack.c.b16 %v2100, %v2096
    %v2145 = vpack.c.b16 %v2101, %v2097
    %v2146 = vpack.c.b16 %v2102, %v2098
    %v2147 = vpack.c.b16 %v2107, %v2103
    %v2148 = vpack.c.b16 %v2108, %v2104
    %v2149 = vpack.c.b16 %v2109, %v2105
    %v2150 = vpack.c.b16 %v2110, %v2106
    %v2151 = vpack.c.b16 %v2115, %v2111
    %v2152 = vpack.c.b16 %v2116, %v2112
    %v2153 = vpack.c.b16 %v2117, %v2113
    %v2154 = vpack.c.b16 %v2118, %v2114
    %v2155 = vpack.c.b16 %v2123, %v2119
    %v2156 = vpack.c.b16 %v2124, %v2120
    %v2157 = vpack.c.b16 %v2125, %v2121
    %v2158 = vpack.c.b16 %v2126, %v2122
    %2191 = vmatpush.bf16.msra.mxu0 %v2155
    %2192 = vmatpush.bf16.msra.mxu0 %v2151
    %2193 = vmatpush.bf16.msra.mxu0 %v2147
    %2194 = vmatpush.bf16.msra.mxu0 %v2143
    %2195 = vmatpush.bf16.msra.mxu0 %v2139
    %2196 = vmatpush.bf16.msra.mxu0 %v2135
    %2197 = vmatpush.bf16.msra.mxu0 %v2131
    %2198 = vmatpush.bf16.msra.mxu0 %v2127
    %2199 = vmatmul.bf16.gmra.mxu0 0
    %v2200 = vpop.f32.mrf.mxu0
    %v2201 = vadd.f32 0.0, %v2200
    %v2202 = vpop.f32.mrf.mxu0
    %2203 = vdwg.mxu0
    %2204 = vmatpush.bf16.msra.mxu0 %v2156
    %2205 = vmatpush.bf16.msra.mxu0 %v2152
    %2206 = vmatpush.bf16.msra.mxu0 %v2148
    %2207 = vmatpush.bf16.msra.mxu0 %v2144
    %2208 = vmatpush.bf16.msra.mxu0 %v2140
    %2209 = vmatpush.bf16.msra.mxu0 %v2136
    %2210 = vmatpush.bf16.msra.mxu0 %v2132
    %2211 = vmatpush.bf16.msra.mxu0 %v2128
    %2212 = vmatmul.bf16.gmra.mxu0 0
    %v2213 = vpop.f32.mrf.mxu0
    %v2214 = vadd.f32 0.0, %v2213
    %v2215 = vpop.f32.mrf.mxu0
    %2216 = vdwg.mxu0
    %2217 = vmatpush.bf16.msra.mxu0 %v2157
    %2218 = vmatpush.bf16.msra.mxu0 %v2153
    %2219 = vmatpush.bf16.msra.mxu0 %v2149
    %2220 = vmatpush.bf16.msra.mxu0 %v2145
    %2221 = vmatpush.bf16.msra.mxu0 %v2141
    %2222 = vmatpush.bf16.msra.mxu0 %v2137
    %2223 = vmatpush.bf16.msra.mxu0 %v2133
    %2224 = vmatpush.bf16.msra.mxu0 %v2129
    %2225 = vmatmul.bf16.gmra.mxu0 0
    %v2226 = vpop.f32.mrf.mxu0
    %v2227 = vadd.f32 0.0, %v2226
    %v2228 = vpop.f32.mrf.mxu0
    %2229 = vdwg.mxu0
    %2230 = vmatpush.bf16.msra.mxu0 %v2158
    %2231 = vmatpush.bf16.msra.mxu0 %v2154
    %2232 = vmatpush.bf16.msra.mxu0 %v2150
    %2233 = vmatpush.bf16.msra.mxu0 %v2146
    %2234 = vmatpush.bf16.msra.mxu0 %v2142
    %2235 = vmatpush.bf16.msra.mxu0 %v2138
    %2236 = vmatpush.bf16.msra.mxu0 %v2134
    %2237 = vmatpush.bf16.msra.mxu0 %v2130
    %2238 = vmatmul.bf16.gmra.mxu0 0
    %v2239 = vpop.f32.mrf.mxu0
    %v2240 = vadd.f32 0.0, %v2239
    %v2241 = vpop.f32.mrf.mxu0
    %2242 = vdwg.mxu0
    %v2243 = vadd.f32 %v2027, %v2201
    %v2244 = vadd.f32 %v2028, %v2214
    %v2245 = vadd.f32 %v2029, %v2227
    %v2246 = vadd.f32 %v2030, %v2240
    %v2247 = vxor.u32 %v2243, 2147483648
    %v2248 = vmul.f32 %v2247, 1.442695
    %v2249 = vpow.pop %v2248
    %v2250 = vadd.f32 %v2249, 1.0
    %v2251 = vrcp.pop %v2250
    %v2252 = vmul.f32 %v2250, %v2251
    %v2253 = vsub.f32 1.0, %v2252
    %v2254 = vmul.f32 %v2251, %v2253
    %v2255 = vadd.f32 %v2251, %v2254
    %vm2256 = vweird.f32 %v2250
    %vm2257 = vweird.f32 %v2251
    %vm2258 = vmor %vm2256, %vm2257
    %v2259 = vsel %vm2258, %v2251, %v2255
    %v2260 = vand.u32 2147483647, %v2250
    %vm2261 = vcmp.eq.f32.partialorder %v2260, 8.507059e+37
    %v2262 = vand.u32 %v2250, 2147483648
    %v2263 = vor.u32 1.1754944e-38, %v2262
    %v2264 = vsel %vm2261, %v2263, %v2259
    %v2265 = vmul.f32 1.0, %v2264
    %v2266 = vxor.u32 %v2244, 2147483648
    %v2267 = vmul.f32 %v2266, 1.442695
    %v2268 = vpow.pop %v2267
    %v2269 = vadd.f32 %v2268, 1.0
    %v2270 = vrcp.pop %v2269
    %v2271 = vmul.f32 %v2269, %v2270
    %v2272 = vsub.f32 1.0, %v2271
    %v2273 = vmul.f32 %v2270, %v2272
    %v2274 = vadd.f32 %v2270, %v2273
    %vm2275 = vweird.f32 %v2269
    %vm2276 = vweird.f32 %v2270
    %vm2277 = vmor %vm2275, %vm2276
    %v2278 = vsel %vm2277, %v2270, %v2274
    %v2279 = vand.u32 2147483647, %v2269
    %vm2280 = vcmp.eq.f32.partialorder %v2279, 8.507059e+37
    %v2281 = vand.u32 %v2269, 2147483648
    %v2282 = vor.u32 1.1754944e-38, %v2281
    %v2283 = vsel %vm2280, %v2282, %v2278
    %v2284 = vmul.f32 1.0, %v2283
    %v2285 = vtanh.pop %v2245
    %v2286 = vxor.u32 %v2246, 2147483648
    %v2287 = vmul.f32 %v2286, 1.442695
    %v2288 = vpow.pop %v2287
    %v2289 = vadd.f32 %v2288, 1.0
    %v2290 = vrcp.pop %v2289
    %v2291 = vmul.f32 %v2289, %v2290
    %v2292 = vsub.f32 1.0, %v2291
    %v2293 = vmul.f32 %v2290, %v2292
    %v2294 = vadd.f32 %v2290, %v2293
    %vm2295 = vweird.f32 %v2289
    %vm2296 = vweird.f32 %v2290
    %vm2297 = vmor %vm2295, %vm2296
    %v2298 = vsel %vm2297, %v2290, %v2294
    %v2299 = vand.u32 2147483647, %v2289
    %vm2300 = vcmp.eq.f32.partialorder %v2299, 8.507059e+37
    %v2301 = vand.u32 %v2289, 2147483648
    %v2302 = vor.u32 1.1754944e-38, %v2301
    %v2303 = vsel %vm2300, %v2302, %v2298
    %v2304 = vmul.f32 1.0, %v2303
    %v2305 = vmul.f32 %v2284, 0.0
    %v2306 = vmul.f32 %v2265, %v2285
    %v2307 = vadd.f32 %v2305, %v2306
    %v2308 = vtanh.pop %v2307
    %v2309 = vmul.f32 %v2304, %v2308
    %v2310 = vpack.c.bf16 %v2309, %v2309
    %2311 = vst [vmem:[#allocation2] sm:$0xf] %v2310
    %v2312 = vld [vmem:[%s724] sm:$0xff]
    %v2313 = vld [vmem:[%s724 + $0x8] sm:$0xff]
    %v2314 = vld [vmem:[%s724 + $0x10] sm:$0xff]
    %v2315 = vld [vmem:[%s724 + $0x18] sm:$0xff]
    %2316 = vmatpush.bf16.msra.mxu0 %v2155
    %2317 = vmatpush.bf16.msra.mxu0 %v2151
    %2318 = vmatpush.bf16.msra.mxu0 %v2147
    %2319 = vmatpush.bf16.msra.mxu0 %v2143
    %2320 = vmatpush.bf16.msra.mxu0 %v2139
    %2321 = vmatpush.bf16.msra.mxu0 %v2135
    %2322 = vmatpush.bf16.msra.mxu0 %v2131
    %2323 = vmatpush.bf16.msra.mxu0 %v2127
    %2324 = vmatmul.bf16.gmra.mxu0 %v2310
    %v2325 = vpop.f32.mrf.mxu0
    %v2326 = vadd.f32 0.0, %v2325
    %v2327 = vpop.f32.mrf.mxu0
    %2328 = vdwg.mxu0
    %2329 = vmatpush.bf16.msra.mxu0 %v2156
    %2330 = vmatpush.bf16.msra.mxu0 %v2152
    %2331 = vmatpush.bf16.msra.mxu0 %v2148
    %2332 = vmatpush.bf16.msra.mxu0 %v2144
    %2333 = vmatpush.bf16.msra.mxu0 %v2140
    %2334 = vmatpush.bf16.msra.mxu0 %v2136
    %2335 = vmatpush.bf16.msra.mxu0 %v2132
    %2336 = vmatpush.bf16.msra.mxu0 %v2128
    %2337 = vmatmul.bf16.gmra.mxu0 %v2310
    %v2338 = vpop.f32.mrf.mxu0
    %v2339 = vadd.f32 0.0, %v2338
    %v2340 = vpop.f32.mrf.mxu0
    %2341 = vdwg.mxu0
    %2342 = vmatpush.bf16.msra.mxu0 %v2157
    %2343 = vmatpush.bf16.msra.mxu0 %v2153
    %2344 = vmatpush.bf16.msra.mxu0 %v2149
    %2345 = vmatpush.bf16.msra.mxu0 %v2145
    %2346 = vmatpush.bf16.msra.mxu0 %v2141
    %2347 = vmatpush.bf16.msra.mxu0 %v2137
    %2348 = vmatpush.bf16.msra.mxu0 %v2133
    %2349 = vmatpush.bf16.msra.mxu0 %v2129
    %2350 = vmatmul.bf16.gmra.mxu0 %v2310
    %v2351 = vpop.f32.mrf.mxu0
    %v2352 = vadd.f32 0.0, %v2351
    %v2353 = vpop.f32.mrf.mxu0
    %2354 = vdwg.mxu0
    %2355 = vmatpush.bf16.msra.mxu0 %v2158
    %2356 = vmatpush.bf16.msra.mxu0 %v2154
    %2357 = vmatpush.bf16.msra.mxu0 %v2150
    %2358 = vmatpush.bf16.msra.mxu0 %v2146
    %2359 = vmatpush.bf16.msra.mxu0 %v2142
    %2360 = vmatpush.bf16.msra.mxu0 %v2138
    %2361 = vmatpush.bf16.msra.mxu0 %v2134
    %2362 = vmatpush.bf16.msra.mxu0 %v2130
    %2363 = vmatmul.bf16.gmra.mxu0 %v2310
    %v2364 = vpop.f32.mrf.mxu0
    %v2365 = vadd.f32 0.0, %v2364
    %v2366 = vpop.f32.mrf.mxu0
    %2367 = vdwg.mxu0
    %v2368 = vadd.f32 %v2312, %v2326
    %v2369 = vadd.f32 %v2313, %v2339
    %v2370 = vadd.f32 %v2314, %v2352
    %v2371 = vadd.f32 %v2315, %v2365
    %v2372 = vxor.u32 %v2368, 2147483648
    %v2373 = vmul.f32 %v2372, 1.442695
    %v2374 = vpow.pop %v2373
    %v2375 = vadd.f32 %v2374, 1.0
    %v2376 = vrcp.pop %v2375
    %v2377 = vmul.f32 %v2375, %v2376
    %v2378 = vsub.f32 1.0, %v2377
    %v2379 = vmul.f32 %v2376, %v2378
    %v2380 = vadd.f32 %v2376, %v2379
    %vm2381 = vweird.f32 %v2375
    %vm2382 = vweird.f32 %v2376
    %vm2383 = vmor %vm2381, %vm2382
    %v2384 = vsel %vm2383, %v2376, %v2380
    %v2385 = vand.u32 2147483647, %v2375
    %vm2386 = vcmp.eq.f32.partialorder %v2385, 8.507059e+37
    %v2387 = vand.u32 %v2375, 2147483648
    %v2388 = vor.u32 1.1754944e-38, %v2387
    %v2389 = vsel %vm2386, %v2388, %v2384
    %v2390 = vmul.f32 1.0, %v2389
    %v2391 = vxor.u32 %v2369, 2147483648
    %v2392 = vmul.f32 %v2391, 1.442695
    %v2393 = vpow.pop %v2392
    %v2394 = vadd.f32 %v2393, 1.0
    %v2395 = vrcp.pop %v2394
    %v2396 = vmul.f32 %v2394, %v2395
    %v2397 = vsub.f32 1.0, %v2396
    %v2398 = vmul.f32 %v2395, %v2397
    %v2399 = vadd.f32 %v2395, %v2398
    %vm2400 = vweird.f32 %v2394
    %vm2401 = vweird.f32 %v2395
    %vm2402 = vmor %vm2400, %vm2401
    %v2403 = vsel %vm2402, %v2395, %v2399
    %v2404 = vand.u32 2147483647, %v2394
    %vm2405 = vcmp.eq.f32.partialorder %v2404, 8.507059e+37
    %v2406 = vand.u32 %v2394, 2147483648
    %v2407 = vor.u32 1.1754944e-38, %v2406
    %v2408 = vsel %vm2405, %v2407, %v2403
    %v2409 = vmul.f32 1.0, %v2408
    %v2410 = vtanh.pop %v2370
    %v2411 = vxor.u32 %v2371, 2147483648
    %v2412 = vmul.f32 %v2411, 1.442695
    %v2413 = vpow.pop %v2412
    %v2414 = vadd.f32 %v2413, 1.0
    %v2415 = vrcp.pop %v2414
    %v2416 = vmul.f32 %v2414, %v2415
    %v2417 = vsub.f32 1.0, %v2416
    %v2418 = vmul.f32 %v2415, %v2417
    %v2419 = vadd.f32 %v2415, %v2418
    %vm2420 = vweird.f32 %v2414
    %vm2421 = vweird.f32 %v2415
    %vm2422 = vmor %vm2420, %vm2421
    %v2423 = vsel %vm2422, %v2415, %v2419
    %v2424 = vand.u32 2147483647, %v2414
    %vm2425 = vcmp.eq.f32.partialorder %v2424, 8.507059e+37
    %v2426 = vand.u32 %v2414, 2147483648
    %v2427 = vor.u32 1.1754944e-38, %v2426
    %v2428 = vsel %vm2425, %v2427, %v2423
    %v2429 = vmul.f32 1.0, %v2428
    %v2430 = vmul.f32 %v2409, %v2307
    %v2431 = vmul.f32 %v2390, %v2410
    %v2432 = vadd.f32 %v2430, %v2431
    %v2433 = vtanh.pop %v2432
    %v2434 = vmul.f32 %v2429, %v2433
    %v2435 = vpack.c.bf16 %v2434, %v2434
    %2436 = vst [vmem:[%s849] sm:$0xf] %v2435
    %v2437 = vld [vmem:[%s851] sm:$0xff]
    %v2438 = vld [vmem:[%s851 + $0x8] sm:$0xff]
    %v2439 = vld [vmem:[%s851 + $0x10] sm:$0xff]
    %v2440 = vld [vmem:[%s851 + $0x18] sm:$0xff]
    %2441 = vmatpush.bf16.msra.mxu0 %v2155
    %2442 = vmatpush.bf16.msra.mxu0 %v2151
    %2443 = vmatpush.bf16.msra.mxu0 %v2147
    %2444 = vmatpush.bf16.msra.mxu0 %v2143
    %2445 = vmatpush.bf16.msra.mxu0 %v2139
    %2446 = vmatpush.bf16.msra.mxu0 %v2135
    %2447 = vmatpush.bf16.msra.mxu0 %v2131
    %2448 = vmatpush.bf16.msra.mxu0 %v2127
    %2449 = vmatmul.bf16.gmra.mxu0 %v2435
    %v2450 = vpop.f32.mrf.mxu0
    %v2451 = vadd.f32 0.0, %v2450
    %v2452 = vpop.f32.mrf.mxu0
    %2453 = vdwg.mxu0
    %2454 = vmatpush.bf16.msra.mxu0 %v2156
    %2455 = vmatpush.bf16.msra.mxu0 %v2152
    %2456 = vmatpush.bf16.msra.mxu0 %v2148
    %2457 = vmatpush.bf16.msra.mxu0 %v2144
    %2458 = vmatpush.bf16.msra.mxu0 %v2140
    %2459 = vmatpush.bf16.msra.mxu0 %v2136
    %2460 = vmatpush.bf16.msra.mxu0 %v2132
    %2461 = vmatpush.bf16.msra.mxu0 %v2128
    %2462 = vmatmul.bf16.gmra.mxu0 %v2435
    %v2463 = vpop.f32.mrf.mxu0
    %v2464 = vadd.f32 0.0, %v2463
    %v2465 = vpop.f32.mrf.mxu0
    %2466 = vdwg.mxu0
    %2467 = vmatpush.bf16.msra.mxu0 %v2157
    %2468 = vmatpush.bf16.msra.mxu0 %v2153
    %2469 = vmatpush.bf16.msra.mxu0 %v2149
    %2470 = vmatpush.bf16.msra.mxu0 %v2145
    %2471 = vmatpush.bf16.msra.mxu0 %v2141
    %2472 = vmatpush.bf16.msra.mxu0 %v2137
    %2473 = vmatpush.bf16.msra.mxu0 %v2133
    %2474 = vmatpush.bf16.msra.mxu0 %v2129
    %2475 = vmatmul.bf16.gmra.mxu0 %v2435
    %v2476 = vpop.f32.mrf.mxu0
    %v2477 = vadd.f32 0.0, %v2476
    %v2478 = vpop.f32.mrf.mxu0
    %2479 = vdwg.mxu0
    %2480 = vmatpush.bf16.msra.mxu0 %v2158
    %2481 = vmatpush.bf16.msra.mxu0 %v2154
    %2482 = vmatpush.bf16.msra.mxu0 %v2150
    %2483 = vmatpush.bf16.msra.mxu0 %v2146
    %2484 = vmatpush.bf16.msra.mxu0 %v2142
    %2485 = vmatpush.bf16.msra.mxu0 %v2138
    %2486 = vmatpush.bf16.msra.mxu0 %v2134
    %2487 = vmatpush.bf16.msra.mxu0 %v2130
    %2488 = vmatmul.bf16.gmra.mxu0 %v2435
    %v2489 = vpop.f32.mrf.mxu0
    %v2490 = vadd.f32 0.0, %v2489
    %v2491 = vpop.f32.mrf.mxu0
    %2492 = vdwg.mxu0
    %v2493 = vadd.f32 %v2437, %v2451
    %v2494 = vadd.f32 %v2438, %v2464
    %v2495 = vadd.f32 %v2439, %v2477
    %v2496 = vadd.f32 %v2440, %v2490
    %v2497 = vxor.u32 %v2493, 2147483648
    %v2498 = vmul.f32 %v2497, 1.442695
    %v2499 = vpow.pop %v2498
    %v2500 = vadd.f32 %v2499, 1.0
    %v2501 = vrcp.pop %v2500
    %v2502 = vmul.f32 %v2500, %v2501
    %v2503 = vsub.f32 1.0, %v2502
    %v2504 = vmul.f32 %v2501, %v2503
    %v2505 = vadd.f32 %v2501, %v2504
    %vm2506 = vweird.f32 %v2500
    %vm2507 = vweird.f32 %v2501
    %vm2508 = vmor %vm2506, %vm2507
    %v2509 = vsel %vm2508, %v2501, %v2505
    %v2510 = vand.u32 2147483647, %v2500
    %vm2511 = vcmp.eq.f32.partialorder %v2510, 8.507059e+37
    %v2512 = vand.u32 %v2500, 2147483648
    %v2513 = vor.u32 1.1754944e-38, %v2512
    %v2514 = vsel %vm2511, %v2513, %v2509
    %v2515 = vmul.f32 1.0, %v2514
    %v2516 = vxor.u32 %v2494, 2147483648
    %v2517 = vmul.f32 %v2516, 1.442695
    %v2518 = vpow.pop %v2517
    %v2519 = vadd.f32 %v2518, 1.0
    %v2520 = vrcp.pop %v2519
    %v2521 = vmul.f32 %v2519, %v2520
    %v2522 = vsub.f32 1.0, %v2521
    %v2523 = vmul.f32 %v2520, %v2522
    %v2524 = vadd.f32 %v2520, %v2523
    %vm2525 = vweird.f32 %v2519
    %vm2526 = vweird.f32 %v2520
    %vm2527 = vmor %vm2525, %vm2526
    %v2528 = vsel %vm2527, %v2520, %v2524
    %v2529 = vand.u32 2147483647, %v2519
    %vm2530 = vcmp.eq.f32.partialorder %v2529, 8.507059e+37
    %v2531 = vand.u32 %v2519, 2147483648
    %v2532 = vor.u32 1.1754944e-38, %v2531
    %v2533 = vsel %vm2530, %v2532, %v2528
    %v2534 = vmul.f32 1.0, %v2533
    %v2535 = vtanh.pop %v2495
    %v2536 = vxor.u32 %v2496, 2147483648
    %v2537 = vmul.f32 %v2536, 1.442695
    %v2538 = vpow.pop %v2537
    %v2539 = vadd.f32 %v2538, 1.0
    %v2540 = vrcp.pop %v2539
    %v2541 = vmul.f32 %v2539, %v2540
    %v2542 = vsub.f32 1.0, %v2541
    %v2543 = vmul.f32 %v2540, %v2542
    %v2544 = vadd.f32 %v2540, %v2543
    %vm2545 = vweird.f32 %v2539
    %vm2546 = vweird.f32 %v2540
    %vm2547 = vmor %vm2545, %vm2546
    %v2548 = vsel %vm2547, %v2540, %v2544
    %v2549 = vand.u32 2147483647, %v2539
    %vm2550 = vcmp.eq.f32.partialorder %v2549, 8.507059e+37
    %v2551 = vand.u32 %v2539, 2147483648
    %v2552 = vor.u32 1.1754944e-38, %v2551
    %v2553 = vsel %vm2550, %v2552, %v2548
    %v2554 = vmul.f32 1.0, %v2553
    %v2555 = vmul.f32 %v2534, %v2432
    %v2556 = vmul.f32 %v2515, %v2535
    %v2557 = vadd.f32 %v2555, %v2556
    %v2558 = vtanh.pop %v2557
    %v2559 = vmul.f32 %v2554, %v2558
    %v2560 = vpack.c.bf16 %v2559, %v2559
    %2561 = vst [vmem:[%s976] sm:$0xf] %v2560
    %v2562 = vld [vmem:[%s978] sm:$0xff]
    %v2563 = vld [vmem:[%s978 + $0x8] sm:$0xff]
    %v2564 = vld [vmem:[%s978 + $0x10] sm:$0xff]
    %v2565 = vld [vmem:[%s978 + $0x18] sm:$0xff]
    %2566 = vmatpush.bf16.msra.mxu0 %v2155
    %2567 = vmatpush.bf16.msra.mxu0 %v2151
    %2568 = vmatpush.bf16.msra.mxu0 %v2147
    %2569 = vmatpush.bf16.msra.mxu0 %v2143
    %2570 = vmatpush.bf16.msra.mxu0 %v2139
    %2571 = vmatpush.bf16.msra.mxu0 %v2135
    %2572 = vmatpush.bf16.msra.mxu0 %v2131
    %2573 = vmatpush.bf16.msra.mxu0 %v2127
    %2574 = vmatmul.bf16.gmra.mxu0 %v2560
    %v2575 = vpop.f32.mrf.mxu0
    %v2576 = vadd.f32 0.0, %v2575
    %v2577 = vpop.f32.mrf.mxu0
    %2578 = vdwg.mxu0
    %2579 = vmatpush.bf16.msra.mxu0 %v2156
    %2580 = vmatpush.bf16.msra.mxu0 %v2152
    %2581 = vmatpush.bf16.msra.mxu0 %v2148
    %2582 = vmatpush.bf16.msra.mxu0 %v2144
    %2583 = vmatpush.bf16.msra.mxu0 %v2140
    %2584 = vmatpush.bf16.msra.mxu0 %v2136
    %2585 = vmatpush.bf16.msra.mxu0 %v2132
    %2586 = vmatpush.bf16.msra.mxu0 %v2128
    %2587 = vmatmul.bf16.gmra.mxu0 %v2560
    %v2588 = vpop.f32.mrf.mxu0
    %v2589 = vadd.f32 0.0, %v2588
    %v2590 = vpop.f32.mrf.mxu0
    %2591 = vdwg.mxu0
    %2592 = vmatpush.bf16.msra.mxu0 %v2157
    %2593 = vmatpush.bf16.msra.mxu0 %v2153
    %2594 = vmatpush.bf16.msra.mxu0 %v2149
    %2595 = vmatpush.bf16.msra.mxu0 %v2145
    %2596 = vmatpush.bf16.msra.mxu0 %v2141
    %2597 = vmatpush.bf16.msra.mxu0 %v2137
    %2598 = vmatpush.bf16.msra.mxu0 %v2133
    %2599 = vmatpush.bf16.msra.mxu0 %v2129
    %2600 = vmatmul.bf16.gmra.mxu0 %v2560
    %v2601 = vpop.f32.mrf.mxu0
    %v2602 = vadd.f32 0.0, %v2601
    %v2603 = vpop.f32.mrf.mxu0
    %2604 = vdwg.mxu0
    %2605 = vmatpush.bf16.msra.mxu0 %v2158
    %2606 = vmatpush.bf16.msra.mxu0 %v2154
    %2607 = vmatpush.bf16.msra.mxu0 %v2150
    %2608 = vmatpush.bf16.msra.mxu0 %v2146
    %2609 = vmatpush.bf16.msra.mxu0 %v2142
    %2610 = vmatpush.bf16.msra.mxu0 %v2138
    %2611 = vmatpush.bf16.msra.mxu0 %v2134
    %2612 = vmatpush.bf16.msra.mxu0 %v2130
    %2613 = vmatmul.bf16.gmra.mxu0 %v2560
    %v2614 = vpop.f32.mrf.mxu0
    %v2615 = vadd.f32 0.0, %v2614
    %v2616 = vpop.f32.mrf.mxu0
    %2617 = vdwg.mxu0
    %v2618 = vadd.f32 %v2562, %v2576
    %v2619 = vadd.f32 %v2563, %v2589
    %v2620 = vadd.f32 %v2564, %v2602
    %v2621 = vadd.f32 %v2565, %v2615
    %v2622 = vxor.u32 %v2618, 2147483648
    %v2623 = vmul.f32 %v2622, 1.442695
    %v2624 = vpow.pop %v2623
    %v2625 = vadd.f32 %v2624, 1.0
    %v2626 = vrcp.pop %v2625
    %v2627 = vmul.f32 %v2625, %v2626
    %v2628 = vsub.f32 1.0, %v2627
    %v2629 = vmul.f32 %v2626, %v2628
    %v2630 = vadd.f32 %v2626, %v2629
    %vm2631 = vweird.f32 %v2625
    %vm2632 = vweird.f32 %v2626
    %vm2633 = vmor %vm2631, %vm2632
    %v2634 = vsel %vm2633, %v2626, %v2630
    %v2635 = vand.u32 2147483647, %v2625
    %vm2636 = vcmp.eq.f32.partialorder %v2635, 8.507059e+37
    %v2637 = vand.u32 %v2625, 2147483648
    %v2638 = vor.u32 1.1754944e-38, %v2637
    %v2639 = vsel %vm2636, %v2638, %v2634
    %v2640 = vmul.f32 1.0, %v2639
    %v2641 = vxor.u32 %v2619, 2147483648
    %v2642 = vmul.f32 %v2641, 1.442695
    %v2643 = vpow.pop %v2642
    %v2644 = vadd.f32 %v2643, 1.0
    %v2645 = vrcp.pop %v2644
    %v2646 = vmul.f32 %v2644, %v2645
    %v2647 = vsub.f32 1.0, %v2646
    %v2648 = vmul.f32 %v2645, %v2647
    %v2649 = vadd.f32 %v2645, %v2648
    %vm2650 = vweird.f32 %v2644
    %vm2651 = vweird.f32 %v2645
    %vm2652 = vmor %vm2650, %vm2651
    %v2653 = vsel %vm2652, %v2645, %v2649
    %v2654 = vand.u32 2147483647, %v2644
    %vm2655 = vcmp.eq.f32.partialorder %v2654, 8.507059e+37
    %v2656 = vand.u32 %v2644, 2147483648
    %v2657 = vor.u32 1.1754944e-38, %v2656
    %v2658 = vsel %vm2655, %v2657, %v2653
    %v2659 = vmul.f32 1.0, %v2658
    %v2660 = vtanh.pop %v2620
    %v2661 = vxor.u32 %v2621, 2147483648
    %v2662 = vmul.f32 %v2661, 1.442695
    %v2663 = vpow.pop %v2662
    %v2664 = vadd.f32 %v2663, 1.0
    %v2665 = vrcp.pop %v2664
    %v2666 = vmul.f32 %v2664, %v2665
    %v2667 = vsub.f32 1.0, %v2666
    %v2668 = vmul.f32 %v2665, %v2667
    %v2669 = vadd.f32 %v2665, %v2668
    %vm2670 = vweird.f32 %v2664
    %vm2671 = vweird.f32 %v2665
    %vm2672 = vmor %vm2670, %vm2671
    %v2673 = vsel %vm2672, %v2665, %v2669
    %v2674 = vand.u32 2147483647, %v2664
    %vm2675 = vcmp.eq.f32.partialorder %v2674, 8.507059e+37
    %v2676 = vand.u32 %v2664, 2147483648
    %v2677 = vor.u32 1.1754944e-38, %v2676
    %v2678 = vsel %vm2675, %v2677, %v2673
    %v2679 = vmul.f32 1.0, %v2678
    %v2680 = vmul.f32 %v2659, %v2557
    %v2681 = vmul.f32 %v2640, %v2660
    %v2682 = vadd.f32 %v2680, %v2681
    %v2683 = vtanh.pop %v2682
    %v2684 = vmul.f32 %v2679, %v2683
    %v2685 = vpack.c.bf16 %v2684, %v2684
    %2686 = vst [vmem:[%s1103] sm:$0xf] %v2685
    %v2687 = vld [vmem:[%s1105] sm:$0xff]
    %v2688 = vld [vmem:[%s1105 + $0x8] sm:$0xff]
    %v2689 = vld [vmem:[%s1105 + $0x10] sm:$0xff]
    %v2690 = vld [vmem:[%s1105 + $0x18] sm:$0xff]
    %2691 = vmatpush.bf16.msra.mxu0 %v2155
    %2692 = vmatpush.bf16.msra.mxu0 %v2151
    %2693 = vmatpush.bf16.msra.mxu0 %v2147
    %2694 = vmatpush.bf16.msra.mxu0 %v2143
    %2695 = vmatpush.bf16.msra.mxu0 %v2139
    %2696 = vmatpush.bf16.msra.mxu0 %v2135
    %2697 = vmatpush.bf16.msra.mxu0 %v2131
    %2698 = vmatpush.bf16.msra.mxu0 %v2127
    %2699 = vmatmul.bf16.gmra.mxu0 %v2685
    %v2700 = vpop.f32.mrf.mxu0
    %v2701 = vadd.f32 0.0, %v2700
    %v2702 = vpop.f32.mrf.mxu0
    %2703 = vdwg.mxu0
    %2704 = vmatpush.bf16.msra.mxu0 %v2156
    %2705 = vmatpush.bf16.msra.mxu0 %v2152
    %2706 = vmatpush.bf16.msra.mxu0 %v2148
    %2707 = vmatpush.bf16.msra.mxu0 %v2144
    %2708 = vmatpush.bf16.msra.mxu0 %v2140
    %2709 = vmatpush.bf16.msra.mxu0 %v2136
    %2710 = vmatpush.bf16.msra.mxu0 %v2132
    %2711 = vmatpush.bf16.msra.mxu0 %v2128
    %2712 = vmatmul.bf16.gmra.mxu0 %v2685
    %v2713 = vpop.f32.mrf.mxu0
    %v2714 = vadd.f32 0.0, %v2713
    %v2715 = vpop.f32.mrf.mxu0
    %2716 = vdwg.mxu0
    %2717 = vmatpush.bf16.msra.mxu0 %v2157
    %2718 = vmatpush.bf16.msra.mxu0 %v2153
    %2719 = vmatpush.bf16.msra.mxu0 %v2149
    %2720 = vmatpush.bf16.msra.mxu0 %v2145
    %2721 = vmatpush.bf16.msra.mxu0 %v2141
    %2722 = vmatpush.bf16.msra.mxu0 %v2137
    %2723 = vmatpush.bf16.msra.mxu0 %v2133
    %2724 = vmatpush.bf16.msra.mxu0 %v2129
    %2725 = vmatmul.bf16.gmra.mxu0 %v2685
    %v2726 = vpop.f32.mrf.mxu0
    %v2727 = vadd.f32 0.0, %v2726
    %v2728 = vpop.f32.mrf.mxu0
    %2729 = vdwg.mxu0
    %2730 = vmatpush.bf16.msra.mxu0 %v2158
    %2731 = vmatpush.bf16.msra.mxu0 %v2154
    %2732 = vmatpush.bf16.msra.mxu0 %v2150
    %2733 = vmatpush.bf16.msra.mxu0 %v2146
    %2734 = vmatpush.bf16.msra.mxu0 %v2142
    %2735 = vmatpush.bf16.msra.mxu0 %v2138
    %2736 = vmatpush.bf16.msra.mxu0 %v2134
    %2737 = vmatpush.bf16.msra.mxu0 %v2130
    %2738 = vmatmul.bf16.gmra.mxu0 %v2685
    %v2739 = vpop.f32.mrf.mxu0
    %v2740 = vadd.f32 0.0, %v2739
    %v2741 = vpop.f32.mrf.mxu0
    %2742 = vdwg.mxu0
    %v2743 = vadd.f32 %v2687, %v2701
    %v2744 = vadd.f32 %v2688, %v2714
    %v2745 = vadd.f32 %v2689, %v2727
    %v2746 = vadd.f32 %v2690, %v2740
    %v2747 = vxor.u32 %v2743, 2147483648
    %v2748 = vmul.f32 %v2747, 1.442695
    %v2749 = vpow.pop %v2748
    %v2750 = vadd.f32 %v2749, 1.0
    %v2751 = vrcp.pop %v2750
    %v2752 = vmul.f32 %v2750, %v2751
    %v2753 = vsub.f32 1.0, %v2752
    %v2754 = vmul.f32 %v2751, %v2753
    %v2755 = vadd.f32 %v2751, %v2754
    %vm2756 = vweird.f32 %v2750
    %vm2757 = vweird.f32 %v2751
    %vm2758 = vmor %vm2756, %vm2757
    %v2759 = vsel %vm2758, %v2751, %v2755
    %v2760 = vand.u32 2147483647, %v2750
    %vm2761 = vcmp.eq.f32.partialorder %v2760, 8.507059e+37
    %v2762 = vand.u32 %v2750, 2147483648
    %v2763 = vor.u32 1.1754944e-38, %v2762
    %v2764 = vsel %vm2761, %v2763, %v2759
    %v2765 = vmul.f32 1.0, %v2764
    %v2766 = vxor.u32 %v2744, 2147483648
    %v2767 = vmul.f32 %v2766, 1.442695
    %v2768 = vpow.pop %v2767
    %v2769 = vadd.f32 %v2768, 1.0
    %v2770 = vrcp.pop %v2769
    %v2771 = vmul.f32 %v2769, %v2770
    %v2772 = vsub.f32 1.0, %v2771
    %v2773 = vmul.f32 %v2770, %v2772
    %v2774 = vadd.f32 %v2770, %v2773
    %vm2775 = vweird.f32 %v2769
    %vm2776 = vweird.f32 %v2770
    %vm2777 = vmor %vm2775, %vm2776
    %v2778 = vsel %vm2777, %v2770, %v2774
    %v2779 = vand.u32 2147483647, %v2769
    %vm2780 = vcmp.eq.f32.partialorder %v2779, 8.507059e+37
    %v2781 = vand.u32 %v2769, 2147483648
    %v2782 = vor.u32 1.1754944e-38, %v2781
    %v2783 = vsel %vm2780, %v2782, %v2778
    %v2784 = vmul.f32 1.0, %v2783
    %v2785 = vtanh.pop %v2745
    %v2786 = vxor.u32 %v2746, 2147483648
    %v2787 = vmul.f32 %v2786, 1.442695
    %v2788 = vpow.pop %v2787
    %v2789 = vadd.f32 %v2788, 1.0
    %v2790 = vrcp.pop %v2789
    %v2791 = vmul.f32 %v2789, %v2790
    %v2792 = vsub.f32 1.0, %v2791
    %v2793 = vmul.f32 %v2790, %v2792
    %v2794 = vadd.f32 %v2790, %v2793
    %vm2795 = vweird.f32 %v2789
    %vm2796 = vweird.f32 %v2790
    %vm2797 = vmor %vm2795, %vm2796
    %v2798 = vsel %vm2797, %v2790, %v2794
    %v2799 = vand.u32 2147483647, %v2789
    %vm2800 = vcmp.eq.f32.partialorder %v2799, 8.507059e+37
    %v2801 = vand.u32 %v2789, 2147483648
    %v2802 = vor.u32 1.1754944e-38, %v2801
    %v2803 = vsel %vm2800, %v2802, %v2798
    %v2804 = vmul.f32 1.0, %v2803
    %v2805 = vmul.f32 %v2784, %v2682
    %v2806 = vmul.f32 %v2765, %v2785
    %v2807 = vadd.f32 %v2805, %v2806
    %v2808 = vtanh.pop %v2807
    %v2809 = vmul.f32 %v2804, %v2808
    %v2810 = vpack.c.bf16 %v2809, %v2809
    %2811 = vst [vmem:[%s1230] sm:$0xf] %v2810
    %v2812 = vld [vmem:[%s1232] sm:$0xff]
    %v2813 = vld [vmem:[%s1232 + $0x8] sm:$0xff]
    %v2814 = vld [vmem:[%s1232 + $0x10] sm:$0xff]
    %v2815 = vld [vmem:[%s1232 + $0x18] sm:$0xff]
    %2816 = vmatpush.bf16.msra.mxu0 %v2155
    %2817 = vmatpush.bf16.msra.mxu0 %v2151
    %2818 = vmatpush.bf16.msra.mxu0 %v2147
    %2819 = vmatpush.bf16.msra.mxu0 %v2143
    %2820 = vmatpush.bf16.msra.mxu0 %v2139
    %2821 = vmatpush.bf16.msra.mxu0 %v2135
    %2822 = vmatpush.bf16.msra.mxu0 %v2131
    %2823 = vmatpush.bf16.msra.mxu0 %v2127
    %2824 = vmatmul.bf16.gmra.mxu0 %v2810
    %v2825 = vpop.f32.mrf.mxu0
    %v2826 = vadd.f32 0.0, %v2825
    %v2827 = vpop.f32.mrf.mxu0
    %2828 = vdwg.mxu0
    %2829 = vmatpush.bf16.msra.mxu0 %v2156
    %2830 = vmatpush.bf16.msra.mxu0 %v2152
    %2831 = vmatpush.bf16.msra.mxu0 %v2148
    %2832 = vmatpush.bf16.msra.mxu0 %v2144
    %2833 = vmatpush.bf16.msra.mxu0 %v2140
    %2834 = vmatpush.bf16.msra.mxu0 %v2136
    %2835 = vmatpush.bf16.msra.mxu0 %v2132
    %2836 = vmatpush.bf16.msra.mxu0 %v2128
    %2837 = vmatmul.bf16.gmra.mxu0 %v2810
    %v2838 = vpop.f32.mrf.mxu0
    %v2839 = vadd.f32 0.0, %v2838
    %v2840 = vpop.f32.mrf.mxu0
    %2841 = vdwg.mxu0
    %2842 = vmatpush.bf16.msra.mxu0 %v2157
    %2843 = vmatpush.bf16.msra.mxu0 %v2153
    %2844 = vmatpush.bf16.msra.mxu0 %v2149
    %2845 = vmatpush.bf16.msra.mxu0 %v2145
    %2846 = vmatpush.bf16.msra.mxu0 %v2141
    %2847 = vmatpush.bf16.msra.mxu0 %v2137
    %2848 = vmatpush.bf16.msra.mxu0 %v2133
    %2849 = vmatpush.bf16.msra.mxu0 %v2129
    %2850 = vmatmul.bf16.gmra.mxu0 %v2810
    %v2851 = vpop.f32.mrf.mxu0
    %v2852 = vadd.f32 0.0, %v2851
    %v2853 = vpop.f32.mrf.mxu0
    %2854 = vdwg.mxu0
    %2855 = vmatpush.bf16.msra.mxu0 %v2158
    %2856 = vmatpush.bf16.msra.mxu0 %v2154
    %2857 = vmatpush.bf16.msra.mxu0 %v2150
    %2858 = vmatpush.bf16.msra.mxu0 %v2146
    %2859 = vmatpush.bf16.msra.mxu0 %v2142
    %2860 = vmatpush.bf16.msra.mxu0 %v2138
    %2861 = vmatpush.bf16.msra.mxu0 %v2134
    %2862 = vmatpush.bf16.msra.mxu0 %v2130
    %2863 = vmatmul.bf16.gmra.mxu0 %v2810
    %v2864 = vpop.f32.mrf.mxu0
    %v2865 = vadd.f32 0.0, %v2864
    %v2866 = vpop.f32.mrf.mxu0
    %2867 = vdwg.mxu0
    %v2868 = vadd.f32 %v2812, %v2826
    %v2869 = vadd.f32 %v2813, %v2839
    %v2870 = vadd.f32 %v2814, %v2852
    %v2871 = vadd.f32 %v2815, %v2865
    %v2872 = vxor.u32 %v2868, 2147483648
    %v2873 = vmul.f32 %v2872, 1.442695
    %v2874 = vpow.pop %v2873
    %v2875 = vadd.f32 %v2874, 1.0
    %v2876 = vrcp.pop %v2875
    %v2877 = vmul.f32 %v2875, %v2876
    %v2878 = vsub.f32 1.0, %v2877
    %v2879 = vmul.f32 %v2876, %v2878
    %v2880 = vadd.f32 %v2876, %v2879
    %vm2881 = vweird.f32 %v2875
    %vm2882 = vweird.f32 %v2876
    %vm2883 = vmor %vm2881, %vm2882
    %v2884 = vsel %vm2883, %v2876, %v2880
    %v2885 = vand.u32 2147483647, %v2875
    %vm2886 = vcmp.eq.f32.partialorder %v2885, 8.507059e+37
    %v2887 = vand.u32 %v2875, 2147483648
    %v2888 = vor.u32 1.1754944e-38, %v2887
    %v2889 = vsel %vm2886, %v2888, %v2884
    %v2890 = vmul.f32 1.0, %v2889
    %v2891 = vxor.u32 %v2869, 2147483648
    %v2892 = vmul.f32 %v2891, 1.442695
    %v2893 = vpow.pop %v2892
    %v2894 = vadd.f32 %v2893, 1.0
    %v2895 = vrcp.pop %v2894
    %v2896 = vmul.f32 %v2894, %v2895
    %v2897 = vsub.f32 1.0, %v2896
    %v2898 = vmul.f32 %v2895, %v2897
    %v2899 = vadd.f32 %v2895, %v2898
    %vm2900 = vweird.f32 %v2894
    %vm2901 = vweird.f32 %v2895
    %vm2902 = vmor %vm2900, %vm2901
    %v2903 = vsel %vm2902, %v2895, %v2899
    %v2904 = vand.u32 2147483647, %v2894
    %vm2905 = vcmp.eq.f32.partialorder %v2904, 8.507059e+37
    %v2906 = vand.u32 %v2894, 2147483648
    %v2907 = vor.u32 1.1754944e-38, %v2906
    %v2908 = vsel %vm2905, %v2907, %v2903
    %v2909 = vmul.f32 1.0, %v2908
    %v2910 = vtanh.pop %v2870
    %v2911 = vxor.u32 %v2871, 2147483648
    %v2912 = vmul.f32 %v2911, 1.442695
    %v2913 = vpow.pop %v2912
    %v2914 = vadd.f32 %v2913, 1.0
    %v2915 = vrcp.pop %v2914
    %v2916 = vmul.f32 %v2914, %v2915
    %v2917 = vsub.f32 1.0, %v2916
    %v2918 = vmul.f32 %v2915, %v2917
    %v2919 = vadd.f32 %v2915, %v2918
    %vm2920 = vweird.f32 %v2914
    %vm2921 = vweird.f32 %v2915
    %vm2922 = vmor %vm2920, %vm2921
    %v2923 = vsel %vm2922, %v2915, %v2919
    %v2924 = vand.u32 2147483647, %v2914
    %vm2925 = vcmp.eq.f32.partialorder %v2924, 8.507059e+37
    %v2926 = vand.u32 %v2914, 2147483648
    %v2927 = vor.u32 1.1754944e-38, %v2926
    %v2928 = vsel %vm2925, %v2927, %v2923
    %v2929 = vmul.f32 1.0, %v2928
    %v2930 = vmul.f32 %v2909, %v2807
    %v2931 = vmul.f32 %v2890, %v2910
    %v2932 = vadd.f32 %v2930, %v2931
    %v2933 = vtanh.pop %v2932
    %v2934 = vmul.f32 %v2929, %v2933
    %v2935 = vpack.c.bf16 %v2934, %v2934
    %2936 = vst [vmem:[%s1357] sm:$0xf] %v2935
    %v2937 = vld [vmem:[%s1359] sm:$0xff]
    %v2938 = vld [vmem:[%s1359 + $0x8] sm:$0xff]
    %v2939 = vld [vmem:[%s1359 + $0x10] sm:$0xff]
    %v2940 = vld [vmem:[%s1359 + $0x18] sm:$0xff]
    %2941 = vmatpush.bf16.msra.mxu0 %v2155
    %2942 = vmatpush.bf16.msra.mxu0 %v2151
    %2943 = vmatpush.bf16.msra.mxu0 %v2147
    %2944 = vmatpush.bf16.msra.mxu0 %v2143
    %2945 = vmatpush.bf16.msra.mxu0 %v2139
    %2946 = vmatpush.bf16.msra.mxu0 %v2135
    %2947 = vmatpush.bf16.msra.mxu0 %v2131
    %2948 = vmatpush.bf16.msra.mxu0 %v2127
    %2949 = vmatmul.bf16.gmra.mxu0 %v2935
    %v2950 = vpop.f32.mrf.mxu0
    %v2951 = vadd.f32 0.0, %v2950
    %v2952 = vpop.f32.mrf.mxu0
    %2953 = vdwg.mxu0
    %2954 = vmatpush.bf16.msra.mxu0 %v2156
    %2955 = vmatpush.bf16.msra.mxu0 %v2152
    %2956 = vmatpush.bf16.msra.mxu0 %v2148
    %2957 = vmatpush.bf16.msra.mxu0 %v2144
    %2958 = vmatpush.bf16.msra.mxu0 %v2140
    %2959 = vmatpush.bf16.msra.mxu0 %v2136
    %2960 = vmatpush.bf16.msra.mxu0 %v2132
    %2961 = vmatpush.bf16.msra.mxu0 %v2128
    %2962 = vmatmul.bf16.gmra.mxu0 %v2935
    %v2963 = vpop.f32.mrf.mxu0
    %v2964 = vadd.f32 0.0, %v2963
    %v2965 = vpop.f32.mrf.mxu0
    %2966 = vdwg.mxu0
    %2967 = vmatpush.bf16.msra.mxu0 %v2157
    %2968 = vmatpush.bf16.msra.mxu0 %v2153
    %2969 = vmatpush.bf16.msra.mxu0 %v2149
    %2970 = vmatpush.bf16.msra.mxu0 %v2145
    %2971 = vmatpush.bf16.msra.mxu0 %v2141
    %2972 = vmatpush.bf16.msra.mxu0 %v2137
    %2973 = vmatpush.bf16.msra.mxu0 %v2133
    %2974 = vmatpush.bf16.msra.mxu0 %v2129
    %2975 = vmatmul.bf16.gmra.mxu0 %v2935
    %v2976 = vpop.f32.mrf.mxu0
    %v2977 = vadd.f32 0.0, %v2976
    %v2978 = vpop.f32.mrf.mxu0
    %2979 = vdwg.mxu0
    %2980 = vmatpush.bf16.msra.mxu0 %v2158
    %2981 = vmatpush.bf16.msra.mxu0 %v2154
    %2982 = vmatpush.bf16.msra.mxu0 %v2150
    %2983 = vmatpush.bf16.msra.mxu0 %v2146
    %2984 = vmatpush.bf16.msra.mxu0 %v2142
    %2985 = vmatpush.bf16.msra.mxu0 %v2138
    %2986 = vmatpush.bf16.msra.mxu0 %v2134
    %2987 = vmatpush.bf16.msra.mxu0 %v2130
    %2988 = vmatmul.bf16.gmra.mxu0 %v2935
    %v2989 = vpop.f32.mrf.mxu0
    %v2990 = vadd.f32 0.0, %v2989
    %v2991 = vpop.f32.mrf.mxu0
    %2992 = vdwg.mxu0
    %v2993 = vadd.f32 %v2937, %v2951
    %v2994 = vadd.f32 %v2938, %v2964
    %v2995 = vadd.f32 %v2939, %v2977
    %v2996 = vadd.f32 %v2940, %v2990
    %v2997 = vxor.u32 %v2993, 2147483648
    %v2998 = vmul.f32 %v2997, 1.442695
    %v2999 = vpow.pop %v2998
    %v3000 = vadd.f32 %v2999, 1.0
    %v3001 = vrcp.pop %v3000
    %v3002 = vmul.f32 %v3000, %v3001
    %v3003 = vsub.f32 1.0, %v3002
    %v3004 = vmul.f32 %v3001, %v3003
    %v3005 = vadd.f32 %v3001, %v3004
    %vm3006 = vweird.f32 %v3000
    %vm3007 = vweird.f32 %v3001
    %vm3008 = vmor %vm3006, %vm3007
    %v3009 = vsel %vm3008, %v3001, %v3005
    %v3010 = vand.u32 2147483647, %v3000
    %vm3011 = vcmp.eq.f32.partialorder %v3010, 8.507059e+37
    %v3012 = vand.u32 %v3000, 2147483648
    %v3013 = vor.u32 1.1754944e-38, %v3012
    %v3014 = vsel %vm3011, %v3013, %v3009
    %v3015 = vmul.f32 1.0, %v3014
    %v3016 = vxor.u32 %v2994, 2147483648
    %v3017 = vmul.f32 %v3016, 1.442695
    %v3018 = vpow.pop %v3017
    %v3019 = vadd.f32 %v3018, 1.0
    %v3020 = vrcp.pop %v3019
    %v3021 = vmul.f32 %v3019, %v3020
    %v3022 = vsub.f32 1.0, %v3021
    %v3023 = vmul.f32 %v3020, %v3022
    %v3024 = vadd.f32 %v3020, %v3023
    %vm3025 = vweird.f32 %v3019
    %vm3026 = vweird.f32 %v3020
    %vm3027 = vmor %vm3025, %vm3026
    %v3028 = vsel %vm3027, %v3020, %v3024
    %v3029 = vand.u32 2147483647, %v3019
    %vm3030 = vcmp.eq.f32.partialorder %v3029, 8.507059e+37
    %v3031 = vand.u32 %v3019, 2147483648
    %v3032 = vor.u32 1.1754944e-38, %v3031
    %v3033 = vsel %vm3030, %v3032, %v3028
    %v3034 = vmul.f32 1.0, %v3033
    %v3035 = vtanh.pop %v2995
    %v3036 = vxor.u32 %v2996, 2147483648
    %v3037 = vmul.f32 %v3036, 1.442695
    %v3038 = vpow.pop %v3037
    %v3039 = vadd.f32 %v3038, 1.0
    %v3040 = vrcp.pop %v3039
    %v3041 = vmul.f32 %v3039, %v3040
    %v3042 = vsub.f32 1.0, %v3041
    %v3043 = vmul.f32 %v3040, %v3042
    %v3044 = vadd.f32 %v3040, %v3043
    %vm3045 = vweird.f32 %v3039
    %vm3046 = vweird.f32 %v3040
    %vm3047 = vmor %vm3045, %vm3046
    %v3048 = vsel %vm3047, %v3040, %v3044
    %v3049 = vand.u32 2147483647, %v3039
    %vm3050 = vcmp.eq.f32.partialorder %v3049, 8.507059e+37
    %v3051 = vand.u32 %v3039, 2147483648
    %v3052 = vor.u32 1.1754944e-38, %v3051
    %v3053 = vsel %vm3050, %v3052, %v3048
    %v3054 = vmul.f32 1.0, %v3053
    %v3055 = vmul.f32 %v3034, %v2932
    %v3056 = vmul.f32 %v3015, %v3035
    %v3057 = vadd.f32 %v3055, %v3056
    %v3058 = vtanh.pop %v3057
    %v3059 = vmul.f32 %v3054, %v3058
    %v3060 = vpack.c.bf16 %v3059, %v3059
    %3061 = vst [vmem:[%s1484] sm:$0xf] %v3060
    %v3062 = vld [vmem:[%s1486] sm:$0xff]
    %v3063 = vld [vmem:[%s1486 + $0x8] sm:$0xff]
    %v3064 = vld [vmem:[%s1486 + $0x10] sm:$0xff]
    %v3065 = vld [vmem:[%s1486 + $0x18] sm:$0xff]
    %3066 = vmatpush.bf16.msra.mxu0 %v2155
    %3067 = vmatpush.bf16.msra.mxu0 %v2151
    %3068 = vmatpush.bf16.msra.mxu0 %v2147
    %3069 = vmatpush.bf16.msra.mxu0 %v2143
    %3070 = vmatpush.bf16.msra.mxu0 %v2139
    %3071 = vmatpush.bf16.msra.mxu0 %v2135
    %3072 = vmatpush.bf16.msra.mxu0 %v2131
    %3073 = vmatpush.bf16.msra.mxu0 %v2127
    %3074 = vmatmul.bf16.gmra.mxu0 %v3060
    %v3075 = vpop.f32.mrf.mxu0
    %v3076 = vadd.f32 0.0, %v3075
    %v3077 = vpop.f32.mrf.mxu0
    %3078 = vdwg.mxu0
    %3079 = vmatpush.bf16.msra.mxu0 %v2156
    %3080 = vmatpush.bf16.msra.mxu0 %v2152
    %3081 = vmatpush.bf16.msra.mxu0 %v2148
    %3082 = vmatpush.bf16.msra.mxu0 %v2144
    %3083 = vmatpush.bf16.msra.mxu0 %v2140
    %3084 = vmatpush.bf16.msra.mxu0 %v2136
    %3085 = vmatpush.bf16.msra.mxu0 %v2132
    %3086 = vmatpush.bf16.msra.mxu0 %v2128
    %3087 = vmatmul.bf16.gmra.mxu0 %v3060
    %v3088 = vpop.f32.mrf.mxu0
    %v3089 = vadd.f32 0.0, %v3088
    %v3090 = vpop.f32.mrf.mxu0
    %3091 = vdwg.mxu0
    %3092 = vmatpush.bf16.msra.mxu0 %v2157
    %3093 = vmatpush.bf16.msra.mxu0 %v2153
    %3094 = vmatpush.bf16.msra.mxu0 %v2149
    %3095 = vmatpush.bf16.msra.mxu0 %v2145
    %3096 = vmatpush.bf16.msra.mxu0 %v2141
    %3097 = vmatpush.bf16.msra.mxu0 %v2137
    %3098 = vmatpush.bf16.msra.mxu0 %v2133
    %3099 = vmatpush.bf16.msra.mxu0 %v2129
    %3100 = vmatmul.bf16.gmra.mxu0 %v3060
    %v3101 = vpop.f32.mrf.mxu0
    %v3102 = vadd.f32 0.0, %v3101
    %v3103 = vpop.f32.mrf.mxu0
    %3104 = vdwg.mxu0
    %3105 = vmatpush.bf16.msra.mxu0 %v2158
    %3106 = vmatpush.bf16.msra.mxu0 %v2154
    %3107 = vmatpush.bf16.msra.mxu0 %v2150
    %3108 = vmatpush.bf16.msra.mxu0 %v2146
    %3109 = vmatpush.bf16.msra.mxu0 %v2142
    %3110 = vmatpush.bf16.msra.mxu0 %v2138
    %3111 = vmatpush.bf16.msra.mxu0 %v2134
    %3112 = vmatpush.bf16.msra.mxu0 %v2130
    %3113 = vmatmul.bf16.gmra.mxu0 %v3060
    %v3114 = vpop.f32.mrf.mxu0
    %v3115 = vadd.f32 0.0, %v3114
    %v3116 = vpop.f32.mrf.mxu0
    %3117 = vdwg.mxu0
    %v3118 = vadd.f32 %v3062, %v3076
    %v3119 = vadd.f32 %v3063, %v3089
    %v3120 = vadd.f32 %v3064, %v3102
    %v3121 = vadd.f32 %v3065, %v3115
    %v3122 = vxor.u32 %v3118, 2147483648
    %v3123 = vmul.f32 %v3122, 1.442695
    %v3124 = vpow.pop %v3123
    %v3125 = vadd.f32 %v3124, 1.0
    %v3126 = vrcp.pop %v3125
    %v3127 = vmul.f32 %v3125, %v3126
    %v3128 = vsub.f32 1.0, %v3127
    %v3129 = vmul.f32 %v3126, %v3128
    %v3130 = vadd.f32 %v3126, %v3129
    %vm3131 = vweird.f32 %v3125
    %vm3132 = vweird.f32 %v3126
    %vm3133 = vmor %vm3131, %vm3132
    %v3134 = vsel %vm3133, %v3126, %v3130
    %v3135 = vand.u32 2147483647, %v3125
    %vm3136 = vcmp.eq.f32.partialorder %v3135, 8.507059e+37
    %v3137 = vand.u32 %v3125, 2147483648
    %v3138 = vor.u32 1.1754944e-38, %v3137
    %v3139 = vsel %vm3136, %v3138, %v3134
    %v3140 = vmul.f32 1.0, %v3139
    %v3141 = vxor.u32 %v3119, 2147483648
    %v3142 = vmul.f32 %v3141, 1.442695
    %v3143 = vpow.pop %v3142
    %v3144 = vadd.f32 %v3143, 1.0
    %v3145 = vrcp.pop %v3144
    %v3146 = vmul.f32 %v3144, %v3145
    %v3147 = vsub.f32 1.0, %v3146
    %v3148 = vmul.f32 %v3145, %v3147
    %v3149 = vadd.f32 %v3145, %v3148
    %vm3150 = vweird.f32 %v3144
    %vm3151 = vweird.f32 %v3145
    %vm3152 = vmor %vm3150, %vm3151
    %v3153 = vsel %vm3152, %v3145, %v3149
    %v3154 = vand.u32 2147483647, %v3144
    %vm3155 = vcmp.eq.f32.partialorder %v3154, 8.507059e+37
    %v3156 = vand.u32 %v3144, 2147483648
    %v3157 = vor.u32 1.1754944e-38, %v3156
    %v3158 = vsel %vm3155, %v3157, %v3153
    %v3159 = vmul.f32 1.0, %v3158
    %v3160 = vtanh.pop %v3120
    %v3161 = vxor.u32 %v3121, 2147483648
    %v3162 = vmul.f32 %v3161, 1.442695
    %v3163 = vpow.pop %v3162
    %v3164 = vadd.f32 %v3163, 1.0
    %v3165 = vrcp.pop %v3164
    %v3166 = vmul.f32 %v3164, %v3165
    %v3167 = vsub.f32 1.0, %v3166
    %v3168 = vmul.f32 %v3165, %v3167
    %v3169 = vadd.f32 %v3165, %v3168
    %vm3170 = vweird.f32 %v3164
    %vm3171 = vweird.f32 %v3165
    %vm3172 = vmor %vm3170, %vm3171
    %v3173 = vsel %vm3172, %v3165, %v3169
    %v3174 = vand.u32 2147483647, %v3164
    %vm3175 = vcmp.eq.f32.partialorder %v3174, 8.507059e+37
    %v3176 = vand.u32 %v3164, 2147483648
    %v3177 = vor.u32 1.1754944e-38, %v3176
    %v3178 = vsel %vm3175, %v3177, %v3173
    %v3179 = vmul.f32 1.0, %v3178
    %v3180 = vmul.f32 %v3159, %v3057
    %v3181 = vmul.f32 %v3140, %v3160
    %v3182 = vadd.f32 %v3180, %v3181
    %v3183 = vtanh.pop %v3182
    %v3184 = vmul.f32 %v3179, %v3183
    %v3185 = vpack.c.bf16 %v3184, %v3184
    %3186 = vst [vmem:[%s1611] sm:$0xf] %v3185
    %v3187 = vld [vmem:[#allocation2] sm:$0xf]
    %v3188 = vld [vmem:[#allocation2 + $0x4] sm:$0xf]
    %v3189 = vld [vmem:[#allocation2 + $0x8] sm:$0xf]
    %v3190 = vld [vmem:[#allocation2 + $0xc] sm:$0xf]
    %v3191 = vld [vmem:[#allocation2 + $0x10] sm:$0xf]
    %v3192 = vld [vmem:[#allocation2 + $0x14] sm:$0xf]
    %v3193 = vld [vmem:[#allocation2 + $0x18] sm:$0xf]
    %v3194 = vld [vmem:[#allocation2 + $0x1c] sm:$0xf]
    %v3195 = vld [vmem:[#allocation15] sm:$0xf]
    %v3196 = vld [vmem:[#allocation15 + $0x4] sm:$0xf]
    %v3197 = vld [vmem:[#allocation15 + $0x8] sm:$0xf]
    %v3198 = vld [vmem:[#allocation15 + $0xc] sm:$0xf]
    %v3199 = vld [vmem:[#allocation15 + $0x10] sm:$0xf]
    %v3200 = vld [vmem:[#allocation15 + $0x14] sm:$0xf]
    %v3201 = vld [vmem:[#allocation15 + $0x18] sm:$0xf]
    %v3202 = vld [vmem:[#allocation15 + $0x1c] sm:$0xf]
    %v3203 = vld [vmem:[#allocation15 + $0x20] sm:$0xf]
    %v3204 = vld [vmem:[#allocation15 + $0x24] sm:$0xf]
    %v3205 = vld [vmem:[#allocation15 + $0x28] sm:$0xf]
    %v3206 = vld [vmem:[#allocation15 + $0x2c] sm:$0xf]
    %v3207 = vld [vmem:[#allocation15 + $0x30] sm:$0xf]
    %v3208 = vld [vmem:[#allocation15 + $0x34] sm:$0xf]
    %v3209 = vld [vmem:[#allocation15 + $0x38] sm:$0xf]
    %v3210 = vld [vmem:[#allocation15 + $0x3c] sm:$0xf]
    %v3211 = vld [vmem:[%s8] sm:$0x1]
    %v3213 = vperm.slane %v3211, 0
    %v3223 = vunpack.c.l.b16 %v3187
    %v3224 = vunpack.c.l.b16 %v3188
    %v3225 = vunpack.c.l.b16 %v3189
    %v3226 = vunpack.c.l.b16 %v3190
    %v3227 = vunpack.c.l.b16 %v3191
    %v3228 = vunpack.c.l.b16 %v3192
    %v3229 = vunpack.c.l.b16 %v3193
    %v3230 = vunpack.c.l.b16 %v3194
    %v3231 = vpack.c.b16 %v3224, %v3223
    %v3232 = vpack.c.b16 %v3226, %v3225
    %v3233 = vpack.c.b16 %v3228, %v3227
    %v3234 = vpack.c.b16 %v3230, %v3229
    %v3255 = vunpack.c.l.b16 %v3195
    %v3256 = vunpack.c.l.b16 %v3196
    %v3257 = vunpack.c.l.b16 %v3197
    %v3258 = vunpack.c.l.b16 %v3198
    %v3259 = vunpack.c.l.b16 %v3199
    %v3260 = vunpack.c.l.b16 %v3200
    %v3261 = vunpack.c.l.b16 %v3201
    %v3262 = vunpack.c.l.b16 %v3202
    %v3263 = vunpack.c.l.b16 %v3203
    %v3264 = vunpack.c.l.b16 %v3204
    %v3265 = vunpack.c.l.b16 %v3205
    %v3266 = vunpack.c.l.b16 %v3206
    %v3267 = vunpack.c.l.b16 %v3207
    %v3268 = vunpack.c.l.b16 %v3208
    %v3269 = vunpack.c.l.b16 %v3209
    %v3270 = vunpack.c.l.b16 %v3210
    %v3271 = vpack.c.b16 %v3256, %v3255
    %v3272 = vpack.c.b16 %v3258, %v3257
    %v3273 = vpack.c.b16 %v3260, %v3259
    %v3274 = vpack.c.b16 %v3262, %v3261
    %v3275 = vpack.c.b16 %v3264, %v3263
    %v3276 = vpack.c.b16 %v3266, %v3265
    %v3277 = vpack.c.b16 %v3268, %v3267
    %v3278 = vpack.c.b16 %v3270, %v3269
    %3287 = vmatpush.bf16.msra.mxu0 %v3278
    %3288 = vmatpush.bf16.msra.mxu0 %v3277
    %3289 = vmatpush.bf16.msra.mxu0 %v3276
    %3290 = vmatpush.bf16.msra.mxu0 %v3275
    %3291 = vmatpush.bf16.msra.mxu0 %v3274
    %3292 = vmatpush.bf16.msra.mxu0 %v3273
    %3293 = vmatpush.bf16.msra.mxu0 %v3272
    %3294 = vmatpush.bf16.msra.mxu0 %v3271
    %3295 = vmatmul.bf16.gmra.mxu0 %v3231
    %v3296 = vpop.f32.mrf.mxu0
    %v3297 = vadd.f32 %v3213, %v3296
    %v3298 = vpop.f32.mrf.mxu0
    %v3299 = vadd.f32 %v3213, %v3298
    %3300 = vmatmul.bf16.gmra.mxu0 %v3232
    %v3301 = vpop.f32.mrf.mxu0
    %v3302 = vadd.f32 %v3213, %v3301
    %v3303 = vpop.f32.mrf.mxu0
    %v3304 = vadd.f32 %v3213, %v3303
    %3305 = vmatmul.bf16.gmra.mxu0 %v3233
    %v3306 = vpop.f32.mrf.mxu0
    %v3307 = vadd.f32 %v3213, %v3306
    %v3308 = vpop.f32.mrf.mxu0
    %v3309 = vadd.f32 %v3213, %v3308
    %3310 = vmatmul.bf16.gmra.mxu0 %v3234
    %v3311 = vpop.f32.mrf.mxu0
    %v3312 = vadd.f32 %v3213, %v3311
    %v3313 = vpop.f32.mrf.mxu0
    %v3314 = vadd.f32 %v3213, %v3313
    %3315 = vdwg.mxu0
    %v3316 = vmax.f32 %v3297, 0.0
    %v3317 = vmax.f32 %v3299, 0.0
    %v3318 = vmax.f32 %v3302, 0.0
    %v3319 = vmax.f32 %v3304, 0.0
    %v3320 = vmax.f32 %v3307, 0.0
    %v3321 = vmax.f32 %v3309, 0.0
    %v3322 = vmax.f32 %v3312, 0.0
    %v3323 = vmax.f32 %v3314, 0.0
    %v3324 = vpack.c.bf16 %v3317, %v3316
    %v3325 = vpack.c.bf16 %v3319, %v3318
    %v3326 = vpack.c.bf16 %v3321, %v3320
    %v3327 = vpack.c.bf16 %v3323, %v3322
    %v3328 = vld [vmem:[#allocation16] sm:$0xf]
    %v3329 = vld [vmem:[#allocation16 + $0x4] sm:$0xf]
    %v3330 = vld [vmem:[#allocation16 + $0x8] sm:$0xf]
    %v3331 = vld [vmem:[#allocation16 + $0xc] sm:$0xf]
    %v3332 = vld [vmem:[#allocation16 + $0x10] sm:$0xf]
    %v3333 = vld [vmem:[#allocation16 + $0x14] sm:$0xf]
    %v3334 = vld [vmem:[#allocation16 + $0x18] sm:$0xf]
    %v3335 = vld [vmem:[#allocation16 + $0x1c] sm:$0xf]
    %v3336 = vld [vmem:[#allocation16 + $0x20] sm:$0xf]
    %v3337 = vld [vmem:[#allocation16 + $0x24] sm:$0xf]
    %v3338 = vld [vmem:[#allocation16 + $0x28] sm:$0xf]
    %v3339 = vld [vmem:[#allocation16 + $0x2c] sm:$0xf]
    %v3340 = vld [vmem:[#allocation16 + $0x30] sm:$0xf]
    %v3341 = vld [vmem:[#allocation16 + $0x34] sm:$0xf]
    %v3342 = vld [vmem:[#allocation16 + $0x38] sm:$0xf]
    %v3343 = vld [vmem:[#allocation16 + $0x3c] sm:$0xf]
    %v3344 = vld [vmem:[%s10] sm:$0x1]
    %v3346 = vperm.slane %v3344, 0
    %v3364 = vunpack.c.l.b16 %v3328
    %v3365 = vunpack.c.l.b16 %v3329
    %v3366 = vunpack.c.l.b16 %v3330
    %v3367 = vunpack.c.l.b16 %v3331
    %v3368 = vunpack.c.l.b16 %v3332
    %v3369 = vunpack.c.l.b16 %v3333
    %v3370 = vunpack.c.l.b16 %v3334
    %v3371 = vunpack.c.l.b16 %v3335
    %v3372 = vunpack.c.l.b16 %v3336
    %v3373 = vunpack.c.l.b16 %v3337
    %v3374 = vunpack.c.l.b16 %v3338
    %v3375 = vunpack.c.l.b16 %v3339
    %v3376 = vunpack.c.l.b16 %v3340
    %v3377 = vunpack.c.l.b16 %v3341
    %v3378 = vunpack.c.l.b16 %v3342
    %v3379 = vunpack.c.l.b16 %v3343
    %v3380 = vpack.c.b16 %v3365, %v3364
    %v3381 = vpack.c.b16 %v3367, %v3366
    %v3382 = vpack.c.b16 %v3369, %v3368
    %v3383 = vpack.c.b16 %v3371, %v3370
    %v3384 = vpack.c.b16 %v3373, %v3372
    %v3385 = vpack.c.b16 %v3375, %v3374
    %v3386 = vpack.c.b16 %v3377, %v3376
    %v3387 = vpack.c.b16 %v3379, %v3378
    %3396 = vmatpush.bf16.msra.mxu0 %v3387
    %3397 = vmatpush.bf16.msra.mxu0 %v3386
    %3398 = vmatpush.bf16.msra.mxu0 %v3385
    %3399 = vmatpush.bf16.msra.mxu0 %v3384
    %3400 = vmatpush.bf16.msra.mxu0 %v3383
    %3401 = vmatpush.bf16.msra.mxu0 %v3382
    %3402 = vmatpush.bf16.msra.mxu0 %v3381
    %3403 = vmatpush.bf16.msra.mxu0 %v3380
    %3404 = vmatmul.bf16.gmra.mxu0 %v3324
    %v3405 = vpop.f32.mrf.mxu0
    %v3406 = vadd.f32 %v3346, %v3405
    %v3407 = vpop.f32.mrf.mxu0
    %v3408 = vadd.f32 %v3346, %v3407
    %3409 = vmatmul.bf16.gmra.mxu0 %v3325
    %v3410 = vpop.f32.mrf.mxu0
    %v3411 = vadd.f32 %v3346, %v3410
    %v3412 = vpop.f32.mrf.mxu0
    %v3413 = vadd.f32 %v3346, %v3412
    %3414 = vmatmul.bf16.gmra.mxu0 %v3326
    %v3415 = vpop.f32.mrf.mxu0
    %v3416 = vadd.f32 %v3346, %v3415
    %v3417 = vpop.f32.mrf.mxu0
    %v3418 = vadd.f32 %v3346, %v3417
    %3419 = vmatmul.bf16.gmra.mxu0 %v3327
    %v3420 = vpop.f32.mrf.mxu0
    %v3421 = vadd.f32 %v3346, %v3420
    %v3422 = vpop.f32.mrf.mxu0
    %v3423 = vadd.f32 %v3346, %v3422
    %3424 = vdwg.mxu0
    %v3425 = vmax.f32 %v3406, 0.0
    %v3426 = vmax.f32 %v3408, 0.0
    %v3427 = vmax.f32 %v3411, 0.0
    %v3428 = vmax.f32 %v3413, 0.0
    %v3429 = vmax.f32 %v3416, 0.0
    %v3430 = vmax.f32 %v3418, 0.0
    %v3431 = vmax.f32 %v3421, 0.0
    %v3432 = vmax.f32 %v3423, 0.0
    %v3433 = vpack.c.bf16 %v3426, %v3425
    %v3434 = vpack.c.bf16 %v3428, %v3427
    %v3435 = vpack.c.bf16 %v3430, %v3429
    %v3436 = vpack.c.bf16 %v3432, %v3431
    %v3437 = vld [vmem:[#allocation18] sm:$0xf]
    %v3438 = vld [vmem:[#allocation18 + $0x4] sm:$0xf]
    %v3439 = vld [vmem:[#allocation18 + $0x8] sm:$0xf]
    %v3440 = vld [vmem:[#allocation18 + $0xc] sm:$0xf]
    %v3441 = vld [vmem:[#allocation18 + $0x10] sm:$0xf]
    %v3442 = vld [vmem:[#allocation18 + $0x14] sm:$0xf]
    %v3443 = vld [vmem:[#allocation18 + $0x18] sm:$0xf]
    %v3444 = vld [vmem:[#allocation18 + $0x1c] sm:$0xf]
    %v3445 = vld [vmem:[#allocation18 + $0x20] sm:$0xf]
    %v3446 = vld [vmem:[#allocation18 + $0x24] sm:$0xf]
    %v3447 = vld [vmem:[#allocation18 + $0x28] sm:$0xf]
    %v3448 = vld [vmem:[#allocation18 + $0x2c] sm:$0xf]
    %v3449 = vld [vmem:[#allocation18 + $0x30] sm:$0xf]
    %v3450 = vld [vmem:[#allocation18 + $0x34] sm:$0xf]
    %v3451 = vld [vmem:[#allocation18 + $0x38] sm:$0xf]
    %v3452 = vld [vmem:[#allocation18 + $0x3c] sm:$0xf]
    %v3453 = vld [vmem:[%s12] sm:$0x1]
    %v3455 = vperm.slane %v3453, 0
    %v3473 = vunpack.c.l.b16 %v3437
    %v3474 = vunpack.c.l.b16 %v3438
    %v3475 = vunpack.c.l.b16 %v3439
    %v3476 = vunpack.c.l.b16 %v3440
    %v3477 = vunpack.c.l.b16 %v3441
    %v3478 = vunpack.c.l.b16 %v3442
    %v3479 = vunpack.c.l.b16 %v3443
    %v3480 = vunpack.c.l.b16 %v3444
    %v3481 = vunpack.c.l.b16 %v3445
    %v3482 = vunpack.c.l.b16 %v3446
    %v3483 = vunpack.c.l.b16 %v3447
    %v3484 = vunpack.c.l.b16 %v3448
    %v3485 = vunpack.c.l.b16 %v3449
    %v3486 = vunpack.c.l.b16 %v3450
    %v3487 = vunpack.c.l.b16 %v3451
    %v3488 = vunpack.c.l.b16 %v3452
    %v3489 = vpack.c.b16 %v3474, %v3473
    %v3490 = vpack.c.b16 %v3476, %v3475
    %v3491 = vpack.c.b16 %v3478, %v3477
    %v3492 = vpack.c.b16 %v3480, %v3479
    %v3493 = vpack.c.b16 %v3482, %v3481
    %v3494 = vpack.c.b16 %v3484, %v3483
    %v3495 = vpack.c.b16 %v3486, %v3485
    %v3496 = vpack.c.b16 %v3488, %v3487
    %3505 = vmatpush.bf16.msra.mxu0 %v3496
    %3506 = vmatpush.bf16.msra.mxu0 %v3495
    %3507 = vmatpush.bf16.msra.mxu0 %v3494
    %3508 = vmatpush.bf16.msra.mxu0 %v3493
    %3509 = vmatpush.bf16.msra.mxu0 %v3492
    %3510 = vmatpush.bf16.msra.mxu0 %v3491
    %3511 = vmatpush.bf16.msra.mxu0 %v3490
    %3512 = vmatpush.bf16.msra.mxu0 %v3489
    %3513 = vmatmul.bf16.gmra.mxu0 %v3433
    %v3514 = vpop.f32.mrf.mxu0
    %v3515 = vadd.f32 %v3455, %v3514
    %v3516 = vpop.f32.mrf.mxu0
    %v3517 = vadd.f32 %v3455, %v3516
    %3518 = vmatmul.bf16.gmra.mxu0 %v3434
    %v3519 = vpop.f32.mrf.mxu0
    %v3520 = vadd.f32 %v3455, %v3519
    %v3521 = vpop.f32.mrf.mxu0
    %v3522 = vadd.f32 %v3455, %v3521
    %3523 = vmatmul.bf16.gmra.mxu0 %v3435
    %v3524 = vpop.f32.mrf.mxu0
    %v3525 = vadd.f32 %v3455, %v3524
    %v3526 = vpop.f32.mrf.mxu0
    %v3527 = vadd.f32 %v3455, %v3526
    %3528 = vmatmul.bf16.gmra.mxu0 %v3436
    %v3529 = vpop.f32.mrf.mxu0
    %v3530 = vadd.f32 %v3455, %v3529
    %v3531 = vpop.f32.mrf.mxu0
    %v3532 = vadd.f32 %v3455, %v3531
    %3533 = vdwg.mxu0
    %v3534 = vmax.f32 %v3515, 0.0
    %v3535 = vmax.f32 %v3517, 0.0
    %v3536 = vmax.f32 %v3520, 0.0
    %v3537 = vmax.f32 %v3522, 0.0
    %v3538 = vmax.f32 %v3525, 0.0
    %v3539 = vmax.f32 %v3527, 0.0
    %v3540 = vmax.f32 %v3530, 0.0
    %v3541 = vmax.f32 %v3532, 0.0
    %3542 = vst [vmem:[#allocation19] sm:$0xff] %v3534
    %3543 = vst [vmem:[#allocation19 + $0x8] sm:$0xff] %v3535
    %3544 = vst [vmem:[#allocation19 + $0x10] sm:$0xff] %v3536
    %3545 = vst [vmem:[#allocation19 + $0x18] sm:$0xff] %v3537
    %3546 = vst [vmem:[#allocation19 + $0x20] sm:$0xff] %v3538
    %3547 = vst [vmem:[#allocation19 + $0x28] sm:$0xff] %v3539
    %3548 = vst [vmem:[#allocation19 + $0x30] sm:$0xff] %v3540
    %3549 = vst [vmem:[#allocation19 + $0x38] sm:$0xff] %v3541
    // Predicated region
    $region90: #{tpu_custom_call.1} parent=1 // pred_check
      _
    $region91: #{tpu_custom_call.1} parent=1 // pred_check_branch
      %3551 = sbr.rel (0) target = $region93
    $region92: #{tpu_custom_call.1} parent=1 // pred_region
      %3553 = vsyncadd [#allocation6], 0
      %s3554 = sshll.u32 [#allocation19], 4
      %s3555 = int_to_ptr.vmem [resolvable:$true] %s3554
      %s3556 = sshll.u32 %s13, 4
      %s3557 = int_to_ptr.hbm [resolvable:$true] %s3556
      %3562 = dma.vmem_to_hbm [thread:$0]  %s3555, 1024, %s3557, [#allocation6], 128, 128, 8
    $region93: #{tpu_custom_call.1} parent=1 // pred_fallthru
      _
    // Predicated region
    $region94: #{tpu_custom_call.1} parent=1 // pred_check
      _
    $region95: #{tpu_custom_call.1} parent=1 // pred_check_branch
      %3564 = sbr.rel (0) target = $region97
    $region96: #{tpu_custom_call.1} parent=1 // pred_region
      %3566 = dma.done [#allocation6], 1024
    $region97: #{tpu_custom_call.1} parent=1 // pred_fallthru
      _
    %3567 = vsyncpa [#allocation5], 1
    %3568 = vsyncpa [#allocation8], 1
    %3569 = vsyncpa [#allocation11], 1
    %3570 = vsyncpa [#allocation14], 1
    %3571 = vsyncpa [#allocation17], 1
    %3572 = vsyncpa [#allocation6], 1

</llo_original>
